<compile_context>
chip_gen: v7x
topology: tpu7x:2x2x1
jax: 0.10.0
libtpu: 0.0.40
codegen_flags: <defaults>
</compile_context>

<pallas_src>
import numpy as np

import jax
import jax.numpy as jnp
from jax.experimental import pallas as pl
from jax.experimental.pallas import tpu as pltpu


# ----------------------------------------------------------------------------
# Host-side (trace-time) constant builders.
# ----------------------------------------------------------------------------
def _interp_matrix(n_in, n_out):
    """(n_out, n_in) bilinear interpolation matrix, align_corners=True."""
    if n_in == 1:
        return jnp.ones((n_out, 1), jnp.float32)
    pos = np.arange(n_out, dtype=np.float64) * (n_in - 1) / (n_out - 1)
    i0 = np.minimum(np.floor(pos).astype(np.int64), n_in - 1)
    i1 = np.minimum(i0 + 1, n_in - 1)
    frac = pos - i0
    m = np.zeros((n_out, n_in), np.float64)
    m[np.arange(n_out), i0] += 1.0 - frac
    m[np.arange(n_out), i1] += frac
    return jnp.asarray(m, dtype=jnp.float32)


def _band_matrices(w_hwio, width):
    """Per-dy width-banded weight matrices for a 3x3 'same' conv.

    Returns (3, width*Cin, width*Cout) bf16 with
        B[dy, w*Cin + ci, v*Cout + co] = w_hwio[dy, w - v + 1, ci, co]
    (zero outside the 3-tap band), so a packed activation row (width*Cin,)
    matmul'd with B[dy] yields that row's dy-contribution to the packed conv
    output row (width*Cout,), width zero-padding included.
    """
    kh, kw, cin, cout = w_hwio.shape
    v = np.arange(width)
    sel = np.zeros((kw, width, width), np.float32)
    for dx in range(kw):
        w_idx = v + dx - 1
        ok = (w_idx >= 0) & (w_idx < width)
        sel[dx, w_idx[ok], v[ok]] = 1.0
    b = jnp.einsum("xwv,yxio->ywivo",
                   jnp.asarray(sel), w_hwio.astype(jnp.float32))
    return b.reshape(kh, width * cin, width * cout).astype(jnp.bfloat16)


def _tile_row(vec, width):
    """(C,) per-channel vector -> (1, width*C) packed f32 row."""
    return jnp.tile(vec.astype(jnp.float32), width).reshape(1, -1)


# ----------------------------------------------------------------------------
# Fused Pallas kernel: upsample + up-conv + (concat) + DoubleConv.
# One grid step = one batch element; all intermediates stay in VMEM.
# ----------------------------------------------------------------------------
def _up_fused_kernel(x1_ref, x2_ref, wh_ref, wwk_ref,
                     bup_ref, sup_ref, tup_ref,
                     b1a_ref, b1b_ref, s1_ref, t1_ref,
                     b2_ref, s2_ref, t2_ref,
                     o_ref,
                     pad_u, pad_a, pad_b, pad_m):
    f32 = jnp.float32
    bf16 = jnp.bfloat16
    H2 = o_ref.shape[1]                       # output rows (= 2 * H of x1)

    def fill(pad, rows):
        # In-VMEM 1-row halo (replaces the host-side jnp.pad HBM round trip).
        z = jnp.zeros((1, pad.shape[1]), pad.dtype)
        pad[0:1, :] = z
        pad[H2 + 1:H2 + 2, :] = z
        pad[1:H2 + 1, :] = rows.astype(pad.dtype)

    def conv3x3(pad, b_ref):
        # One bf16 matmul per dy; the 3 dx taps and the width zero-padding are
        # folded into the banded weight matrix, so K = width*Cin per matmul.
        acc = jnp.dot(pad[0:H2, :].astype(bf16), b_ref[0],
                      preferred_element_type=f32)
        acc = acc + jnp.dot(pad[1:H2 + 1, :].astype(bf16), b_ref[1],
                            preferred_element_type=f32)
        acc = acc + jnp.dot(pad[2:H2 + 2, :].astype(bf16), b_ref[2],
                            preferred_element_type=f32)
        return acc

    # --- bilinear 2x upsample (align_corners=True) as two matmuls -----------
    x1 = x1_ref[0].astype(f32)                                   # (H, W*Cin)
    t = jnp.dot(wh_ref[...], x1, preferred_element_type=f32)     # (2H, W*Cin)
    u = jnp.dot(t, wwk_ref[...], preferred_element_type=f32)     # (2H, 2W*Cin)

    # --- up conv: Conv2d(Cin, Cin//2, 3, pad=1) ------------------------------
    fill(pad_u, u)
    up1 = conv3x3(pad_u, bup_ref) * sup_ref[...] + tup_ref[...]  # (2H, 2W*Ch)

    # --- DoubleConv conv1, channel concat folded in (x2-half + up1-half) ----
    fill(pad_a, x2_ref[0].astype(f32))
    fill(pad_b, up1)
    acc1 = conv3x3(pad_a, b1a_ref) + conv3x3(pad_b, b1b_ref)
    mid = jnp.maximum(acc1 * s1_ref[...] + t1_ref[...], 0.0)     # BN+ReLU (f32)

    # --- DoubleConv conv2 -----------------------------------------------------
    fill(pad_m, mid)
    acc2 = conv3x3(pad_m, b2_ref)
    y = jnp.maximum(acc2 * s2_ref[...] + t2_ref[...], 0.0)
    o_ref[0] = y.astype(o_ref.dtype)                             # (2H, 2W*Cout)


# ----------------------------------------------------------------------------
# Up.forward  (bilinear=True, linear=False)
# ----------------------------------------------------------------------------
def up_forward(x1_nchw, x2_nchw, p):
    N, Cin, H, W = x1_nchw.shape
    Chalf = Cin // 2
    H2, W2 = 2 * H, 2 * W
    Cmid = p["c1_w"].shape[-1]
    Cout = p["c2_w"].shape[-1]
    # This Up variant concatenates directly; x2 must be exactly 2x x1 spatially.
    assert x2_nchw.shape == (N, Chalf, H2, W2), x2_nchw.shape

    bf16 = jnp.bfloat16
    # NCHW -> NHWC -> lane-dense packed (rows, width*channels); bf16 halves DMA.
    x1p = jnp.transpose(x1_nchw, (0, 2, 3, 1)).reshape(N, H, W * Cin).astype(bf16)
    x2p = jnp.transpose(x2_nchw, (0, 2, 3, 1)).reshape(N, H2, W2 * Chalf).astype(bf16)

    # Bilinear 2x (align_corners=True) as matmuls: rows via wh, width (with
    # channels kept packed on the lane axis) via kron(ww^T, I_Cin).  No gathers.
    wh = _interp_matrix(H, H2)                                    # (2H, H)
    ww = _interp_matrix(W, W2)                                    # (2W, W)
    wwk = jnp.kron(ww.T, jnp.eye(Cin, dtype=jnp.float32))         # (W*Cin, 2W*Cin)

    # Conv weights as per-dy banded matrices (bf16); the channel concat is
    # folded by splitting conv1's input channels into its x2 / up(x1) halves.
    bup = _band_matrices(p["up_w"], W2)                           # (3, 2W*Cin, 2W*Chalf)
    b1a = _band_matrices(p["c1_w"][:, :, :Chalf, :], W2)          # x2 part
    b1b = _band_matrices(p["c1_w"][:, :, Chalf:, :], W2)          # up(x1) part
    b2 = _band_matrices(p["c2_w"], W2)

    sup = _tile_row(p["up_scale"], W2)
    tup = _tile_row(p["up_bias"], W2)
    s1 = _tile_row(p["c1_scale"], W2)
    t1 = _tile_row(p["c1_bias"], W2)
    s2 = _tile_row(p["c2_scale"], W2)
    t2 = _tile_row(p["c2_bias"], W2)

    full2 = lambda shape: pl.BlockSpec(shape, lambda b: (0, 0))
    full3 = lambda shape: pl.BlockSpec(shape, lambda b: (0, 0, 0))

    out_packed = pl.pallas_call(
        _up_fused_kernel,
        out_shape=jax.ShapeDtypeStruct((N, H2, W2 * Cout), jnp.float32),
        grid_spec=pltpu.PrefetchScalarGridSpec(
            num_scalar_prefetch=0,
            grid=(N,),
            in_specs=[
                pl.BlockSpec((1, H, W * Cin), lambda b: (b, 0, 0)),       # x1
                pl.BlockSpec((1, H2, W2 * Chalf), lambda b: (b, 0, 0)),   # x2
                full2((H2, H)),                                           # wh
                full2((W * Cin, W2 * Cin)),                               # wwk
                full3((3, W2 * Cin, W2 * Chalf)),                         # bup
                full2((1, W2 * Chalf)),                                   # sup
                full2((1, W2 * Chalf)),                                   # tup
                full3((3, W2 * Chalf, W2 * Cmid)),                        # b1a
                full3((3, W2 * Chalf, W2 * Cmid)),                        # b1b
                full2((1, W2 * Cmid)),                                    # s1
                full2((1, W2 * Cmid)),                                    # t1
                full3((3, W2 * Cmid, W2 * Cout)),                         # b2
                full2((1, W2 * Cout)),                                    # s2
                full2((1, W2 * Cout)),                                    # t2
            ],
            out_specs=pl.BlockSpec((1, H2, W2 * Cout), lambda b: (b, 0, 0)),
            scratch_shapes=[
                pltpu.VMEM((H2 + 2, W2 * Cin), jnp.float32),    # padded up(x1)
                pltpu.VMEM((H2 + 2, W2 * Chalf), jnp.float32),  # padded x2
                pltpu.VMEM((H2 + 2, W2 * Chalf), jnp.float32),  # padded up-conv out
                pltpu.VMEM((H2 + 2, W2 * Cmid), jnp.float32),   # padded mid
            ]),
        compiler_params=pltpu.CompilerParams(
            dimension_semantics=("parallel",)),
    )(x1p, x2p, wh, wwk, bup, sup, tup, b1a, b1b, s1, t1, b2, s2, t2)

    out = out_packed.reshape(N, H2, W2, Cout)
    return jnp.transpose(out, (0, 3, 1, 2))                      # NHWC -> NCHW


# ----------------------------------------------------------------------------
# Pure-JAX reference (gather-based upsample + lax.conv) for validation.
# It mirrors the kernel's precision policy (bf16 operands, f32 accumulation).
# ----------------------------------------------------------------------------
def _round_bf16(x):
    return x.astype(jnp.bfloat16).astype(jnp.float32)


def bilinear_up2x_align_corners(x_nhwc):
    N, H, W, C = x_nhwc.shape

    def idx(size_in, size_out):
        if size_in == 1:
            pos = jnp.zeros((size_out,), jnp.float32)
        else:
            pos = (jnp.arange(size_out, dtype=jnp.float32)
                   * (size_in - 1) / (size_out - 1))
        i0 = jnp.floor(pos).astype(jnp.int32)
        i1 = jnp.minimum(i0 + 1, size_in - 1)
        frac = pos - i0.astype(jnp.float32)
        return i0, i1, frac

    h0, h1, hf = idx(H, 2 * H)
    w0, w1, wf = idx(W, 2 * W)
    xh = (x_nhwc[:, h0] * (1.0 - hf)[None, :, None, None]
          + x_nhwc[:, h1] * hf[None, :, None, None])
    out = (xh[:, :, w0] * (1.0 - wf)[None, None, :, None]
           + xh[:, :, w1] * wf[None, None, :, None])
    return out


def _conv_ref(x, w, scale, bias, relu):
    y = jax.lax.conv_general_dilated(
        _round_bf16(x), _round_bf16(w), window_strides=(1, 1), padding="SAME",
        dimension_numbers=("NHWC", "HWIO", "NHWC"),
        precision=jax.lax.Precision.HIGHEST)
    y = y * scale[None, None, None, :] + bias[None, None, None, :]
    return jnp.maximum(y, 0.0) if relu else y


def up_forward_ref(x1_nchw, x2_nchw, p):
    x1 = jnp.transpose(x1_nchw, (0, 2, 3, 1))
    x2 = jnp.transpose(x2_nchw, (0, 2, 3, 1))
    x1 = bilinear_up2x_align_corners(_round_bf16(x1))
    x1 = _conv_ref(x1, p["up_w"], p["up_scale"], p["up_bias"], relu=False)
    x = jnp.concatenate([x2, x1], axis=-1)
    x = _conv_ref(x, p["c1_w"], p["c1_scale"], p["c1_bias"], relu=True)
    x = _conv_ref(x, p["c2_w"], p["c2_scale"], p["c2_bias"], relu=True)
    return jnp.transpose(x, (0, 3, 1, 2))


# ----------------------------------------------------------------------------
# Deterministic parameter construction (shapes from Up.__init__).
# ----------------------------------------------------------------------------
def make_params(key, in_ch, out_ch):
    ks = jax.random.split(key, 10)
    eps = 1e-5

    def bn_fold(conv_b, gamma, beta):
        # eval-mode BN with running_mean=0, running_var=1
        s = gamma / jnp.sqrt(1.0 + eps)
        return s, conv_b * s + beta

    p = {}
    # up conv: Conv2d(in_ch, in_ch // 2, 3, pad=1)  (no BN)
    p["up_w"] = 0.1 * jax.random.normal(ks[0], (3, 3, in_ch, in_ch // 2),
                                        jnp.float32)
    p["up_scale"] = jnp.ones((in_ch // 2,), jnp.float32)
    p["up_bias"] = 0.1 * jax.random.normal(ks[1], (in_ch // 2,), jnp.float32)

    # DoubleConv(in_ch, out_ch): conv1 in_ch->out_ch, conv2 out_ch->out_ch
    c1_w = 0.1 * jax.random.normal(ks[2], (3, 3, in_ch, out_ch), jnp.float32)
    c1_b = 0.1 * jax.random.normal(ks[3], (out_ch,), jnp.float32)
    g1 = 1.0 + 0.1 * jax.random.normal(ks[4], (out_ch,), jnp.float32)
    b1 = 0.1 * jax.random.normal(ks[5], (out_ch,), jnp.float32)
    p["c1_w"] = c1_w
    p["c1_scale"], p["c1_bias"] = bn_fold(c1_b, g1, b1)

    c2_w = 0.1 * jax.random.normal(ks[6], (3, 3, out_ch, out_ch), jnp.float32)
    c2_b = 0.1 * jax.random.normal(ks[7], (out_ch,), jnp.float32)
    g2 = 1.0 + 0.1 * jax.random.normal(ks[8], (out_ch,), jnp.float32)
    b2 = 0.1 * jax.random.normal(ks[9], (out_ch,), jnp.float32)
    p["c2_w"] = c2_w
    p["c2_scale"], p["c2_bias"] = bn_fold(c2_b, g2, b2)
    return p


if __name__ == "__main__":
    in_ch, out_ch = 8, 8
    N, H, W = 2, 16, 16                      # x1 spatial; x2 is 2x larger

    key = jax.random.PRNGKey(0)
    k1, k2, kp = jax.random.split(key, 3)
    x1 = jax.random.normal(k1, (N, in_ch, H, W), jnp.float32)          # NCHW
    x2 = jax.random.normal(k2, (N, in_ch // 2, 2 * H, 2 * W), jnp.float32)
    params = make_params(kp, in_ch, out_ch)

    out = jax.jit(up_forward)(x1, x2, params)
    out = jax.block_until_ready(out)

    ref = up_forward_ref(x1, x2, params)
    assert out.shape == (N, out_ch, 2 * H, 2 * W), out.shape
    # bf16 MXU operands + bf16-quantized intermediates => looser tolerance
    # than the old all-f32 version (as anticipated in the perf review).
    err = float(jnp.max(jnp.abs(out - ref)))
    assert jnp.allclose(out, ref, rtol=3e-2, atol=3e-2), err

    print("KERNEL_OK")
</pallas_src>

<mosaic_0001>
module attributes {stable_mosaic.version = 11 : i64} {
  func.func @_up_fused_kernel(%arg0: i32, %arg1: memref<1x16x128xbf16, #tpu.memory_space<vmem>>, %arg2: memref<1x32x128xbf16, #tpu.memory_space<vmem>>, %arg3: memref<32x16xf32, #tpu.memory_space<vmem>>, %arg4: memref<128x256xf32, #tpu.memory_space<vmem>>, %arg5: memref<3x256x128xbf16, #tpu.memory_space<vmem>>, %arg6: memref<1x128xf32, #tpu.memory_space<vmem>>, %arg7: memref<1x128xf32, #tpu.memory_space<vmem>>, %arg8: memref<3x128x256xbf16, #tpu.memory_space<vmem>>, %arg9: memref<3x128x256xbf16, #tpu.memory_space<vmem>>, %arg10: memref<1x256xf32, #tpu.memory_space<vmem>>, %arg11: memref<1x256xf32, #tpu.memory_space<vmem>>, %arg12: memref<3x256x256xbf16, #tpu.memory_space<vmem>>, %arg13: memref<1x256xf32, #tpu.memory_space<vmem>>, %arg14: memref<1x256xf32, #tpu.memory_space<vmem>>, %arg15: memref<1x32x256xf32, #tpu.memory_space<vmem>>, %arg16: memref<34x256xf32, #tpu.memory_space<vmem>>, %arg17: memref<34x128xf32, #tpu.memory_space<vmem>>, %arg18: memref<34x128xf32, #tpu.memory_space<vmem>>, %arg19: memref<34x256xf32, #tpu.memory_space<vmem>>) attributes {dimension_semantics = [#tpu.dimension_semantics<parallel>], iteration_bounds = array<i64: 2>, scalar_prefetch = 0 : i64, scratch_operands = 4 : i64, tpu.core_type = #tpu.core_type<tc>, window_params = [{transform_indices = @transform_0, window_bounds = array<i64: 1, 16, 128>}, {transform_indices = @transform_1, window_bounds = array<i64: 1, 32, 128>}, {pipeline_mode = #tpu.pipeline_mode<synchronous>, transform_indices = @transform_2, window_bounds = array<i64: 32, 16>}, {pipeline_mode = #tpu.pipeline_mode<synchronous>, transform_indices = @transform_3, window_bounds = array<i64: 128, 256>}, {pipeline_mode = #tpu.pipeline_mode<synchronous>, transform_indices = @transform_4, window_bounds = array<i64: 3, 256, 128>}, {pipeline_mode = #tpu.pipeline_mode<synchronous>, transform_indices = @transform_5, window_bounds = array<i64: 1, 128>}, {pipeline_mode = #tpu.pipeline_mode<synchronous>, transform_indices = @transform_6, window_bounds = array<i64: 1, 128>}, {pipeline_mode = #tpu.pipeline_mode<synchronous>, transform_indices = @transform_7, window_bounds = array<i64: 3, 128, 256>}, {pipeline_mode = #tpu.pipeline_mode<synchronous>, transform_indices = @transform_8, window_bounds = array<i64: 3, 128, 256>}, {pipeline_mode = #tpu.pipeline_mode<synchronous>, transform_indices = @transform_9, window_bounds = array<i64: 1, 256>}, {pipeline_mode = #tpu.pipeline_mode<synchronous>, transform_indices = @transform_10, window_bounds = array<i64: 1, 256>}, {pipeline_mode = #tpu.pipeline_mode<synchronous>, transform_indices = @transform_11, window_bounds = array<i64: 3, 256, 256>}, {pipeline_mode = #tpu.pipeline_mode<synchronous>, transform_indices = @transform_12, window_bounds = array<i64: 1, 256>}, {pipeline_mode = #tpu.pipeline_mode<synchronous>, transform_indices = @transform_13, window_bounds = array<i64: 1, 256>}, {transform_indices = @transform_14, window_bounds = array<i64: 1, 32, 256>}]} {
    %c0 = arith.constant 0 : index
    %c0_0 = arith.constant 0 : index
    %c0_1 = arith.constant 0 : index
    %0 = vector.load %arg1[%c0, %c0_0, %c0_1] : memref<1x16x128xbf16, #tpu.memory_space<vmem>>, vector<1x16x128xbf16>
    %1 = vector.shape_cast %0 : vector<1x16x128xbf16> to vector<16x128xbf16>
    %2 = arith.extf %1 : vector<16x128xbf16> to vector<16x128xf32>
    %c0_2 = arith.constant 0 : index
    %c0_3 = arith.constant 0 : index
    %3 = vector.load %arg3[%c0_2, %c0_3] : memref<32x16xf32, #tpu.memory_space<vmem>>, vector<32x16xf32>
    %cst = arith.constant dense<0.000000e+00> : vector<32x128xf32>
    %4 = tpu.matmul %3, %2, %cst {dimension_numbers = #tpu.dot_dimension_numbers<[1], [0], [0], [1], [0, 0, 1, 1], [], []>} : vector<32x16xf32>, vector<16x128xf32>, vector<32x128xf32> -> vector<32x128xf32>
    %c0_4 = arith.constant 0 : index
    %c0_5 = arith.constant 0 : index
    %5 = vector.load %arg4[%c0_4, %c0_5] : memref<128x256xf32, #tpu.memory_space<vmem>>, vector<128x256xf32>
    %cst_6 = arith.constant dense<0.000000e+00> : vector<32x256xf32>
    %6 = tpu.matmul %4, %5, %cst_6 {dimension_numbers = #tpu.dot_dimension_numbers<[1], [0], [0], [1], [0, 0, 1, 1], [], []>} : vector<32x128xf32>, vector<128x256xf32>, vector<32x256xf32> -> vector<32x256xf32>
    %cst_7 = arith.constant 0.000000e+00 : f32
    %7 = vector.broadcast %cst_7 : f32 to vector<1x256xf32>
    %c0_8 = arith.constant 0 : index
    %c0_9 = arith.constant 0 : index
    %8 = vector.load %arg16[%c0_8, %c0_9] : memref<34x256xf32, #tpu.memory_space<vmem>>, vector<1x256xf32>
    tpu.vector_store %arg16[%c0_8, %c0_9], %7 {strides = array<i32>} : memref<34x256xf32, #tpu.memory_space<vmem>>, vector<1x256xf32>,
    %c33 = arith.constant 33 : index
    %c0_10 = arith.constant 0 : index
    %9 = vector.load %arg16[%c33, %c0_10] : memref<34x256xf32, #tpu.memory_space<vmem>>, vector<1x256xf32>
    tpu.vector_store %arg16[%c33, %c0_10], %7 {strides = array<i32>} : memref<34x256xf32, #tpu.memory_space<vmem>>, vector<1x256xf32>,
    %c1 = arith.constant 1 : index
    %c0_11 = arith.constant 0 : index
    %10 = vector.load %arg16[%c1, %c0_11] : memref<34x256xf32, #tpu.memory_space<vmem>>, vector<32x256xf32>
    tpu.vector_store %arg16[%c1, %c0_11], %6 {strides = array<i32>} : memref<34x256xf32, #tpu.memory_space<vmem>>, vector<32x256xf32>,
    %c0_12 = arith.constant 0 : index
    %c0_13 = arith.constant 0 : index
    %11 = vector.load %arg16[%c0_12, %c0_13] : memref<34x256xf32, #tpu.memory_space<vmem>>, vector<32x256xf32>
    %12 = arith.truncf %11 : vector<32x256xf32> to vector<32x256xbf16>
    %c0_14 = arith.constant 0 : index
    %c0_15 = arith.constant 0 : index
    %c0_16 = arith.constant 0 : index
    %13 = vector.load %arg5[%c0_14, %c0_15, %c0_16] : memref<3x256x128xbf16, #tpu.memory_space<vmem>>, vector<1x256x128xbf16>
    %14 = vector.shape_cast %13 : vector<1x256x128xbf16> to vector<256x128xbf16>
    %cst_17 = arith.constant dense<0.000000e+00> : vector<32x128xf32>
    %15 = tpu.matmul %12, %14, %cst_17 {dimension_numbers = #tpu.dot_dimension_numbers<[1], [0], [0], [1], [0, 0, 1, 1], [], []>} : vector<32x256xbf16>, vector<256x128xbf16>, vector<32x128xf32> -> vector<32x128xf32>
    %c1_18 = arith.constant 1 : index
    %c0_19 = arith.constant 0 : index
    %16 = vector.load %arg16[%c1_18, %c0_19] : memref<34x256xf32, #tpu.memory_space<vmem>>, vector<32x256xf32>
    %17 = arith.truncf %16 : vector<32x256xf32> to vector<32x256xbf16>
    %c1_20 = arith.constant 1 : index
    %c0_21 = arith.constant 0 : index
    %c0_22 = arith.constant 0 : index
    %18 = vector.load %arg5[%c1_20, %c0_21, %c0_22] : memref<3x256x128xbf16, #tpu.memory_space<vmem>>, vector<1x256x128xbf16>
    %19 = vector.shape_cast %18 : vector<1x256x128xbf16> to vector<256x128xbf16>
    %cst_23 = arith.constant dense<0.000000e+00> : vector<32x128xf32>
    %20 = tpu.matmul %17, %19, %cst_23 {dimension_numbers = #tpu.dot_dimension_numbers<[1], [0], [0], [1], [0, 0, 1, 1], [], []>} : vector<32x256xbf16>, vector<256x128xbf16>, vector<32x128xf32> -> vector<32x128xf32>
    %21 = arith.addf %15, %20 : vector<32x128xf32>
    %c2 = arith.constant 2 : index
    %c0_24 = arith.constant 0 : index
    %22 = vector.load %arg16[%c2, %c0_24] : memref<34x256xf32, #tpu.memory_space<vmem>>, vector<32x256xf32>
    %23 = arith.truncf %22 : vector<32x256xf32> to vector<32x256xbf16>
    %c2_25 = arith.constant 2 : index
    %c0_26 = arith.constant 0 : index
    %c0_27 = arith.constant 0 : index
    %24 = vector.load %arg5[%c2_25, %c0_26, %c0_27] : memref<3x256x128xbf16, #tpu.memory_space<vmem>>, vector<1x256x128xbf16>
    %25 = vector.shape_cast %24 : vector<1x256x128xbf16> to vector<256x128xbf16>
    %cst_28 = arith.constant dense<0.000000e+00> : vector<32x128xf32>
    %26 = tpu.matmul %23, %25, %cst_28 {dimension_numbers = #tpu.dot_dimension_numbers<[1], [0], [0], [1], [0, 0, 1, 1], [], []>} : vector<32x256xbf16>, vector<256x128xbf16>, vector<32x128xf32> -> vector<32x128xf32>
    %27 = arith.addf %21, %26 : vector<32x128xf32>
    %c0_29 = arith.constant 0 : index
    %c0_30 = arith.constant 0 : index
    %28 = vector.load %arg6[%c0_29, %c0_30] : memref<1x128xf32, #tpu.memory_space<vmem>>, vector<1x128xf32>
    %29 = vector.broadcast %28 : vector<1x128xf32> to vector<32x128xf32>
    %30 = arith.mulf %27, %29 : vector<32x128xf32>
    %c0_31 = arith.constant 0 : index
    %c0_32 = arith.constant 0 : index
    %31 = vector.load %arg7[%c0_31, %c0_32] : memref<1x128xf32, #tpu.memory_space<vmem>>, vector<1x128xf32>
    %32 = vector.broadcast %31 : vector<1x128xf32> to vector<32x128xf32>
    %33 = arith.addf %30, %32 : vector<32x128xf32>
    %c0_33 = arith.constant 0 : index
    %c0_34 = arith.constant 0 : index
    %c0_35 = arith.constant 0 : index
    %34 = vector.load %arg2[%c0_33, %c0_34, %c0_35] : memref<1x32x128xbf16, #tpu.memory_space<vmem>>, vector<1x32x128xbf16>
    %35 = vector.shape_cast %34 : vector<1x32x128xbf16> to vector<32x128xbf16>
    %36 = arith.extf %35 : vector<32x128xbf16> to vector<32x128xf32>
    %cst_36 = arith.constant 0.000000e+00 : f32
    %37 = vector.broadcast %cst_36 : f32 to vector<1x128xf32>
    %c0_37 = arith.constant 0 : index
    %c0_38 = arith.constant 0 : index
    %38 = vector.load %arg17[%c0_37, %c0_38] : memref<34x128xf32, #tpu.memory_space<vmem>>, vector<1x128xf32>
    tpu.vector_store %arg17[%c0_37, %c0_38], %37 {strides = array<i32>} : memref<34x128xf32, #tpu.memory_space<vmem>>, vector<1x128xf32>,
    %c33_39 = arith.constant 33 : index
    %c0_40 = arith.constant 0 : index
    %39 = vector.load %arg17[%c33_39, %c0_40] : memref<34x128xf32, #tpu.memory_space<vmem>>, vector<1x128xf32>
    tpu.vector_store %arg17[%c33_39, %c0_40], %37 {strides = array<i32>} : memref<34x128xf32, #tpu.memory_space<vmem>>, vector<1x128xf32>,
    %c1_41 = arith.constant 1 : index
    %c0_42 = arith.constant 0 : index
    %40 = vector.load %arg17[%c1_41, %c0_42] : memref<34x128xf32, #tpu.memory_space<vmem>>, vector<32x128xf32>
    tpu.vector_store %arg17[%c1_41, %c0_42], %36 {strides = array<i32>} : memref<34x128xf32, #tpu.memory_space<vmem>>, vector<32x128xf32>,
    %cst_43 = arith.constant 0.000000e+00 : f32
    %41 = vector.broadcast %cst_43 : f32 to vector<1x128xf32>
    %c0_44 = arith.constant 0 : index
    %c0_45 = arith.constant 0 : index
    %42 = vector.load %arg18[%c0_44, %c0_45] : memref<34x128xf32, #tpu.memory_space<vmem>>, vector<1x128xf32>
    tpu.vector_store %arg18[%c0_44, %c0_45], %41 {strides = array<i32>} : memref<34x128xf32, #tpu.memory_space<vmem>>, vector<1x128xf32>,
    %c33_46 = arith.constant 33 : index
    %c0_47 = arith.constant 0 : index
    %43 = vector.load %arg18[%c33_46, %c0_47] : memref<34x128xf32, #tpu.memory_space<vmem>>, vector<1x128xf32>
    tpu.vector_store %arg18[%c33_46, %c0_47], %41 {strides = array<i32>} : memref<34x128xf32, #tpu.memory_space<vmem>>, vector<1x128xf32>,
    %c1_48 = arith.constant 1 : index
    %c0_49 = arith.constant 0 : index
    %44 = vector.load %arg18[%c1_48, %c0_49] : memref<34x128xf32, #tpu.memory_space<vmem>>, vector<32x128xf32>
    tpu.vector_store %arg18[%c1_48, %c0_49], %33 {strides = array<i32>} : memref<34x128xf32, #tpu.memory_space<vmem>>, vector<32x128xf32>,
    %c0_50 = arith.constant 0 : index
    %c0_51 = arith.constant 0 : index
    %45 = vector.load %arg17[%c0_50, %c0_51] : memref<34x128xf32, #tpu.memory_space<vmem>>, vector<32x128xf32>
    %46 = arith.truncf %45 : vector<32x128xf32> to vector<32x128xbf16>
    %c0_52 = arith.constant 0 : index
    %c0_53 = arith.constant 0 : index
    %c0_54 = arith.constant 0 : index
    %47 = vector.load %arg8[%c0_52, %c0_53, %c0_54] : memref<3x128x256xbf16, #tpu.memory_space<vmem>>, vector<1x128x256xbf16>
    %48 = vector.shape_cast %47 : vector<1x128x256xbf16> to vector<128x256xbf16>
    %cst_55 = arith.constant dense<0.000000e+00> : vector<32x256xf32>
    %49 = tpu.matmul %46, %48, %cst_55 {dimension_numbers = #tpu.dot_dimension_numbers<[1], [0], [0], [1], [0, 0, 1, 1], [], []>} : vector<32x128xbf16>, vector<128x256xbf16>, vector<32x256xf32> -> vector<32x256xf32>
    %c1_56 = arith.constant 1 : index
    %c0_57 = arith.constant 0 : index
    %50 = vector.load %arg17[%c1_56, %c0_57] : memref<34x128xf32, #tpu.memory_space<vmem>>, vector<32x128xf32>
    %51 = arith.truncf %50 : vector<32x128xf32> to vector<32x128xbf16>
    %c1_58 = arith.constant 1 : index
    %c0_59 = arith.constant 0 : index
    %c0_60 = arith.constant 0 : index
    %52 = vector.load %arg8[%c1_58, %c0_59, %c0_60] : memref<3x128x256xbf16, #tpu.memory_space<vmem>>, vector<1x128x256xbf16>
    %53 = vector.shape_cast %52 : vector<1x128x256xbf16> to vector<128x256xbf16>
    %cst_61 = arith.constant dense<0.000000e+00> : vector<32x256xf32>
    %54 = tpu.matmul %51, %53, %cst_61 {dimension_numbers = #tpu.dot_dimension_numbers<[1], [0], [0], [1], [0, 0, 1, 1], [], []>} : vector<32x128xbf16>, vector<128x256xbf16>, vector<32x256xf32> -> vector<32x256xf32>
    %55 = arith.addf %49, %54 : vector<32x256xf32>
    %c2_62 = arith.constant 2 : index
    %c0_63 = arith.constant 0 : index
    %56 = vector.load %arg17[%c2_62, %c0_63] : memref<34x128xf32, #tpu.memory_space<vmem>>, vector<32x128xf32>
    %57 = arith.truncf %56 : vector<32x128xf32> to vector<32x128xbf16>
    %c2_64 = arith.constant 2 : index
    %c0_65 = arith.constant 0 : index
    %c0_66 = arith.constant 0 : index
    %58 = vector.load %arg8[%c2_64, %c0_65, %c0_66] : memref<3x128x256xbf16, #tpu.memory_space<vmem>>, vector<1x128x256xbf16>
    %59 = vector.shape_cast %58 : vector<1x128x256xbf16> to vector<128x256xbf16>
    %cst_67 = arith.constant dense<0.000000e+00> : vector<32x256xf32>
    %60 = tpu.matmul %57, %59, %cst_67 {dimension_numbers = #tpu.dot_dimension_numbers<[1], [0], [0], [1], [0, 0, 1, 1], [], []>} : vector<32x128xbf16>, vector<128x256xbf16>, vector<32x256xf32> -> vector<32x256xf32>
    %61 = arith.addf %55, %60 : vector<32x256xf32>
    %c0_68 = arith.constant 0 : index
    %c0_69 = arith.constant 0 : index
    %62 = vector.load %arg18[%c0_68, %c0_69] : memref<34x128xf32, #tpu.memory_space<vmem>>, vector<32x128xf32>
    %63 = arith.truncf %62 : vector<32x128xf32> to vector<32x128xbf16>
    %c0_70 = arith.constant 0 : index
    %c0_71 = arith.constant 0 : index
    %c0_72 = arith.constant 0 : index
    %64 = vector.load %arg9[%c0_70, %c0_71, %c0_72] : memref<3x128x256xbf16, #tpu.memory_space<vmem>>, vector<1x128x256xbf16>
    %65 = vector.shape_cast %64 : vector<1x128x256xbf16> to vector<128x256xbf16>
    %cst_73 = arith.constant dense<0.000000e+00> : vector<32x256xf32>
    %66 = tpu.matmul %63, %65, %cst_73 {dimension_numbers = #tpu.dot_dimension_numbers<[1], [0], [0], [1], [0, 0, 1, 1], [], []>} : vector<32x128xbf16>, vector<128x256xbf16>, vector<32x256xf32> -> vector<32x256xf32>
    %c1_74 = arith.constant 1 : index
    %c0_75 = arith.constant 0 : index
    %67 = vector.load %arg18[%c1_74, %c0_75] : memref<34x128xf32, #tpu.memory_space<vmem>>, vector<32x128xf32>
    %68 = arith.truncf %67 : vector<32x128xf32> to vector<32x128xbf16>
    %c1_76 = arith.constant 1 : index
    %c0_77 = arith.constant 0 : index
    %c0_78 = arith.constant 0 : index
    %69 = vector.load %arg9[%c1_76, %c0_77, %c0_78] : memref<3x128x256xbf16, #tpu.memory_space<vmem>>, vector<1x128x256xbf16>
    %70 = vector.shape_cast %69 : vector<1x128x256xbf16> to vector<128x256xbf16>
    %cst_79 = arith.constant dense<0.000000e+00> : vector<32x256xf32>
    %71 = tpu.matmul %68, %70, %cst_79 {dimension_numbers = #tpu.dot_dimension_numbers<[1], [0], [0], [1], [0, 0, 1, 1], [], []>} : vector<32x128xbf16>, vector<128x256xbf16>, vector<32x256xf32> -> vector<32x256xf32>
    %72 = arith.addf %66, %71 : vector<32x256xf32>
    %c2_80 = arith.constant 2 : index
    %c0_81 = arith.constant 0 : index
    %73 = vector.load %arg18[%c2_80, %c0_81] : memref<34x128xf32, #tpu.memory_space<vmem>>, vector<32x128xf32>
    %74 = arith.truncf %73 : vector<32x128xf32> to vector<32x128xbf16>
    %c2_82 = arith.constant 2 : index
    %c0_83 = arith.constant 0 : index
    %c0_84 = arith.constant 0 : index
    %75 = vector.load %arg9[%c2_82, %c0_83, %c0_84] : memref<3x128x256xbf16, #tpu.memory_space<vmem>>, vector<1x128x256xbf16>
    %76 = vector.shape_cast %75 : vector<1x128x256xbf16> to vector<128x256xbf16>
    %cst_85 = arith.constant dense<0.000000e+00> : vector<32x256xf32>
    %77 = tpu.matmul %74, %76, %cst_85 {dimension_numbers = #tpu.dot_dimension_numbers<[1], [0], [0], [1], [0, 0, 1, 1], [], []>} : vector<32x128xbf16>, vector<128x256xbf16>, vector<32x256xf32> -> vector<32x256xf32>
    %78 = arith.addf %72, %77 : vector<32x256xf32>
    %79 = arith.addf %61, %78 : vector<32x256xf32>
    %c0_86 = arith.constant 0 : index
    %c0_87 = arith.constant 0 : index
    %80 = vector.load %arg10[%c0_86, %c0_87] : memref<1x256xf32, #tpu.memory_space<vmem>>, vector<1x256xf32>
    %81 = vector.broadcast %80 : vector<1x256xf32> to vector<32x256xf32>
    %82 = arith.mulf %79, %81 : vector<32x256xf32>
    %c0_88 = arith.constant 0 : index
    %c0_89 = arith.constant 0 : index
    %83 = vector.load %arg11[%c0_88, %c0_89] : memref<1x256xf32, #tpu.memory_space<vmem>>, vector<1x256xf32>
    %84 = vector.broadcast %83 : vector<1x256xf32> to vector<32x256xf32>
    %85 = arith.addf %82, %84 : vector<32x256xf32>
    %cst_90 = arith.constant 0.000000e+00 : f32
    %86 = vector.broadcast %cst_90 : f32 to vector<32x256xf32>
    %87 = arith.maximumf %85, %86 : vector<32x256xf32>
    %cst_91 = arith.constant 0.000000e+00 : f32
    %88 = vector.broadcast %cst_91 : f32 to vector<1x256xf32>
    %c0_92 = arith.constant 0 : index
    %c0_93 = arith.constant 0 : index
    %89 = vector.load %arg19[%c0_92, %c0_93] : memref<34x256xf32, #tpu.memory_space<vmem>>, vector<1x256xf32>
    tpu.vector_store %arg19[%c0_92, %c0_93], %88 {strides = array<i32>} : memref<34x256xf32, #tpu.memory_space<vmem>>, vector<1x256xf32>,
    %c33_94 = arith.constant 33 : index
    %c0_95 = arith.constant 0 : index
    %90 = vector.load %arg19[%c33_94, %c0_95] : memref<34x256xf32, #tpu.memory_space<vmem>>, vector<1x256xf32>
    tpu.vector_store %arg19[%c33_94, %c0_95], %88 {strides = array<i32>} : memref<34x256xf32, #tpu.memory_space<vmem>>, vector<1x256xf32>,
    %c1_96 = arith.constant 1 : index
    %c0_97 = arith.constant 0 : index
    %91 = vector.load %arg19[%c1_96, %c0_97] : memref<34x256xf32, #tpu.memory_space<vmem>>, vector<32x256xf32>
    tpu.vector_store %arg19[%c1_96, %c0_97], %87 {strides = array<i32>} : memref<34x256xf32, #tpu.memory_space<vmem>>, vector<32x256xf32>,
    %c0_98 = arith.constant 0 : index
    %c0_99 = arith.constant 0 : index
    %92 = vector.load %arg19[%c0_98, %c0_99] : memref<34x256xf32, #tpu.memory_space<vmem>>, vector<32x256xf32>
    %93 = arith.truncf %92 : vector<32x256xf32> to vector<32x256xbf16>
    %c0_100 = arith.constant 0 : index
    %c0_101 = arith.constant 0 : index
    %c0_102 = arith.constant 0 : index
    %94 = vector.load %arg12[%c0_100, %c0_101, %c0_102] : memref<3x256x256xbf16, #tpu.memory_space<vmem>>, vector<1x256x256xbf16>
    %95 = vector.shape_cast %94 : vector<1x256x256xbf16> to vector<256x256xbf16>
    %cst_103 = arith.constant dense<0.000000e+00> : vector<32x256xf32>
    %96 = tpu.matmul %93, %95, %cst_103 {dimension_numbers = #tpu.dot_dimension_numbers<[1], [0], [0], [1], [0, 0, 1, 1], [], []>} : vector<32x256xbf16>, vector<256x256xbf16>, vector<32x256xf32> -> vector<32x256xf32>
    %c1_104 = arith.constant 1 : index
    %c0_105 = arith.constant 0 : index
    %97 = vector.load %arg19[%c1_104, %c0_105] : memref<34x256xf32, #tpu.memory_space<vmem>>, vector<32x256xf32>
    %98 = arith.truncf %97 : vector<32x256xf32> to vector<32x256xbf16>
    %c1_106 = arith.constant 1 : index
    %c0_107 = arith.constant 0 : index
    %c0_108 = arith.constant 0 : index
    %99 = vector.load %arg12[%c1_106, %c0_107, %c0_108] : memref<3x256x256xbf16, #tpu.memory_space<vmem>>, vector<1x256x256xbf16>
    %100 = vector.shape_cast %99 : vector<1x256x256xbf16> to vector<256x256xbf16>
    %cst_109 = arith.constant dense<0.000000e+00> : vector<32x256xf32>
    %101 = tpu.matmul %98, %100, %cst_109 {dimension_numbers = #tpu.dot_dimension_numbers<[1], [0], [0], [1], [0, 0, 1, 1], [], []>} : vector<32x256xbf16>, vector<256x256xbf16>, vector<32x256xf32> -> vector<32x256xf32>
    %102 = arith.addf %96, %101 : vector<32x256xf32>
    %c2_110 = arith.constant 2 : index
    %c0_111 = arith.constant 0 : index
    %103 = vector.load %arg19[%c2_110, %c0_111] : memref<34x256xf32, #tpu.memory_space<vmem>>, vector<32x256xf32>
    %104 = arith.truncf %103 : vector<32x256xf32> to vector<32x256xbf16>
    %c2_112 = arith.constant 2 : index
    %c0_113 = arith.constant 0 : index
    %c0_114 = arith.constant 0 : index
    %105 = vector.load %arg12[%c2_112, %c0_113, %c0_114] : memref<3x256x256xbf16, #tpu.memory_space<vmem>>, vector<1x256x256xbf16>
    %106 = vector.shape_cast %105 : vector<1x256x256xbf16> to vector<256x256xbf16>
    %cst_115 = arith.constant dense<0.000000e+00> : vector<32x256xf32>
    %107 = tpu.matmul %104, %106, %cst_115 {dimension_numbers = #tpu.dot_dimension_numbers<[1], [0], [0], [1], [0, 0, 1, 1], [], []>} : vector<32x256xbf16>, vector<256x256xbf16>, vector<32x256xf32> -> vector<32x256xf32>
    %108 = arith.addf %102, %107 : vector<32x256xf32>
    %c0_116 = arith.constant 0 : index
    %c0_117 = arith.constant 0 : index
    %109 = vector.load %arg13[%c0_116, %c0_117] : memref<1x256xf32, #tpu.memory_space<vmem>>, vector<1x256xf32>
    %110 = vector.broadcast %109 : vector<1x256xf32> to vector<32x256xf32>
    %111 = arith.mulf %108, %110 : vector<32x256xf32>
    %c0_118 = arith.constant 0 : index
    %c0_119 = arith.constant 0 : index
    %112 = vector.load %arg14[%c0_118, %c0_119] : memref<1x256xf32, #tpu.memory_space<vmem>>, vector<1x256xf32>
    %113 = vector.broadcast %112 : vector<1x256xf32> to vector<32x256xf32>
    %114 = arith.addf %111, %113 : vector<32x256xf32>
    %cst_120 = arith.constant 0.000000e+00 : f32
    %115 = vector.broadcast %cst_120 : f32 to vector<32x256xf32>
    %116 = arith.maximumf %114, %115 : vector<32x256xf32>
    %c0_121 = arith.constant 0 : index
    %c0_122 = arith.constant 0 : index
    %c0_123 = arith.constant 0 : index
    %117 = vector.load %arg15[%c0_121, %c0_122, %c0_123] : memref<1x32x256xf32, #tpu.memory_space<vmem>>, vector<1x32x256xf32>
    %118 = vector.shape_cast %117 : vector<1x32x256xf32> to vector<32x256xf32>
    %119 = vector.shape_cast %116 : vector<32x256xf32> to vector<1x32x256xf32>
    tpu.vector_store %arg15[%c0_121, %c0_122, %c0_123], %119 {strides = array<i32>} : memref<1x32x256xf32, #tpu.memory_space<vmem>>, vector<1x32x256xf32>,
    return
  }
  func.func @transform_0(%arg0: i32) -> (i32, i32, i32) {
    %c0_i32 = arith.constant 0 : i32
    %c0_i32_0 = arith.constant 0 : i32
    %c0_i32_1 = arith.constant 0 : i32
    return %arg0, %c0_i32, %c0_i32_0 : i32, i32, i32
  }
  func.func @transform_1(%arg0: i32) -> (i32, i32, i32) {
    %c0_i32 = arith.constant 0 : i32
    %c0_i32_0 = arith.constant 0 : i32
    %c0_i32_1 = arith.constant 0 : i32
    return %arg0, %c0_i32, %c0_i32_0 : i32, i32, i32
  }
  func.func @transform_2(%arg0: i32) -> (i32, i32) {
    %c0_i32 = arith.constant 0 : i32
    %c0_i32_0 = arith.constant 0 : i32
    %c0_i32_1 = arith.constant 0 : i32
    return %c0_i32, %c0_i32_0 : i32, i32
  }
  func.func @transform_3(%arg0: i32) -> (i32, i32) {
    %c0_i32 = arith.constant 0 : i32
    %c0_i32_0 = arith.constant 0 : i32
    %c0_i32_1 = arith.constant 0 : i32
    return %c0_i32, %c0_i32_0 : i32, i32
  }
  func.func @transform_4(%arg0: i32) -> (i32, i32, i32) {
    %c0_i32 = arith.constant 0 : i32
    %c0_i32_0 = arith.constant 0 : i32
    %c0_i32_1 = arith.constant 0 : i32
    %c0_i32_2 = arith.constant 0 : i32
    return %c0_i32, %c0_i32_0, %c0_i32_1 : i32, i32, i32
  }
  func.func @transform_5(%arg0: i32) -> (i32, i32) {
    %c0_i32 = arith.constant 0 : i32
    %c0_i32_0 = arith.constant 0 : i32
    %c0_i32_1 = arith.constant 0 : i32
    return %c0_i32, %c0_i32_0 : i32, i32
  }
  func.func @transform_6(%arg0: i32) -> (i32, i32) {
    %c0_i32 = arith.constant 0 : i32
    %c0_i32_0 = arith.constant 0 : i32
    %c0_i32_1 = arith.constant 0 : i32
    return %c0_i32, %c0_i32_0 : i32, i32
  }
  func.func @transform_7(%arg0: i32) -> (i32, i32, i32) {
    %c0_i32 = arith.constant 0 : i32
    %c0_i32_0 = arith.constant 0 : i32
    %c0_i32_1 = arith.constant 0 : i32
    %c0_i32_2 = arith.constant 0 : i32
    return %c0_i32, %c0_i32_0, %c0_i32_1 : i32, i32, i32
  }
  func.func @transform_8(%arg0: i32) -> (i32, i32, i32) {
    %c0_i32 = arith.constant 0 : i32
    %c0_i32_0 = arith.constant 0 : i32
    %c0_i32_1 = arith.constant 0 : i32
    %c0_i32_2 = arith.constant 0 : i32
    return %c0_i32, %c0_i32_0, %c0_i32_1 : i32, i32, i32
  }
  func.func @transform_9(%arg0: i32) -> (i32, i32) {
    %c0_i32 = arith.constant 0 : i32
    %c0_i32_0 = arith.constant 0 : i32
    %c0_i32_1 = arith.constant 0 : i32
    return %c0_i32, %c0_i32_0 : i32, i32
  }
  func.func @transform_10(%arg0: i32) -> (i32, i32) {
    %c0_i32 = arith.constant 0 : i32
    %c0_i32_0 = arith.constant 0 : i32
    %c0_i32_1 = arith.constant 0 : i32
    return %c0_i32, %c0_i32_0 : i32, i32
  }
  func.func @transform_11(%arg0: i32) -> (i32, i32, i32) {
    %c0_i32 = arith.constant 0 : i32
    %c0_i32_0 = arith.constant 0 : i32
    %c0_i32_1 = arith.constant 0 : i32
    %c0_i32_2 = arith.constant 0 : i32
    return %c0_i32, %c0_i32_0, %c0_i32_1 : i32, i32, i32
  }
  func.func @transform_12(%arg0: i32) -> (i32, i32) {
    %c0_i32 = arith.constant 0 : i32
    %c0_i32_0 = arith.constant 0 : i32
    %c0_i32_1 = arith.constant 0 : i32
    return %c0_i32, %c0_i32_0 : i32, i32
  }
  func.func @transform_13(%arg0: i32) -> (i32, i32) {
    %c0_i32 = arith.constant 0 : i32
    %c0_i32_0 = arith.constant 0 : i32
    %c0_i32_1 = arith.constant 0 : i32
    return %c0_i32, %c0_i32_0 : i32, i32
  }
  func.func @transform_14(%arg0: i32) -> (i32, i32, i32) {
    %c0_i32 = arith.constant 0 : i32
    %c0_i32_0 = arith.constant 0 : i32
    %c0_i32_1 = arith.constant 0 : i32
    return %arg0, %c0_i32, %c0_i32_0 : i32, i32, i32
  }
}

</mosaic_0001>

<llo_original>
// kernel: tile.43
$region0: #{tile.43}
  #allocation0 [shape = 's32[1]{0}', space=sflag, size = 0x4, scoped, tag = 'scoped memory for tile.43']
  %s0 = inlined_call_operand.vmem [shape: f32[8], index: 0, kind: input, shape index: {}]
  %s1 = inlined_call_operand.vmem [shape: f32[32,8], index: 1, kind: output, shape index: {}]
  // Predicated region
  $region2: #{tile.43} parent=0 // pred_check
    _
  $region3: #{tile.43} parent=0 // pred_check_branch
    %3 = sbr.rel (0) target = $region5
  $region4: #{tile.43} parent=0 // pred_region
    _
  $region5: #{tile.43} parent=0 // pred_fallthru
    _
  %v4 = vld [vmem:[%s0] ss:$0 sm:$0xff]
  %5 = vst [vmem:[%s1] sm:$0xff] %v4
  %s6 = scalar_lea.vmem %s1, 8
  %7 = vst [vmem:[%s6] sm:$0xff] %v4
  %s8 = scalar_lea.vmem %s1, 16
  %9 = vst [vmem:[%s8] sm:$0xff] %v4
  %s10 = scalar_lea.vmem %s1, 24
  %11 = vst [vmem:[%s10] sm:$0xff] %v4

// kernel: tile.44
$region0: #{tile.44}
  %s0 = inlined_call_operand.vmem [shape: f32[32,8], index: 0, kind: input, shape index: {}]
  %s1 = inlined_call_operand.vmem [shape: f32[1,256], index: 1, kind: output, shape index: {}]
  $region1: #{tile.44} parent=0
    #allocation0 [shape = 'u8[8192]{0}', space=vmem, size = 0x2000, scoped, tag = 'scoped mem for output reshape']
    %s2 = smov 3
    %v3 = vld [vmem:[%s0] ss:$16 sm:%s2]
    %vm4 = vcmask 64512
    %5 = vst.msk [vmem:[#allocation0] ss:$8 sm:$0x3] %vm4, %v3
    %s6 = scalar_lea.vmem %s0, 15
    %s7 = smov 3
    %v8 = vld [vmem:[%s6] ss:$16 sm:%s7]
    %9 = vrot.lane.b32.xlu0 %v8, 120
    %v10 = vpop.permute.xlu0 %9
    %vm11 = vcmask 1048512
    %12 = vst.msk [vmem:[#allocation0] ss:$8 sm:$0x3] %vm11, %v10
    %s13 = scalar_lea.vmem %s0, 14
    %s14 = smov 3
    %v15 = vld [vmem:[%s13] ss:$16 sm:%s14]
    %16 = vrot.lane.b32.xlu0 %v15, 112
    %v17 = vpop.permute.xlu0 %16
    %vm18 = vcmask 982912
    %19 = vst.msk [vmem:[#allocation0] ss:$8 sm:$0x3] %vm18, %v17
    %s20 = scalar_lea.vmem %s0, 13
    %s21 = smov 3
    %v22 = vld [vmem:[%s20] ss:$16 sm:%s21]
    %23 = vrot.lane.b32.xlu0 %v22, 104
    %v24 = vpop.permute.xlu0 %23
    %vm25 = vcmask 917312
    %26 = vst.msk [vmem:[#allocation0] ss:$8 sm:$0x3] %vm25, %v24
    %s27 = scalar_lea.vmem %s0, 12
    %s28 = smov 3
    %v29 = vld [vmem:[%s27] ss:$16 sm:%s28]
    %30 = vrot.lane.b32.xlu0 %v29, 96
    %v31 = vpop.permute.xlu0 %30
    %vm32 = vcmask 851712
    %33 = vst.msk [vmem:[#allocation0] ss:$8 sm:$0x3] %vm32, %v31
    %s34 = scalar_lea.vmem %s0, 11
    %s35 = smov 3
    %v36 = vld [vmem:[%s34] ss:$16 sm:%s35]
    %37 = vrot.lane.b32.xlu0 %v36, 88
    %v38 = vpop.permute.xlu0 %37
    %vm39 = vcmask 786112
    %40 = vst.msk [vmem:[#allocation0] ss:$8 sm:$0x3] %vm39, %v38
    %s41 = scalar_lea.vmem %s0, 10
    %s42 = smov 3
    %v43 = vld [vmem:[%s41] ss:$16 sm:%s42]
    %44 = vrot.lane.b32.xlu0 %v43, 80
    %v45 = vpop.permute.xlu0 %44
    %vm46 = vcmask 720512
    %47 = vst.msk [vmem:[#allocation0] ss:$8 sm:$0x3] %vm46, %v45
    %s48 = scalar_lea.vmem %s0, 9
    %s49 = smov 3
    %v50 = vld [vmem:[%s48] ss:$16 sm:%s49]
    %51 = vrot.lane.b32.xlu0 %v50, 72
    %v52 = vpop.permute.xlu0 %51
    %vm53 = vcmask 654912
    %54 = vst.msk [vmem:[#allocation0] ss:$8 sm:$0x3] %vm53, %v52
    %s55 = scalar_lea.vmem %s0, 8
    %s56 = smov 3
    %v57 = vld [vmem:[%s55] ss:$16 sm:%s56]
    %58 = vrot.lane.b32.xlu0 %v57, 64
    %v59 = vpop.permute.xlu0 %58
    %vm60 = vcmask 589312
    %61 = vst.msk [vmem:[#allocation0] ss:$8 sm:$0x3] %vm60, %v59
    %s62 = scalar_lea.vmem %s0, 7
    %s63 = smov 3
    %v64 = vld [vmem:[%s62] ss:$16 sm:%s63]
    %65 = vrot.lane.b32.xlu0 %v64, 56
    %v66 = vpop.permute.xlu0 %65
    %vm67 = vcmask 523712
    %68 = vst.msk [vmem:[#allocation0] ss:$8 sm:$0x3] %vm67, %v66
    %s69 = scalar_lea.vmem %s0, 6
    %s70 = smov 3
    %v71 = vld [vmem:[%s69] ss:$16 sm:%s70]
    %72 = vrot.lane.b32.xlu0 %v71, 48
    %v73 = vpop.permute.xlu0 %72
    %vm74 = vcmask 458112
    %75 = vst.msk [vmem:[#allocation0] ss:$8 sm:$0x3] %vm74, %v73
    %s76 = scalar_lea.vmem %s0, 5
    %s77 = smov 3
    %v78 = vld [vmem:[%s76] ss:$16 sm:%s77]
    %79 = vrot.lane.b32.xlu0 %v78, 40
    %v80 = vpop.permute.xlu0 %79
    %vm81 = vcmask 392512
    %82 = vst.msk [vmem:[#allocation0] ss:$8 sm:$0x3] %vm81, %v80
    %s83 = scalar_lea.vmem %s0, 4
    %s84 = smov 3
    %v85 = vld [vmem:[%s83] ss:$16 sm:%s84]
    %86 = vrot.lane.b32.xlu0 %v85, 32
    %v87 = vpop.permute.xlu0 %86
    %vm88 = vcmask 326912
    %89 = vst.msk [vmem:[#allocation0] ss:$8 sm:$0x3] %vm88, %v87
    %s90 = scalar_lea.vmem %s0, 3
    %s91 = smov 3
    %v92 = vld [vmem:[%s90] ss:$16 sm:%s91]
    %93 = vrot.lane.b32.xlu0 %v92, 24
    %v94 = vpop.permute.xlu0 %93
    %vm95 = vcmask 261312
    %96 = vst.msk [vmem:[#allocation0] ss:$8 sm:$0x3] %vm95, %v94
    %s97 = scalar_lea.vmem %s0, 2
    %s98 = smov 3
    %v99 = vld [vmem:[%s97] ss:$16 sm:%s98]
    %100 = vrot.lane.b32.xlu0 %v99, 16
    %v101 = vpop.permute.xlu0 %100
    %vm102 = vcmask 195712
    %103 = vst.msk [vmem:[#allocation0] ss:$8 sm:$0x3] %vm102, %v101
    %s104 = scalar_lea.vmem %s0, 1
    %s105 = smov 3
    %v106 = vld [vmem:[%s104] ss:$16 sm:%s105]
    %107 = vrot.lane.b32.xlu0 %v106, 8
    %v108 = vpop.permute.xlu0 %107
    %vm109 = vcmask 130112
    %110 = vst.msk [vmem:[#allocation0] ss:$8 sm:$0x3] %vm109, %v108
    %s112 = sshllo.u32 0, 1
    %v114 = vld [vmem:[#allocation0] sm:%s112]
    %s115 = sshllo.u32 0, 1
    %116 = vst [vmem:[%s1] sm:%s115] %v114
    %s117 = scalar_lea.vmem [#allocation0], 8
    %v118 = vld [vmem:[%s117] sm:%s112]
    %s119 = sshllo.u32 0, 1
    %s120 = scalar_lea.vmem %s1, 1
    %121 = vst [vmem:[%s120] sm:%s119] %v118

// kernel: tile.33
$region0: #{tile.33}
  #allocation0 [shape = 's32[1]{0}', space=sflag, size = 0x4, scoped, tag = 'scoped memory for tile.33']
  %s0 = inlined_call_operand.vmem [shape: f32[4], index: 0, kind: input, shape index: {}]
  %s1 = inlined_call_operand.vmem [shape: f32[32,4], index: 1, kind: output, shape index: {}]
  // Predicated region
  $region2: #{tile.33} parent=0 // pred_check
    _
  $region3: #{tile.33} parent=0 // pred_check_branch
    %3 = sbr.rel (0) target = $region5
  $region4: #{tile.33} parent=0 // pred_region
    _
  $region5: #{tile.33} parent=0 // pred_fallthru
    _
  %v4 = vld [vmem:[%s0] ss:$0 sm:$0xff]
  %5 = vst [vmem:[%s1] sm:$0xff] %v4
  %s6 = scalar_lea.vmem %s1, 8
  %7 = vst [vmem:[%s6] sm:$0xff] %v4
  %s8 = scalar_lea.vmem %s1, 16
  %9 = vst [vmem:[%s8] sm:$0xff] %v4
  %s10 = scalar_lea.vmem %s1, 24
  %11 = vst [vmem:[%s10] sm:$0xff] %v4

// kernel: tile.34
$region0: #{tile.34}
  %s0 = inlined_call_operand.vmem [shape: f32[32,4], index: 0, kind: input, shape index: {}]
  %s1 = inlined_call_operand.vmem [shape: f32[1,128], index: 1, kind: output, shape index: {}]
  $region1: #{tile.34} parent=0
    #allocation0 [shape = 'u8[4096]{0}', space=vmem, size = 0x1000, scoped, tag = 'scoped mem for output reshape']
    %v2 = vld [vmem:[%s0] sm:$0x1]
    %vm3 = vcmask 31744
    %4 = vst.msk [vmem:[#allocation0] sm:$0x1] %vm3, %v2
    %s5 = scalar_lea.vmem %s0, 31
    %v6 = vld [vmem:[%s5] sm:$0x1]
    %7 = vrot.lane.b32.xlu0 %v6, 124
    %v8 = vpop.permute.xlu0 %7
    %vm9 = vcmask 1048544
    %10 = vst.msk [vmem:[#allocation0] sm:$0x1] %vm9, %v8
    %s11 = scalar_lea.vmem %s0, 30
    %v12 = vld [vmem:[%s11] sm:$0x1]
    %13 = vrot.lane.b32.xlu0 %v12, 120
    %v14 = vpop.permute.xlu0 %13
    %vm15 = vcmask 1015744
    %16 = vst.msk [vmem:[#allocation0] sm:$0x1] %vm15, %v14
    %s17 = scalar_lea.vmem %s0, 29
    %v18 = vld [vmem:[%s17] sm:$0x1]
    %19 = vrot.lane.b32.xlu0 %v18, 116
    %v20 = vpop.permute.xlu0 %19
    %vm21 = vcmask 982944
    %22 = vst.msk [vmem:[#allocation0] sm:$0x1] %vm21, %v20
    %s23 = scalar_lea.vmem %s0, 28
    %v24 = vld [vmem:[%s23] sm:$0x1]
    %25 = vrot.lane.b32.xlu0 %v24, 112
    %v26 = vpop.permute.xlu0 %25
    %vm27 = vcmask 950144
    %28 = vst.msk [vmem:[#allocation0] sm:$0x1] %vm27, %v26
    %s29 = scalar_lea.vmem %s0, 27
    %v30 = vld [vmem:[%s29] sm:$0x1]
    %31 = vrot.lane.b32.xlu0 %v30, 108
    %v32 = vpop.permute.xlu0 %31
    %vm33 = vcmask 917344
    %34 = vst.msk [vmem:[#allocation0] sm:$0x1] %vm33, %v32
    %s35 = scalar_lea.vmem %s0, 26
    %v36 = vld [vmem:[%s35] sm:$0x1]
    %37 = vrot.lane.b32.xlu0 %v36, 104
    %v38 = vpop.permute.xlu0 %37
    %vm39 = vcmask 884544
    %40 = vst.msk [vmem:[#allocation0] sm:$0x1] %vm39, %v38
    %s41 = scalar_lea.vmem %s0, 25
    %v42 = vld [vmem:[%s41] sm:$0x1]
    %43 = vrot.lane.b32.xlu0 %v42, 100
    %v44 = vpop.permute.xlu0 %43
    %vm45 = vcmask 851744
    %46 = vst.msk [vmem:[#allocation0] sm:$0x1] %vm45, %v44
    %s47 = scalar_lea.vmem %s0, 24
    %v48 = vld [vmem:[%s47] sm:$0x1]
    %49 = vrot.lane.b32.xlu0 %v48, 96
    %v50 = vpop.permute.xlu0 %49
    %vm51 = vcmask 818944
    %52 = vst.msk [vmem:[#allocation0] sm:$0x1] %vm51, %v50
    %s53 = scalar_lea.vmem %s0, 23
    %v54 = vld [vmem:[%s53] sm:$0x1]
    %55 = vrot.lane.b32.xlu0 %v54, 92
    %v56 = vpop.permute.xlu0 %55
    %vm57 = vcmask 786144
    %58 = vst.msk [vmem:[#allocation0] sm:$0x1] %vm57, %v56
    %s59 = scalar_lea.vmem %s0, 22
    %v60 = vld [vmem:[%s59] sm:$0x1]
    %61 = vrot.lane.b32.xlu0 %v60, 88
    %v62 = vpop.permute.xlu0 %61
    %vm63 = vcmask 753344
    %64 = vst.msk [vmem:[#allocation0] sm:$0x1] %vm63, %v62
    %s65 = scalar_lea.vmem %s0, 21
    %v66 = vld [vmem:[%s65] sm:$0x1]
    %67 = vrot.lane.b32.xlu0 %v66, 84
    %v68 = vpop.permute.xlu0 %67
    %vm69 = vcmask 720544
    %70 = vst.msk [vmem:[#allocation0] sm:$0x1] %vm69, %v68
    %s71 = scalar_lea.vmem %s0, 20
    %v72 = vld [vmem:[%s71] sm:$0x1]
    %73 = vrot.lane.b32.xlu0 %v72, 80
    %v74 = vpop.permute.xlu0 %73
    %vm75 = vcmask 687744
    %76 = vst.msk [vmem:[#allocation0] sm:$0x1] %vm75, %v74
    %s77 = scalar_lea.vmem %s0, 19
    %v78 = vld [vmem:[%s77] sm:$0x1]
    %79 = vrot.lane.b32.xlu0 %v78, 76
    %v80 = vpop.permute.xlu0 %79
    %vm81 = vcmask 654944
    %82 = vst.msk [vmem:[#allocation0] sm:$0x1] %vm81, %v80
    %s83 = scalar_lea.vmem %s0, 18
    %v84 = vld [vmem:[%s83] sm:$0x1]
    %85 = vrot.lane.b32.xlu0 %v84, 72
    %v86 = vpop.permute.xlu0 %85
    %vm87 = vcmask 622144
    %88 = vst.msk [vmem:[#allocation0] sm:$0x1] %vm87, %v86
    %s89 = scalar_lea.vmem %s0, 17
    %v90 = vld [vmem:[%s89] sm:$0x1]
    %91 = vrot.lane.b32.xlu0 %v90, 68
    %v92 = vpop.permute.xlu0 %91
    %vm93 = vcmask 589344
    %94 = vst.msk [vmem:[#allocation0] sm:$0x1] %vm93, %v92
    %s95 = scalar_lea.vmem %s0, 16
    %v96 = vld [vmem:[%s95] sm:$0x1]
    %97 = vrot.lane.b32.xlu0 %v96, 64
    %v98 = vpop.permute.xlu0 %97
    %vm99 = vcmask 556544
    %100 = vst.msk [vmem:[#allocation0] sm:$0x1] %vm99, %v98
    %s101 = scalar_lea.vmem %s0, 15
    %v102 = vld [vmem:[%s101] sm:$0x1]
    %103 = vrot.lane.b32.xlu0 %v102, 60
    %v104 = vpop.permute.xlu0 %103
    %vm105 = vcmask 523744
    %106 = vst.msk [vmem:[#allocation0] sm:$0x1] %vm105, %v104
    %s107 = scalar_lea.vmem %s0, 14
    %v108 = vld [vmem:[%s107] sm:$0x1]
    %109 = vrot.lane.b32.xlu0 %v108, 56
    %v110 = vpop.permute.xlu0 %109
    %vm111 = vcmask 490944
    %112 = vst.msk [vmem:[#allocation0] sm:$0x1] %vm111, %v110
    %s113 = scalar_lea.vmem %s0, 13
    %v114 = vld [vmem:[%s113] sm:$0x1]
    %115 = vrot.lane.b32.xlu0 %v114, 52
    %v116 = vpop.permute.xlu0 %115
    %vm117 = vcmask 458144
    %118 = vst.msk [vmem:[#allocation0] sm:$0x1] %vm117, %v116
    %s119 = scalar_lea.vmem %s0, 12
    %v120 = vld [vmem:[%s119] sm:$0x1]
    %121 = vrot.lane.b32.xlu0 %v120, 48
    %v122 = vpop.permute.xlu0 %121
    %vm123 = vcmask 425344
    %124 = vst.msk [vmem:[#allocation0] sm:$0x1] %vm123, %v122
    %s125 = scalar_lea.vmem %s0, 11
    %v126 = vld [vmem:[%s125] sm:$0x1]
    %127 = vrot.lane.b32.xlu0 %v126, 44
    %v128 = vpop.permute.xlu0 %127
    %vm129 = vcmask 392544
    %130 = vst.msk [vmem:[#allocation0] sm:$0x1] %vm129, %v128
    %s131 = scalar_lea.vmem %s0, 10
    %v132 = vld [vmem:[%s131] sm:$0x1]
    %133 = vrot.lane.b32.xlu0 %v132, 40
    %v134 = vpop.permute.xlu0 %133
    %vm135 = vcmask 359744
    %136 = vst.msk [vmem:[#allocation0] sm:$0x1] %vm135, %v134
    %s137 = scalar_lea.vmem %s0, 9
    %v138 = vld [vmem:[%s137] sm:$0x1]
    %139 = vrot.lane.b32.xlu0 %v138, 36
    %v140 = vpop.permute.xlu0 %139
    %vm141 = vcmask 326944
    %142 = vst.msk [vmem:[#allocation0] sm:$0x1] %vm141, %v140
    %s143 = scalar_lea.vmem %s0, 8
    %v144 = vld [vmem:[%s143] sm:$0x1]
    %145 = vrot.lane.b32.xlu0 %v144, 32
    %v146 = vpop.permute.xlu0 %145
    %vm147 = vcmask 294144
    %148 = vst.msk [vmem:[#allocation0] sm:$0x1] %vm147, %v146
    %s149 = scalar_lea.vmem %s0, 7
    %v150 = vld [vmem:[%s149] sm:$0x1]
    %151 = vrot.lane.b32.xlu0 %v150, 28
    %v152 = vpop.permute.xlu0 %151
    %vm153 = vcmask 261344
    %154 = vst.msk [vmem:[#allocation0] sm:$0x1] %vm153, %v152
    %s155 = scalar_lea.vmem %s0, 6
    %v156 = vld [vmem:[%s155] sm:$0x1]
    %157 = vrot.lane.b32.xlu0 %v156, 24
    %v158 = vpop.permute.xlu0 %157
    %vm159 = vcmask 228544
    %160 = vst.msk [vmem:[#allocation0] sm:$0x1] %vm159, %v158
    %s161 = scalar_lea.vmem %s0, 5
    %v162 = vld [vmem:[%s161] sm:$0x1]
    %163 = vrot.lane.b32.xlu0 %v162, 20
    %v164 = vpop.permute.xlu0 %163
    %vm165 = vcmask 195744
    %166 = vst.msk [vmem:[#allocation0] sm:$0x1] %vm165, %v164
    %s167 = scalar_lea.vmem %s0, 4
    %v168 = vld [vmem:[%s167] sm:$0x1]
    %169 = vrot.lane.b32.xlu0 %v168, 16
    %v170 = vpop.permute.xlu0 %169
    %vm171 = vcmask 162944
    %172 = vst.msk [vmem:[#allocation0] sm:$0x1] %vm171, %v170
    %s173 = scalar_lea.vmem %s0, 3
    %v174 = vld [vmem:[%s173] sm:$0x1]
    %175 = vrot.lane.b32.xlu0 %v174, 12
    %v176 = vpop.permute.xlu0 %175
    %vm177 = vcmask 130144
    %178 = vst.msk [vmem:[#allocation0] sm:$0x1] %vm177, %v176
    %s179 = scalar_lea.vmem %s0, 2
    %v180 = vld [vmem:[%s179] sm:$0x1]
    %181 = vrot.lane.b32.xlu0 %v180, 8
    %v182 = vpop.permute.xlu0 %181
    %vm183 = vcmask 97344
    %184 = vst.msk [vmem:[#allocation0] sm:$0x1] %vm183, %v182
    %s185 = scalar_lea.vmem %s0, 1
    %v186 = vld [vmem:[%s185] sm:$0x1]
    %187 = vrot.lane.b32.xlu0 %v186, 4
    %v188 = vpop.permute.xlu0 %187
    %vm189 = vcmask 64544
    %190 = vst.msk [vmem:[#allocation0] sm:$0x1] %vm189, %v188
    %s192 = sshllo.u32 0, 1
    %v194 = vld [vmem:[#allocation0] sm:%s192]
    %s195 = sshllo.u32 0, 1
    %196 = vst [vmem:[%s1] sm:%s195] %v194

// kernel: up_forward.1
$region0: #{up_forward.1}
  #allocation0 [shape = 'u32[]', space=smem, size = 0x4, offset = 0x4, fixed_abs, tag = 'smem constant byte address 0x4 - core index']
  #allocation1 [shape = 'u32[144,128]{1,0:T(1,128)}', space=vmem, size = 0x12000, scoped, tag = 'internal scratch']
  #allocation2 [shape = 'f32[34,256]{1,0:T(8,128)}', space=vmem, size = 0xa000, scoped, tag = 'scratch operand']
  #allocation3 [shape = 'f32[34,128]{1,0:T(8,128)}', space=vmem, size = 0x5000, scoped, tag = 'scratch operand']
  #allocation4 [shape = 'f32[34,128]{1,0:T(8,128)}', space=vmem, size = 0x5000, scoped, tag = 'scratch operand']
  #allocation5 [shape = 'f32[34,256]{1,0:T(8,128)}', space=vmem, size = 0xa000, scoped, tag = 'scratch operand']
  %s0 = inlined_call_operand.vmem [shape: bf16[2,16,128], index: 0, kind: input, shape index: {}]
  %s1 = inlined_call_operand.vmem [shape: bf16[2,32,128], index: 1, kind: input, shape index: {}]
  %s2 = inlined_call_operand.vmem [shape: f32[32,16], index: 2, kind: input, shape index: {}]
  %s3 = inlined_call_operand.vmem [shape: f32[128,256], index: 3, kind: input, shape index: {}]
  %s4 = inlined_call_operand.vmem [shape: bf16[3,256,128], index: 4, kind: input, shape index: {}]
  %s5 = inlined_call_operand.vmem [shape: f32[1,128], index: 5, kind: input, shape index: {}]
  %s6 = inlined_call_operand.vmem [shape: f32[1,128], index: 6, kind: input, shape index: {}]
  %s7 = inlined_call_operand.vmem [shape: bf16[3,128,256], index: 7, kind: input, shape index: {}]
  %s8 = inlined_call_operand.vmem [shape: bf16[3,128,256], index: 8, kind: input, shape index: {}]
  %s9 = inlined_call_operand.vmem [shape: f32[1,256], index: 9, kind: input, shape index: {}]
  %s10 = inlined_call_operand.vmem [shape: f32[1,256], index: 10, kind: input, shape index: {}]
  %s11 = inlined_call_operand.vmem [shape: bf16[3,256,256], index: 11, kind: input, shape index: {}]
  %s12 = inlined_call_operand.vmem [shape: f32[1,256], index: 12, kind: input, shape index: {}]
  %s13 = inlined_call_operand.vmem [shape: f32[1,256], index: 13, kind: input, shape index: {}]
  %s14 = inlined_call_operand.vmem [shape: f32[2,32,256], index: 14, kind: output, shape index: {}]
  %s15 = sld [smem:[#allocation0]]
  $region89: #{up_forward.1} parent=0
    _
  %s17 = ssub.s32 1, %s15
  %s18 = scalar_select 0, %s17, %s15
  loop: start=0, step=1, limit=4
  $region2: #{up_forward.1} parent=0 // loop_pre_header
    _
  $region3: #{up_forward.1} parent=0 // loop_header
    %s20 = sphi 0, %s24
    %p21 = scmp.ge.s32.totalorder %s20, 4
    %s30 = sphi 0, %s32
    %s33 = sphi 0, %s30
    %s34 = sphi 0, %s33
    %s50 = sphi 0, %s34
    %s56 = sphi 0, %s58
    %s59 = sphi 0, %s56
    %s60 = sphi 0, %s59
    %s76 = sphi 0, %s60
    %s80 = sphi 0, %s80
    %s82 = sphi 0, %s80
    %s83 = sphi 0, %s82
    %s97 = sphi 0, %s83
    %s101 = sphi 0, %s101
    %s103 = sphi 0, %s101
    %s104 = sphi 0, %s103
    %s118 = sphi 0, %s104
    %s122 = sphi 0, %s122
    %s124 = sphi 0, %s122
    %s125 = sphi 0, %s124
    %s139 = sphi 0, %s125
    %s143 = sphi 0, %s143
    %s145 = sphi 0, %s143
    %s146 = sphi 0, %s145
    %s160 = sphi 0, %s146
    %s164 = sphi 0, %s164
    %s166 = sphi 0, %s164
    %s167 = sphi 0, %s166
    %s181 = sphi 0, %s167
    %s185 = sphi 0, %s185
    %s187 = sphi 0, %s185
    %s188 = sphi 0, %s187
    %s202 = sphi 0, %s188
    %s206 = sphi 0, %s206
    %s208 = sphi 0, %s206
    %s209 = sphi 0, %s208
    %s223 = sphi 0, %s209
    %s227 = sphi 0, %s227
    %s229 = sphi 0, %s227
    %s230 = sphi 0, %s229
    %s244 = sphi 0, %s230
    %s248 = sphi 0, %s248
    %s250 = sphi 0, %s248
    %s251 = sphi 0, %s250
    %s265 = sphi 0, %s251
    %s269 = sphi 0, %s269
    %s271 = sphi 0, %s269
    %s272 = sphi 0, %s271
    %s286 = sphi 0, %s272
    %s290 = sphi 0, %s290
    %s292 = sphi 0, %s290
    %s293 = sphi 0, %s292
    %s307 = sphi 0, %s293
    %s311 = sphi 0, %s311
    %s313 = sphi 0, %s311
    %s314 = sphi 0, %s313
    %s328 = sphi 0, %s314
    %s334 = sphi 0, %s336
    %s337 = sphi 0, %s334
    %s338 = sphi 0, %s337
    %s354 = sphi 0, %s338
  $region4: #{up_forward.1} parent=0 // loop_header_branch
    %23 = sbr.rel (%p21) target = $region8
  $region5: #{up_forward.1} parent=0 // loop_body
    %s25 = ssub.s32 %s20, 1
    %s26 = ssub.s32 %s20, 2
    %s27 = sadd.s32 %s20, 1
    %s28 = ssub.s32 %s20, %s27
    %p29 = scmp.eq.s32.totalorder %s28, 0
    %s31 = sadd.s32 %s30, 1
    %s32 = scalar_select %p29, %s30, %s31
    %p35 = pneg %p29
    %p36 = scmp.eq.s32.totalorder %s20, 1
    %p37 = por %p35, %p36
    %p38 = scmp.ne.s32.totalorder %s30, %s33
    %p39 = scmp.eq.s32.totalorder %s20, 0
    %p40 = por %p38, %p39
    %p41 = scmp.ne.s32.totalorder %s30, %s33
    %p42 = scmp.eq.s32.totalorder %s25, 1
    %p43 = por %p41, %p42
    %p44 = scmp.ne.s32.totalorder %s33, %s34
    %p45 = scmp.eq.s32.totalorder %s25, 0
    %p46 = por %p44, %p45
    %p47 = scmp.ne.s32.totalorder %s33, %s34
    %p48 = scmp.eq.s32.totalorder %s26, 1
    %p49 = por %p47, %p48
    %p51 = scmp.ne.s32.totalorder %s34, %s50
    %p52 = scmp.eq.s32.totalorder %s26, 0
    %p53 = por %p51, %p52
    %s54 = ssub.s32 %s20, %s27
    %p55 = scmp.eq.s32.totalorder %s54, 0
    %s57 = sadd.s32 %s56, 1
    %s58 = scalar_select %p55, %s56, %s57
    %p61 = pneg %p55
    %p62 = scmp.eq.s32.totalorder %s20, 1
    %p63 = por %p61, %p62
    %p64 = scmp.ne.s32.totalorder %s56, %s59
    %p65 = scmp.eq.s32.totalorder %s20, 0
    %p66 = por %p64, %p65
    %p67 = scmp.ne.s32.totalorder %s56, %s59
    %p68 = scmp.eq.s32.totalorder %s25, 1
    %p69 = por %p67, %p68
    %p70 = scmp.ne.s32.totalorder %s59, %s60
    %p71 = scmp.eq.s32.totalorder %s25, 0
    %p72 = por %p70, %p71
    %p73 = scmp.ne.s32.totalorder %s59, %s60
    %p74 = scmp.eq.s32.totalorder %s26, 1
    %p75 = por %p73, %p74
    %p77 = scmp.ne.s32.totalorder %s60, %s76
    %p78 = scmp.eq.s32.totalorder %s26, 0
    %p79 = por %p77, %p78
    %s81 = sadd.s32 %s80, 1
    %p84 = scmp.eq.s32.totalorder %s20, 1
    %p85 = scmp.ne.s32.totalorder %s80, %s82
    %p86 = scmp.eq.s32.totalorder %s20, 0
    %p87 = por %p85, %p86
    %p88 = scmp.ne.s32.totalorder %s80, %s82
    %p89 = scmp.eq.s32.totalorder %s25, 1
    %p90 = por %p88, %p89
    %p91 = scmp.ne.s32.totalorder %s82, %s83
    %p92 = scmp.eq.s32.totalorder %s25, 0
    %p93 = por %p91, %p92
    %p94 = scmp.ne.s32.totalorder %s82, %s83
    %p95 = scmp.eq.s32.totalorder %s26, 1
    %p96 = por %p94, %p95
    %p98 = scmp.ne.s32.totalorder %s83, %s97
    %p99 = scmp.eq.s32.totalorder %s26, 0
    %p100 = por %p98, %p99
    %s102 = sadd.s32 %s101, 1
    %p105 = scmp.eq.s32.totalorder %s20, 1
    %p106 = scmp.ne.s32.totalorder %s101, %s103
    %p107 = scmp.eq.s32.totalorder %s20, 0
    %p108 = por %p106, %p107
    %p109 = scmp.ne.s32.totalorder %s101, %s103
    %p110 = scmp.eq.s32.totalorder %s25, 1
    %p111 = por %p109, %p110
    %p112 = scmp.ne.s32.totalorder %s103, %s104
    %p113 = scmp.eq.s32.totalorder %s25, 0
    %p114 = por %p112, %p113
    %p115 = scmp.ne.s32.totalorder %s103, %s104
    %p116 = scmp.eq.s32.totalorder %s26, 1
    %p117 = por %p115, %p116
    %p119 = scmp.ne.s32.totalorder %s104, %s118
    %p120 = scmp.eq.s32.totalorder %s26, 0
    %p121 = por %p119, %p120
    %s123 = sadd.s32 %s122, 1
    %p126 = scmp.eq.s32.totalorder %s20, 1
    %p127 = scmp.ne.s32.totalorder %s122, %s124
    %p128 = scmp.eq.s32.totalorder %s20, 0
    %p129 = por %p127, %p128
    %p130 = scmp.ne.s32.totalorder %s122, %s124
    %p131 = scmp.eq.s32.totalorder %s25, 1
    %p132 = por %p130, %p131
    %p133 = scmp.ne.s32.totalorder %s124, %s125
    %p134 = scmp.eq.s32.totalorder %s25, 0
    %p135 = por %p133, %p134
    %p136 = scmp.ne.s32.totalorder %s124, %s125
    %p137 = scmp.eq.s32.totalorder %s26, 1
    %p138 = por %p136, %p137
    %p140 = scmp.ne.s32.totalorder %s125, %s139
    %p141 = scmp.eq.s32.totalorder %s26, 0
    %p142 = por %p140, %p141
    %s144 = sadd.s32 %s143, 1
    %p147 = scmp.eq.s32.totalorder %s20, 1
    %p148 = scmp.ne.s32.totalorder %s143, %s145
    %p149 = scmp.eq.s32.totalorder %s20, 0
    %p150 = por %p148, %p149
    %p151 = scmp.ne.s32.totalorder %s143, %s145
    %p152 = scmp.eq.s32.totalorder %s25, 1
    %p153 = por %p151, %p152
    %p154 = scmp.ne.s32.totalorder %s145, %s146
    %p155 = scmp.eq.s32.totalorder %s25, 0
    %p156 = por %p154, %p155
    %p157 = scmp.ne.s32.totalorder %s145, %s146
    %p158 = scmp.eq.s32.totalorder %s26, 1
    %p159 = por %p157, %p158
    %p161 = scmp.ne.s32.totalorder %s146, %s160
    %p162 = scmp.eq.s32.totalorder %s26, 0
    %p163 = por %p161, %p162
    %s165 = sadd.s32 %s164, 1
    %p168 = scmp.eq.s32.totalorder %s20, 1
    %p169 = scmp.ne.s32.totalorder %s164, %s166
    %p170 = scmp.eq.s32.totalorder %s20, 0
    %p171 = por %p169, %p170
    %p172 = scmp.ne.s32.totalorder %s164, %s166
    %p173 = scmp.eq.s32.totalorder %s25, 1
    %p174 = por %p172, %p173
    %p175 = scmp.ne.s32.totalorder %s166, %s167
    %p176 = scmp.eq.s32.totalorder %s25, 0
    %p177 = por %p175, %p176
    %p178 = scmp.ne.s32.totalorder %s166, %s167
    %p179 = scmp.eq.s32.totalorder %s26, 1
    %p180 = por %p178, %p179
    %p182 = scmp.ne.s32.totalorder %s167, %s181
    %p183 = scmp.eq.s32.totalorder %s26, 0
    %p184 = por %p182, %p183
    %s186 = sadd.s32 %s185, 1
    %p189 = scmp.eq.s32.totalorder %s20, 1
    %p190 = scmp.ne.s32.totalorder %s185, %s187
    %p191 = scmp.eq.s32.totalorder %s20, 0
    %p192 = por %p190, %p191
    %p193 = scmp.ne.s32.totalorder %s185, %s187
    %p194 = scmp.eq.s32.totalorder %s25, 1
    %p195 = por %p193, %p194
    %p196 = scmp.ne.s32.totalorder %s187, %s188
    %p197 = scmp.eq.s32.totalorder %s25, 0
    %p198 = por %p196, %p197
    %p199 = scmp.ne.s32.totalorder %s187, %s188
    %p200 = scmp.eq.s32.totalorder %s26, 1
    %p201 = por %p199, %p200
    %p203 = scmp.ne.s32.totalorder %s188, %s202
    %p204 = scmp.eq.s32.totalorder %s26, 0
    %p205 = por %p203, %p204
    %s207 = sadd.s32 %s206, 1
    %p210 = scmp.eq.s32.totalorder %s20, 1
    %p211 = scmp.ne.s32.totalorder %s206, %s208
    %p212 = scmp.eq.s32.totalorder %s20, 0
    %p213 = por %p211, %p212
    %p214 = scmp.ne.s32.totalorder %s206, %s208
    %p215 = scmp.eq.s32.totalorder %s25, 1
    %p216 = por %p214, %p215
    %p217 = scmp.ne.s32.totalorder %s208, %s209
    %p218 = scmp.eq.s32.totalorder %s25, 0
    %p219 = por %p217, %p218
    %p220 = scmp.ne.s32.totalorder %s208, %s209
    %p221 = scmp.eq.s32.totalorder %s26, 1
    %p222 = por %p220, %p221
    %p224 = scmp.ne.s32.totalorder %s209, %s223
    %p225 = scmp.eq.s32.totalorder %s26, 0
    %p226 = por %p224, %p225
    %s228 = sadd.s32 %s227, 1
    %p231 = scmp.eq.s32.totalorder %s20, 1
    %p232 = scmp.ne.s32.totalorder %s227, %s229
    %p233 = scmp.eq.s32.totalorder %s20, 0
    %p234 = por %p232, %p233
    %p235 = scmp.ne.s32.totalorder %s227, %s229
    %p236 = scmp.eq.s32.totalorder %s25, 1
    %p237 = por %p235, %p236
    %p238 = scmp.ne.s32.totalorder %s229, %s230
    %p239 = scmp.eq.s32.totalorder %s25, 0
    %p240 = por %p238, %p239
    %p241 = scmp.ne.s32.totalorder %s229, %s230
    %p242 = scmp.eq.s32.totalorder %s26, 1
    %p243 = por %p241, %p242
    %p245 = scmp.ne.s32.totalorder %s230, %s244
    %p246 = scmp.eq.s32.totalorder %s26, 0
    %p247 = por %p245, %p246
    %s249 = sadd.s32 %s248, 1
    %p252 = scmp.eq.s32.totalorder %s20, 1
    %p253 = scmp.ne.s32.totalorder %s248, %s250
    %p254 = scmp.eq.s32.totalorder %s20, 0
    %p255 = por %p253, %p254
    %p256 = scmp.ne.s32.totalorder %s248, %s250
    %p257 = scmp.eq.s32.totalorder %s25, 1
    %p258 = por %p256, %p257
    %p259 = scmp.ne.s32.totalorder %s250, %s251
    %p260 = scmp.eq.s32.totalorder %s25, 0
    %p261 = por %p259, %p260
    %p262 = scmp.ne.s32.totalorder %s250, %s251
    %p263 = scmp.eq.s32.totalorder %s26, 1
    %p264 = por %p262, %p263
    %p266 = scmp.ne.s32.totalorder %s251, %s265
    %p267 = scmp.eq.s32.totalorder %s26, 0
    %p268 = por %p266, %p267
    %s270 = sadd.s32 %s269, 1
    %p273 = scmp.eq.s32.totalorder %s20, 1
    %p274 = scmp.ne.s32.totalorder %s269, %s271
    %p275 = scmp.eq.s32.totalorder %s20, 0
    %p276 = por %p274, %p275
    %p277 = scmp.ne.s32.totalorder %s269, %s271
    %p278 = scmp.eq.s32.totalorder %s25, 1
    %p279 = por %p277, %p278
    %p280 = scmp.ne.s32.totalorder %s271, %s272
    %p281 = scmp.eq.s32.totalorder %s25, 0
    %p282 = por %p280, %p281
    %p283 = scmp.ne.s32.totalorder %s271, %s272
    %p284 = scmp.eq.s32.totalorder %s26, 1
    %p285 = por %p283, %p284
    %p287 = scmp.ne.s32.totalorder %s272, %s286
    %p288 = scmp.eq.s32.totalorder %s26, 0
    %p289 = por %p287, %p288
    %s291 = sadd.s32 %s290, 1
    %p294 = scmp.eq.s32.totalorder %s20, 1
    %p295 = scmp.ne.s32.totalorder %s290, %s292
    %p296 = scmp.eq.s32.totalorder %s20, 0
    %p297 = por %p295, %p296
    %p298 = scmp.ne.s32.totalorder %s290, %s292
    %p299 = scmp.eq.s32.totalorder %s25, 1
    %p300 = por %p298, %p299
    %p301 = scmp.ne.s32.totalorder %s292, %s293
    %p302 = scmp.eq.s32.totalorder %s25, 0
    %p303 = por %p301, %p302
    %p304 = scmp.ne.s32.totalorder %s292, %s293
    %p305 = scmp.eq.s32.totalorder %s26, 1
    %p306 = por %p304, %p305
    %p308 = scmp.ne.s32.totalorder %s293, %s307
    %p309 = scmp.eq.s32.totalorder %s26, 0
    %p310 = por %p308, %p309
    %s312 = sadd.s32 %s311, 1
    %p315 = scmp.eq.s32.totalorder %s20, 1
    %p316 = scmp.ne.s32.totalorder %s311, %s313
    %p317 = scmp.eq.s32.totalorder %s20, 0
    %p318 = por %p316, %p317
    %p319 = scmp.ne.s32.totalorder %s311, %s313
    %p320 = scmp.eq.s32.totalorder %s25, 1
    %p321 = por %p319, %p320
    %p322 = scmp.ne.s32.totalorder %s313, %s314
    %p323 = scmp.eq.s32.totalorder %s25, 0
    %p324 = por %p322, %p323
    %p325 = scmp.ne.s32.totalorder %s313, %s314
    %p326 = scmp.eq.s32.totalorder %s26, 1
    %p327 = por %p325, %p326
    %p329 = scmp.ne.s32.totalorder %s314, %s328
    %p330 = scmp.eq.s32.totalorder %s26, 0
    %p331 = por %p329, %p330
    %s332 = ssub.s32 %s20, %s27
    %p333 = scmp.eq.s32.totalorder %s332, 0
    %s335 = sadd.s32 %s334, 1
    %s336 = scalar_select %p333, %s334, %s335
    %p339 = pneg %p333
    %p340 = scmp.eq.s32.totalorder %s20, 1
    %p341 = por %p339, %p340
    %p342 = scmp.ne.s32.totalorder %s334, %s337
    %p343 = scmp.eq.s32.totalorder %s20, 0
    %p344 = por %p342, %p343
    %p345 = scmp.ne.s32.totalorder %s334, %s337
    %p346 = scmp.eq.s32.totalorder %s25, 1
    %p347 = por %p345, %p346
    %p348 = scmp.ne.s32.totalorder %s337, %s338
    %p349 = scmp.eq.s32.totalorder %s25, 0
    %p350 = por %p348, %p349
    %p351 = scmp.ne.s32.totalorder %s337, %s338
    %p352 = scmp.eq.s32.totalorder %s26, 1
    %p353 = por %p351, %p352
    %p355 = scmp.ne.s32.totalorder %s338, %s354
    %p356 = scmp.eq.s32.totalorder %s26, 0
    %p357 = por %p355, %p356
    %p358 = scmp.le.s32.totalorder 1, %s20
    %p359 = scmp.lt.s32.totalorder %s20, 3
    %p360 = pnand %p358, %p359
    %p361 = pneg %p360
    // Predicated region
    $region9: #{up_forward.1} parent=5 // pred_check
      _
    $region10: #{up_forward.1} parent=5 // pred_check_branch
      %363 = sbr.rel (%p360) target = $region12
    $region11: #{up_forward.1} parent=5 // pred_region
      %s364 = ssub.s32 %s20, 1
      // Predicated region
      $region13: #{up_forward.1} parent=11 // pred_check
        %p365 = pneg %p93
      $region14: #{up_forward.1} parent=11 // pred_check_branch
        %367 = sbr.rel (%p365) target = $region16
      $region15: #{up_forward.1} parent=11 // pred_region
        _
      $region16: #{up_forward.1} parent=11 // pred_fallthru
        _
      // Predicated region
      $region17: #{up_forward.1} parent=11 // pred_check
        %p368 = pneg %p114
      $region18: #{up_forward.1} parent=11 // pred_check_branch
        %370 = sbr.rel (%p368) target = $region20
      $region19: #{up_forward.1} parent=11 // pred_region
        _
      $region20: #{up_forward.1} parent=11 // pred_fallthru
        _
      // Predicated region
      $region21: #{up_forward.1} parent=11 // pred_check
        %p371 = pneg %p135
      $region22: #{up_forward.1} parent=11 // pred_check_branch
        %373 = sbr.rel (%p371) target = $region24
      $region23: #{up_forward.1} parent=11 // pred_region
        _
      $region24: #{up_forward.1} parent=11 // pred_fallthru
        _
      // Predicated region
      $region25: #{up_forward.1} parent=11 // pred_check
        %p374 = pneg %p156
      $region26: #{up_forward.1} parent=11 // pred_check_branch
        %376 = sbr.rel (%p374) target = $region28
      $region27: #{up_forward.1} parent=11 // pred_region
        _
      $region28: #{up_forward.1} parent=11 // pred_fallthru
        _
      // Predicated region
      $region29: #{up_forward.1} parent=11 // pred_check
        %p377 = pneg %p177
      $region30: #{up_forward.1} parent=11 // pred_check_branch
        %379 = sbr.rel (%p377) target = $region32
      $region31: #{up_forward.1} parent=11 // pred_region
        _
      $region32: #{up_forward.1} parent=11 // pred_fallthru
        _
      // Predicated region
      $region33: #{up_forward.1} parent=11 // pred_check
        %p380 = pneg %p198
      $region34: #{up_forward.1} parent=11 // pred_check_branch
        %382 = sbr.rel (%p380) target = $region36
      $region35: #{up_forward.1} parent=11 // pred_region
        _
      $region36: #{up_forward.1} parent=11 // pred_fallthru
        _
      // Predicated region
      $region37: #{up_forward.1} parent=11 // pred_check
        %p383 = pneg %p219
      $region38: #{up_forward.1} parent=11 // pred_check_branch
        %385 = sbr.rel (%p383) target = $region40
      $region39: #{up_forward.1} parent=11 // pred_region
        _
      $region40: #{up_forward.1} parent=11 // pred_fallthru
        _
      // Predicated region
      $region41: #{up_forward.1} parent=11 // pred_check
        %p386 = pneg %p240
      $region42: #{up_forward.1} parent=11 // pred_check_branch
        %388 = sbr.rel (%p386) target = $region44
      $region43: #{up_forward.1} parent=11 // pred_region
        _
      $region44: #{up_forward.1} parent=11 // pred_fallthru
        _
      // Predicated region
      $region45: #{up_forward.1} parent=11 // pred_check
        %p389 = pneg %p261
      $region46: #{up_forward.1} parent=11 // pred_check_branch
        %391 = sbr.rel (%p389) target = $region48
      $region47: #{up_forward.1} parent=11 // pred_region
        _
      $region48: #{up_forward.1} parent=11 // pred_fallthru
        _
      // Predicated region
      $region49: #{up_forward.1} parent=11 // pred_check
        %p392 = pneg %p282
      $region50: #{up_forward.1} parent=11 // pred_check_branch
        %394 = sbr.rel (%p392) target = $region52
      $region51: #{up_forward.1} parent=11 // pred_region
        _
      $region52: #{up_forward.1} parent=11 // pred_fallthru
        _
      // Predicated region
      $region53: #{up_forward.1} parent=11 // pred_check
        %p395 = pneg %p303
      $region54: #{up_forward.1} parent=11 // pred_check_branch
        %397 = sbr.rel (%p395) target = $region56
      $region55: #{up_forward.1} parent=11 // pred_region
        _
      $region56: #{up_forward.1} parent=11 // pred_fallthru
        _
      // Predicated region
      $region57: #{up_forward.1} parent=11 // pred_check
        %p398 = pneg %p324
      $region58: #{up_forward.1} parent=11 // pred_check_branch
        %400 = sbr.rel (%p398) target = $region60
      $region59: #{up_forward.1} parent=11 // pred_region
        _
      $region60: #{up_forward.1} parent=11 // pred_fallthru
        _
    $region12: #{up_forward.1} parent=5 // pred_fallthru
      _
    %p401 = scmp.lt.s32.totalorder %s20, 2
    // Predicated region
    $region61: #{up_forward.1} parent=5 // pred_check
      %p402 = pneg %p401
    $region62: #{up_forward.1} parent=5 // pred_check_branch
      %404 = sbr.rel (%p402) target = $region64
    $region63: #{up_forward.1} parent=5 // pred_region
      // Predicated region
      $region65: #{up_forward.1} parent=63 // pred_check
        %p405 = pneg %p40
      $region66: #{up_forward.1} parent=63 // pred_check_branch
        %407 = sbr.rel (%p405) target = $region68
      $region67: #{up_forward.1} parent=63 // pred_region
        %p408 = scmp.lt.s32.totalorder %s20, 1
        %s409 = scalar_select %p408, %s20, 1
        %s410 = smul.addr %s409, 2
        %s411 = smul.addr %s410, 4
        %s412 = scalar_lea.vmem %s0, %s411
      $region68: #{up_forward.1} parent=63 // pred_fallthru
        _
      // Predicated region
      $region69: #{up_forward.1} parent=63 // pred_check
        %p413 = pneg %p66
      $region70: #{up_forward.1} parent=63 // pred_check_branch
        %415 = sbr.rel (%p413) target = $region72
      $region71: #{up_forward.1} parent=63 // pred_region
        %p416 = scmp.lt.s32.totalorder %s20, 1
        %s417 = scalar_select %p416, %s20, 1
        %s418 = smul.addr %s417, 4
        %s419 = smul.addr %s418, 4
        %s420 = scalar_lea.vmem %s1, %s419
      $region72: #{up_forward.1} parent=63 // pred_fallthru
        _
    $region64: #{up_forward.1} parent=5 // pred_fallthru
      _
    %p421 = scmp.le.s32.totalorder 1, %s20
    %p422 = scmp.lt.s32.totalorder %s20, 3
    %p423 = pnand %p421, %p422
    %p424 = pneg %p423
    // Predicated region
    $region73: #{up_forward.1} parent=5 // pred_check
      _
    $region74: #{up_forward.1} parent=5 // pred_check_branch
      %426 = sbr.rel (%p423) target = $region76
    $region75: #{up_forward.1} parent=5 // pred_region
      %s427 = ssub.s32 %s20, 1
      %p428 = scmp.lt.s32.totalorder %s25, 1
      %s429 = scalar_select %p428, %s25, 1
      %s430 = smul.addr %s429, 2
      %s431 = smul.addr %s430, 4
      %s432 = scalar_lea.vmem %s0, %s431
      %p433 = pneg %p46
      %p434 = pneg %p43
      %p435 = scmp.lt.s32.totalorder %s25, 1
      %s436 = scalar_select %p435, %s25, 1
      %s437 = smul.addr %s436, 4
      %s438 = smul.addr %s437, 4
      %s439 = scalar_lea.vmem %s1, %s438
      %p440 = pneg %p72
      %p441 = pneg %p69
      %p442 = pneg %p93
      %p443 = pneg %p90
      %p444 = pneg %p114
      %p445 = pneg %p111
      %p446 = pneg %p135
      %p447 = pneg %p132
      %p448 = pneg %p156
      %p449 = pneg %p153
      %p450 = pneg %p177
      %p451 = pneg %p174
      %p452 = pneg %p198
      %p453 = pneg %p195
      %p454 = pneg %p219
      %p455 = pneg %p216
      %p456 = pneg %p240
      %p457 = pneg %p237
      %p458 = pneg %p261
      %p459 = pneg %p258
      %p460 = pneg %p282
      %p461 = pneg %p279
      %p462 = pneg %p303
      %p463 = pneg %p300
      %p464 = pneg %p324
      %p465 = pneg %p321
      %p466 = pneg %p350
      %p467 = pneg %p347
      %p468 = scmp.lt.s32.totalorder %s25, 1
      %s469 = scalar_select %p468, %s25, 1
      %s470 = smul.addr %s469, 8
      %s471 = smul.addr %s470, 8
      %s472 = scalar_lea.vmem %s14, %s471
      %p473 = scmp.lt.s32.totalorder %s25, 1
      %s474 = scalar_select %p473, %s25, 1
      %s475 = smul.addr %s474, 2
      %s476 = smul.addr %s475, 4
      %s477 = scalar_lea.vmem %s0, %s476
      %p478 = scmp.lt.s32.totalorder %s25, 1
      %s479 = scalar_select %p478, %s25, 1
      %s480 = smul.addr %s479, 4
      %s481 = smul.addr %s480, 4
      %s482 = scalar_lea.vmem %s1, %s481
      %p483 = scmp.lt.s32.totalorder %s25, 1
      %s484 = scalar_select %p483, %s25, 1
      %s485 = smul.addr %s484, 8
      %s486 = smul.addr %s485, 8
      %s487 = scalar_lea.vmem %s14, %s486
      %v489 = vld [vmem:[%s477] sm:$0xf]
      %v490 = vld [vmem:[%s477 + $0x4] sm:$0xf]
      %v491 = vunpack.c.l.bf16 %v489
      %v492 = vunpack.c.l.bf16 %v490
      %v493 = vld [vmem:[%s2] sm:$0xff]
      %v494 = vld [vmem:[%s2 + $0x8] sm:$0xff]
      %v495 = vld [vmem:[%s2 + $0x10] sm:$0xff]
      %v496 = vld [vmem:[%s2 + $0x18] sm:$0xff]
      %vm497 = vcmask 130048
      %v499 = vsel %vm497, %v493, 0
      %v502 = vsel %vm497, %v494, 0
      %v505 = vsel %vm497, %v495, 0
      %v508 = vsel %vm497, %v496, 0
      %510 = vmatprep.subr.mxu0 0.0
      %511 = vmatpush1.msra.mxu0 %v491
      %512 = vmatprep.subr.mxu0 0.0
      %513 = vmatpush1.msra.mxu0 %v492
      %514 = vmatprep.subr.mxu0 0.0
      %515 = vmatpush1.msra.mxu0 0.0
      %516 = vmatprep.subr.mxu0 0.0
      %517 = vmatpush1.msra.mxu0 0.0
      %518 = vmatprep.subr.mxu0 0.0
      %519 = vmatpush1.msra.mxu0 0.0
      %520 = vmatprep.subr.mxu0 0.0
      %521 = vmatpush1.msra.mxu0 0.0
      %522 = vmatprep.subr.mxu0 0.0
      %523 = vmatpush1.msra.mxu0 0.0
      %524 = vmatprep.subr.mxu0 0.0
      %525 = vmatpush1.msra.mxu0 0.0
      %526 = vmatprep.subr.mxu0 0.0
      %527 = vmatpush1.msra.mxu0 0.0
      %528 = vmatprep.subr.mxu0 0.0
      %529 = vmatpush1.msra.mxu0 0.0
      %530 = vmatprep.subr.mxu0 0.0
      %531 = vmatpush1.msra.mxu0 0.0
      %532 = vmatprep.subr.mxu0 0.0
      %533 = vmatpush1.msra.mxu0 0.0
      %534 = vmatprep.subr.mxu0 0.0
      %535 = vmatpush1.msra.mxu0 0.0
      %536 = vmatprep.subr.mxu0 0.0
      %537 = vmatpush1.msra.mxu0 0.0
      %538 = vmatprep.subr.mxu0 0.0
      %539 = vmatpush1.msra.mxu0 0.0
      %540 = vmatprep.subr.mxu0 0.0
      %541 = vmatpush1.msra.mxu0 0.0
      %542 = vmatprep.subr.mxu0 0.0
      %543 = vmatpush1.msra.mxu0 0.0
      %544 = vmatprep.subr.mxu0 0.0
      %545 = vmatpush1.msra.mxu0 0.0
      %546 = vmatprep.subr.mxu0 0.0
      %547 = vmatpush1.msra.mxu0 0.0
      %548 = vmatprep.subr.mxu0 0.0
      %549 = vmatpush1.msra.mxu0 0.0
      %550 = vmatprep.subr.mxu0 0.0
      %551 = vmatpush1.msra.mxu0 0.0
      %552 = vmatprep.subr.mxu0 0.0
      %553 = vmatpush1.msra.mxu0 0.0
      %554 = vmatprep.subr.mxu0 0.0
      %555 = vmatpush1.msra.mxu0 0.0
      %556 = vmatprep.subr.mxu0 0.0
      %557 = vmatpush1.msra.mxu0 0.0
      %558 = vmatprep.subr.mxu0 0.0
      %559 = vmatpush1.msra.mxu0 0.0
      %560 = vmatprep.subr.mxu0 0.0
      %561 = vmatpush1.msra.mxu0 0.0
      %562 = vmatprep.subr.mxu0 0.0
      %563 = vmatpush1.msra.mxu0 0.0
      %564 = vmatprep.subr.mxu0 0.0
      %565 = vmatpush1.msra.mxu0 0.0
      %566 = vmatprep.subr.mxu0 0.0
      %567 = vmatpush1.msra.mxu0 0.0
      %568 = vmatprep.subr.mxu0 0.0
      %569 = vmatpush1.msra.mxu0 0.0
      %570 = vmatprep.subr.mxu0 0.0
      %571 = vmatpush1.msra.mxu0 0.0
      %572 = vmatprep.subr.mxu0 0.0
      %573 = vmatpush1.msra.mxu0 0.0
      %574 = vmatprep.mubr.f32.mxu0 0.0
      %575 = vmatmul.mubr.f32.gmra.mrb[0].mxu0 %v499
      %v576 = vpop.f32.mrb[0].mxu0
      %v577 = vadd.f32 0.0, %v576
      %v578 = vpop.f32.mrb[0].mxu0
      %579 = vmatprep.mubr.f32.mxu0 0.0
      %580 = vmatmul.mubr.f32.gmra.mrb[0].mxu0 %v502
      %v581 = vpop.f32.mrb[0].mxu0
      %v582 = vadd.f32 0.0, %v581
      %v583 = vpop.f32.mrb[0].mxu0
      %584 = vmatprep.mubr.f32.mxu0 0.0
      %585 = vmatmul.mubr.f32.gmra.mrb[0].mxu0 %v505
      %v586 = vpop.f32.mrb[0].mxu0
      %v587 = vadd.f32 0.0, %v586
      %v588 = vpop.f32.mrb[0].mxu0
      %589 = vmatprep.mubr.f32.mxu0 0.0
      %590 = vmatmul.mubr.f32.gmra.mrb[0].mxu0 %v508
      %v591 = vpop.f32.mrb[0].mxu0
      %v592 = vadd.f32 0.0, %v591
      %v593 = vpop.f32.mrb[0].mxu0
      %594 = vdwg.mxu0
      %v595 = vld [vmem:[%s3] sm:$0xff]
      %v596 = vld [vmem:[%s3 + $0x8] sm:$0xff]
      %v597 = vld [vmem:[%s3 + $0x10] sm:$0xff]
      %v598 = vld [vmem:[%s3 + $0x18] sm:$0xff]
      %v599 = vld [vmem:[%s3 + $0x20] sm:$0xff]
      %v600 = vld [vmem:[%s3 + $0x28] sm:$0xff]
      %v601 = vld [vmem:[%s3 + $0x30] sm:$0xff]
      %v602 = vld [vmem:[%s3 + $0x38] sm:$0xff]
      %v603 = vld [vmem:[%s3 + $0x40] sm:$0xff]
      %v604 = vld [vmem:[%s3 + $0x48] sm:$0xff]
      %v605 = vld [vmem:[%s3 + $0x50] sm:$0xff]
      %v606 = vld [vmem:[%s3 + $0x58] sm:$0xff]
      %v607 = vld [vmem:[%s3 + $0x60] sm:$0xff]
      %v608 = vld [vmem:[%s3 + $0x68] sm:$0xff]
      %v609 = vld [vmem:[%s3 + $0x70] sm:$0xff]
      %v610 = vld [vmem:[%s3 + $0x78] sm:$0xff]
      %v611 = vld [vmem:[%s3 + $0x80] sm:$0xff]
      %v612 = vld [vmem:[%s3 + $0x88] sm:$0xff]
      %v613 = vld [vmem:[%s3 + $0x90] sm:$0xff]
      %v614 = vld [vmem:[%s3 + $0x98] sm:$0xff]
      %v615 = vld [vmem:[%s3 + $0xa0] sm:$0xff]
      %v616 = vld [vmem:[%s3 + $0xa8] sm:$0xff]
      %v617 = vld [vmem:[%s3 + $0xb0] sm:$0xff]
      %v618 = vld [vmem:[%s3 + $0xb8] sm:$0xff]
      %v619 = vld [vmem:[%s3 + $0xc0] sm:$0xff]
      %v620 = vld [vmem:[%s3 + $0xc8] sm:$0xff]
      %v621 = vld [vmem:[%s3 + $0xd0] sm:$0xff]
      %v622 = vld [vmem:[%s3 + $0xd8] sm:$0xff]
      %v623 = vld [vmem:[%s3 + $0xe0] sm:$0xff]
      %v624 = vld [vmem:[%s3 + $0xe8] sm:$0xff]
      %v625 = vld [vmem:[%s3 + $0xf0] sm:$0xff]
      %v626 = vld [vmem:[%s3 + $0xf8] sm:$0xff]
      %627 = vmatprep.subr.mxu0 %v596
      %628 = vmatpush1.msra.mxu0 %v595
      %629 = vmatprep.subr.mxu0 %v598
      %630 = vmatpush1.msra.mxu0 %v597
      %631 = vmatprep.subr.mxu0 %v600
      %632 = vmatpush1.msra.mxu0 %v599
      %633 = vmatprep.subr.mxu0 %v602
      %634 = vmatpush1.msra.mxu0 %v601
      %635 = vmatprep.subr.mxu0 %v604
      %636 = vmatpush1.msra.mxu0 %v603
      %637 = vmatprep.subr.mxu0 %v606
      %638 = vmatpush1.msra.mxu0 %v605
      %639 = vmatprep.subr.mxu0 %v608
      %640 = vmatpush1.msra.mxu0 %v607
      %641 = vmatprep.subr.mxu0 %v610
      %642 = vmatpush1.msra.mxu0 %v609
      %643 = vmatprep.subr.mxu0 %v612
      %644 = vmatpush1.msra.mxu0 %v611
      %645 = vmatprep.subr.mxu0 %v614
      %646 = vmatpush1.msra.mxu0 %v613
      %647 = vmatprep.subr.mxu0 %v616
      %648 = vmatpush1.msra.mxu0 %v615
      %649 = vmatprep.subr.mxu0 %v618
      %650 = vmatpush1.msra.mxu0 %v617
      %651 = vmatprep.subr.mxu0 %v620
      %652 = vmatpush1.msra.mxu0 %v619
      %653 = vmatprep.subr.mxu0 %v622
      %654 = vmatpush1.msra.mxu0 %v621
      %655 = vmatprep.subr.mxu0 %v624
      %656 = vmatpush1.msra.mxu0 %v623
      %657 = vmatprep.subr.mxu0 %v626
      %658 = vmatpush1.msra.mxu0 %v625
      %659 = vmatprep.subr.mxu0 0.0
      %660 = vmatpush1.msra.mxu0 0.0
      %661 = vmatprep.subr.mxu0 0.0
      %662 = vmatpush1.msra.mxu0 0.0
      %663 = vmatprep.subr.mxu0 0.0
      %664 = vmatpush1.msra.mxu0 0.0
      %665 = vmatprep.subr.mxu0 0.0
      %666 = vmatpush1.msra.mxu0 0.0
      %667 = vmatprep.subr.mxu0 0.0
      %668 = vmatpush1.msra.mxu0 0.0
      %669 = vmatprep.subr.mxu0 0.0
      %670 = vmatpush1.msra.mxu0 0.0
      %671 = vmatprep.subr.mxu0 0.0
      %672 = vmatpush1.msra.mxu0 0.0
      %673 = vmatprep.subr.mxu0 0.0
      %674 = vmatpush1.msra.mxu0 0.0
      %675 = vmatprep.subr.mxu0 0.0
      %676 = vmatpush1.msra.mxu0 0.0
      %677 = vmatprep.subr.mxu0 0.0
      %678 = vmatpush1.msra.mxu0 0.0
      %679 = vmatprep.subr.mxu0 0.0
      %680 = vmatpush1.msra.mxu0 0.0
      %681 = vmatprep.subr.mxu0 0.0
      %682 = vmatpush1.msra.mxu0 0.0
      %683 = vmatprep.subr.mxu0 0.0
      %684 = vmatpush1.msra.mxu0 0.0
      %685 = vmatprep.subr.mxu0 0.0
      %686 = vmatpush1.msra.mxu0 0.0
      %687 = vmatprep.subr.mxu0 0.0
      %688 = vmatpush1.msra.mxu0 0.0
      %689 = vmatprep.subr.mxu0 0.0
      %690 = vmatpush1.msra.mxu0 0.0
      %691 = vmatprep.mubr.f32.mxu0 0.0
      %692 = vmatmul.mubr.f32.gmra.mrb[0].mxu0 %v577
      %v693 = vpop.f32.mrb[0].mxu0
      %v694 = vadd.f32 0.0, %v693
      %v695 = vpop.f32.mrb[0].mxu0
      %v696 = vadd.f32 0.0, %v695
      %697 = vmatprep.mubr.f32.mxu0 0.0
      %698 = vmatmul.mubr.f32.gmra.mrb[0].mxu0 %v582
      %v699 = vpop.f32.mrb[0].mxu0
      %v700 = vadd.f32 0.0, %v699
      %v701 = vpop.f32.mrb[0].mxu0
      %v702 = vadd.f32 0.0, %v701
      %703 = vmatprep.mubr.f32.mxu0 0.0
      %704 = vmatmul.mubr.f32.gmra.mrb[0].mxu0 %v587
      %v705 = vpop.f32.mrb[0].mxu0
      %v706 = vadd.f32 0.0, %v705
      %v707 = vpop.f32.mrb[0].mxu0
      %v708 = vadd.f32 0.0, %v707
      %709 = vmatprep.mubr.f32.mxu0 0.0
      %710 = vmatmul.mubr.f32.gmra.mrb[0].mxu0 %v592
      %v711 = vpop.f32.mrb[0].mxu0
      %v712 = vadd.f32 0.0, %v711
      %v713 = vpop.f32.mrb[0].mxu0
      %v714 = vadd.f32 0.0, %v713
      %715 = vdwg.mxu0
      %v716 = vlaneseq
      %vm717 = vcmp.ge.s32.totalorder %v716, 0
      %vm718 = vcmp.lt.s32.totalorder %v716, 256
      %vm719 = vmand %vm717, %vm718
      %720 = vst.msk [vmem:[#allocation2] ss:$8 sm:$0x3] %vm719, 0.0
      %721 = vst.msk [vmem:[#allocation2] ss:$8 sm:$0x0] %vm719, 0.0
      %s722 = scalar_lea.vmem [#allocation2], 65
      %723 = vst.msk [vmem:[%s722] ss:$8 sm:$0x3] %vm719, 0.0
      %724 = vst.msk [vmem:[%s722] ss:$8 sm:$0x0] %vm719, 0.0
      %vm733 = vcmask 1040384
      %v734 = vrot.slane %v694, 7
      %v735 = vrot.slane %v696, 7
      %v736 = vrot.slane %v700, 7
      %v737 = vsel %vm733, %v734, %v736
      %v738 = vrot.slane %v702, 7
      %v739 = vsel %vm733, %v735, %v738
      %v740 = vrot.slane %v706, 7
      %v741 = vsel %vm733, %v736, %v740
      %v742 = vrot.slane %v708, 7
      %v743 = vsel %vm733, %v738, %v742
      %v744 = vrot.slane %v712, 7
      %v745 = vsel %vm733, %v740, %v744
      %v746 = vrot.slane %v714, 7
      %v747 = vsel %vm733, %v742, %v746
      %758 = vst [vmem:[#allocation2] sm:$0xfe] %v734
      %759 = vst [vmem:[#allocation2 + $0x8] sm:$0xfe] %v735
      %760 = vst [vmem:[#allocation2 + $0x10] sm:$0xff] %v737
      %761 = vst [vmem:[#allocation2 + $0x18] sm:$0xff] %v739
      %762 = vst [vmem:[#allocation2 + $0x20] sm:$0xff] %v741
      %763 = vst [vmem:[#allocation2 + $0x28] sm:$0xff] %v743
      %764 = vst [vmem:[#allocation2 + $0x30] sm:$0xff] %v745
      %765 = vst [vmem:[#allocation2 + $0x38] sm:$0xff] %v747
      %766 = vst [vmem:[#allocation2 + $0x40] sm:$0x1] %v744
      %767 = vst [vmem:[#allocation2 + $0x48] sm:$0x1] %v746
      %v768 = vld [vmem:[#allocation2] sm:$0xff]
      %v769 = vld [vmem:[#allocation2 + $0x8] sm:$0xff]
      %v770 = vld [vmem:[#allocation2 + $0x10] sm:$0xff]
      %v771 = vld [vmem:[#allocation2 + $0x18] sm:$0xff]
      %v772 = vld [vmem:[#allocation2 + $0x20] sm:$0xff]
      %v773 = vld [vmem:[#allocation2 + $0x28] sm:$0xff]
      %v774 = vld [vmem:[#allocation2 + $0x30] sm:$0xff]
      %v775 = vld [vmem:[#allocation2 + $0x38] sm:$0xff]
      %v776 = vpack.c.bf16 %v770, %v768
      %v777 = vpack.c.bf16 %v771, %v769
      %v778 = vpack.c.bf16 %v774, %v772
      %v779 = vpack.c.bf16 %v775, %v773
      %v780 = vld [vmem:[%s4] sm:$0xf]
      %v781 = vld [vmem:[%s4 + $0x4] sm:$0xf]
      %v782 = vld [vmem:[%s4 + $0x8] sm:$0xf]
      %v783 = vld [vmem:[%s4 + $0xc] sm:$0xf]
      %v784 = vld [vmem:[%s4 + $0x10] sm:$0xf]
      %v785 = vld [vmem:[%s4 + $0x14] sm:$0xf]
      %v786 = vld [vmem:[%s4 + $0x18] sm:$0xf]
      %v787 = vld [vmem:[%s4 + $0x1c] sm:$0xf]
      %v788 = vld [vmem:[%s4 + $0x20] sm:$0xf]
      %v789 = vld [vmem:[%s4 + $0x24] sm:$0xf]
      %v790 = vld [vmem:[%s4 + $0x28] sm:$0xf]
      %v791 = vld [vmem:[%s4 + $0x2c] sm:$0xf]
      %v792 = vld [vmem:[%s4 + $0x30] sm:$0xf]
      %v793 = vld [vmem:[%s4 + $0x34] sm:$0xf]
      %v794 = vld [vmem:[%s4 + $0x38] sm:$0xf]
      %v795 = vld [vmem:[%s4 + $0x3c] sm:$0xf]
      %v796 = vld [vmem:[%s4 + $0x40] sm:$0xf]
      %v797 = vld [vmem:[%s4 + $0x44] sm:$0xf]
      %v798 = vld [vmem:[%s4 + $0x48] sm:$0xf]
      %v799 = vld [vmem:[%s4 + $0x4c] sm:$0xf]
      %v800 = vld [vmem:[%s4 + $0x50] sm:$0xf]
      %v801 = vld [vmem:[%s4 + $0x54] sm:$0xf]
      %v802 = vld [vmem:[%s4 + $0x58] sm:$0xf]
      %v803 = vld [vmem:[%s4 + $0x5c] sm:$0xf]
      %v804 = vld [vmem:[%s4 + $0x60] sm:$0xf]
      %v805 = vld [vmem:[%s4 + $0x64] sm:$0xf]
      %v806 = vld [vmem:[%s4 + $0x68] sm:$0xf]
      %v807 = vld [vmem:[%s4 + $0x6c] sm:$0xf]
      %v808 = vld [vmem:[%s4 + $0x70] sm:$0xf]
      %v809 = vld [vmem:[%s4 + $0x74] sm:$0xf]
      %v810 = vld [vmem:[%s4 + $0x78] sm:$0xf]
      %v811 = vld [vmem:[%s4 + $0x7c] sm:$0xf]
      %v812 = vld [vmem:[#allocation2] sm:$0xfe]
      %v813 = vld [vmem:[#allocation2 + $0x8] sm:$0xfe]
      %v814 = vld [vmem:[#allocation2 + $0x40] sm:$0x1]
      %v815 = vld [vmem:[#allocation2 + $0x48] sm:$0x1]
      %v816 = vpack.c.bf16 %v770, %v812
      %v817 = vpack.c.bf16 %v771, %v813
      %v818 = vpack.c.bf16 %v814, %v814
      %v819 = vpack.c.bf16 %v815, %v815
      %s820 = scalar_lea.vmem %s4, 128
      %v821 = vld [vmem:[%s820] sm:$0xf]
      %v822 = vld [vmem:[%s820 + $0x4] sm:$0xf]
      %v823 = vld [vmem:[%s820 + $0x8] sm:$0xf]
      %v824 = vld [vmem:[%s820 + $0xc] sm:$0xf]
      %v825 = vld [vmem:[%s820 + $0x10] sm:$0xf]
      %v826 = vld [vmem:[%s820 + $0x14] sm:$0xf]
      %v827 = vld [vmem:[%s820 + $0x18] sm:$0xf]
      %v828 = vld [vmem:[%s820 + $0x1c] sm:$0xf]
      %v829 = vld [vmem:[%s820 + $0x20] sm:$0xf]
      %v830 = vld [vmem:[%s820 + $0x24] sm:$0xf]
      %v831 = vld [vmem:[%s820 + $0x28] sm:$0xf]
      %v832 = vld [vmem:[%s820 + $0x2c] sm:$0xf]
      %v833 = vld [vmem:[%s820 + $0x30] sm:$0xf]
      %v834 = vld [vmem:[%s820 + $0x34] sm:$0xf]
      %v835 = vld [vmem:[%s820 + $0x38] sm:$0xf]
      %v836 = vld [vmem:[%s820 + $0x3c] sm:$0xf]
      %v837 = vld [vmem:[%s820 + $0x40] sm:$0xf]
      %v838 = vld [vmem:[%s820 + $0x44] sm:$0xf]
      %v839 = vld [vmem:[%s820 + $0x48] sm:$0xf]
      %v840 = vld [vmem:[%s820 + $0x4c] sm:$0xf]
      %v841 = vld [vmem:[%s820 + $0x50] sm:$0xf]
      %v842 = vld [vmem:[%s820 + $0x54] sm:$0xf]
      %v843 = vld [vmem:[%s820 + $0x58] sm:$0xf]
      %v844 = vld [vmem:[%s820 + $0x5c] sm:$0xf]
      %v845 = vld [vmem:[%s820 + $0x60] sm:$0xf]
      %v846 = vld [vmem:[%s820 + $0x64] sm:$0xf]
      %v847 = vld [vmem:[%s820 + $0x68] sm:$0xf]
      %v848 = vld [vmem:[%s820 + $0x6c] sm:$0xf]
      %v849 = vld [vmem:[%s820 + $0x70] sm:$0xf]
      %v850 = vld [vmem:[%s820 + $0x74] sm:$0xf]
      %v851 = vld [vmem:[%s820 + $0x78] sm:$0xf]
      %v852 = vld [vmem:[%s820 + $0x7c] sm:$0xf]
      %vm853 = vsmask.f32 7424
      %v855 = vshrl.u32 %v816, 16
      %v857 = vshll.u32 %v816, 16
      %v859 = vrot.slane %v857, 1
      %v860 = vor.u32 %v855, %v859
      %v862 = vshll.u32 %v778, 16
      %v864 = vrot.slane %v862, 1
      %v865 = vsel %vm853, %v860, %v864
      %v867 = vshrl.u32 %v817, 16
      %v869 = vshll.u32 %v817, 16
      %v871 = vrot.slane %v869, 1
      %v872 = vor.u32 %v867, %v871
      %v874 = vshll.u32 %v779, 16
      %v876 = vrot.slane %v874, 1
      %v877 = vsel %vm853, %v872, %v876
      %v878 = vshrl.u32 %v778, 16
      %v880 = vor.u32 %v878, %v864
      %v882 = vshll.u32 %v818, 16
      %v884 = vrot.slane %v882, 1
      %v885 = vsel %vm853, %v880, %v884
      %v886 = vshrl.u32 %v779, 16
      %v888 = vor.u32 %v886, %v876
      %v890 = vshll.u32 %v819, 16
      %v892 = vrot.slane %v890, 1
      %v893 = vsel %vm853, %v888, %v892
      %v930 = vunpack.c.l.b16 %v821
      %v931 = vunpack.c.l.b16 %v822
      %v932 = vunpack.c.l.b16 %v823
      %v933 = vunpack.c.l.b16 %v824
      %v934 = vunpack.c.l.b16 %v825
      %v935 = vunpack.c.l.b16 %v826
      %v936 = vunpack.c.l.b16 %v827
      %v937 = vunpack.c.l.b16 %v828
      %v938 = vunpack.c.l.b16 %v829
      %v939 = vunpack.c.l.b16 %v830
      %v940 = vunpack.c.l.b16 %v831
      %v941 = vunpack.c.l.b16 %v832
      %v942 = vunpack.c.l.b16 %v833
      %v943 = vunpack.c.l.b16 %v834
      %v944 = vunpack.c.l.b16 %v835
      %v945 = vunpack.c.l.b16 %v836
      %v946 = vunpack.c.l.b16 %v837
      %v947 = vunpack.c.l.b16 %v838
      %v948 = vunpack.c.l.b16 %v839
      %v949 = vunpack.c.l.b16 %v840
      %v950 = vunpack.c.l.b16 %v841
      %v951 = vunpack.c.l.b16 %v842
      %v952 = vunpack.c.l.b16 %v843
      %v953 = vunpack.c.l.b16 %v844
      %v954 = vunpack.c.l.b16 %v845
      %v955 = vunpack.c.l.b16 %v846
      %v956 = vunpack.c.l.b16 %v847
      %v957 = vunpack.c.l.b16 %v848
      %v958 = vunpack.c.l.b16 %v849
      %v959 = vunpack.c.l.b16 %v850
      %v960 = vunpack.c.l.b16 %v851
      %v961 = vunpack.c.l.b16 %v852
      %v962 = vpack.c.b16 %v931, %v930
      %v963 = vpack.c.b16 %v933, %v932
      %v964 = vpack.c.b16 %v935, %v934
      %v965 = vpack.c.b16 %v937, %v936
      %v966 = vpack.c.b16 %v939, %v938
      %v967 = vpack.c.b16 %v941, %v940
      %v968 = vpack.c.b16 %v943, %v942
      %v969 = vpack.c.b16 %v945, %v944
      %v970 = vpack.c.b16 %v947, %v946
      %v971 = vpack.c.b16 %v949, %v948
      %v972 = vpack.c.b16 %v951, %v950
      %v973 = vpack.c.b16 %v953, %v952
      %v974 = vpack.c.b16 %v955, %v954
      %v975 = vpack.c.b16 %v957, %v956
      %v976 = vpack.c.b16 %v959, %v958
      %v977 = vpack.c.b16 %v961, %v960
      %994 = vmatprep.subr.bf16.mxu0 0
      %995 = vmatpush1.bf16.msra.mxu0 %v962
      %996 = vmatprep.subr.bf16.mxu0 0
      %997 = vmatpush1.bf16.msra.mxu0 %v963
      %998 = vmatprep.subr.bf16.mxu0 0
      %999 = vmatpush1.bf16.msra.mxu0 %v964
      %1000 = vmatprep.subr.bf16.mxu0 0
      %1001 = vmatpush1.bf16.msra.mxu0 %v965
      %1002 = vmatprep.subr.bf16.mxu0 0
      %1003 = vmatpush1.bf16.msra.mxu0 %v966
      %1004 = vmatprep.subr.bf16.mxu0 0
      %1005 = vmatpush1.bf16.msra.mxu0 %v967
      %1006 = vmatprep.subr.bf16.mxu0 0
      %1007 = vmatpush1.bf16.msra.mxu0 %v968
      %1008 = vmatprep.subr.bf16.mxu0 0
      %1009 = vmatpush1.bf16.msra.mxu0 %v969
      %1010 = vmatprep.subr.bf16.mxu0 0
      %1011 = vmatpush1.bf16.msra.mxu0 %v970
      %1012 = vmatprep.subr.bf16.mxu0 0
      %1013 = vmatpush1.bf16.msra.mxu0 %v971
      %1014 = vmatprep.subr.bf16.mxu0 0
      %1015 = vmatpush1.bf16.msra.mxu0 %v972
      %1016 = vmatprep.subr.bf16.mxu0 0
      %1017 = vmatpush1.bf16.msra.mxu0 %v973
      %1018 = vmatprep.subr.bf16.mxu0 0
      %1019 = vmatpush1.bf16.msra.mxu0 %v974
      %1020 = vmatprep.subr.bf16.mxu0 0
      %1021 = vmatpush1.bf16.msra.mxu0 %v975
      %1022 = vmatprep.subr.bf16.mxu0 0
      %1023 = vmatpush1.bf16.msra.mxu0 %v976
      %1024 = vmatprep.subr.bf16.mxu0 0
      %1025 = vmatpush1.bf16.msra.mxu0 %v977
      %1026 = vmatprep.mubr.bf16.mxu0 %v877
      %1027 = vmatmul.mubr.bf16.gmra.mrb[0].mxu0 %v865
      %v1028 = vpop.f32.mrb[0].mxu0
      %v1029 = vadd.f32 0.0, %v1028
      %v1030 = vpop.f32.mrb[0].mxu0
      %v1031 = vpop.f32.mrb[0].mxu0
      %v1032 = vadd.f32 0.0, %v1031
      %v1033 = vpop.f32.mrb[0].mxu0
      %1034 = vmatprep.mubr.bf16.mxu0 %v893
      %1035 = vmatmul.mubr.bf16.gmra.mrb[0].mxu0 %v885
      %v1036 = vpop.f32.mrb[0].mxu0
      %v1037 = vadd.f32 0.0, %v1036
      %v1038 = vpop.f32.mrb[0].mxu0
      %v1039 = vpop.f32.mrb[0].mxu0
      %v1040 = vadd.f32 0.0, %v1039
      %v1041 = vpop.f32.mrb[0].mxu0
      %1042 = vdwg.mxu0
      %v1075 = vunpack.c.l.b16 %v780
      %v1076 = vunpack.c.l.b16 %v781
      %v1077 = vunpack.c.l.b16 %v782
      %v1078 = vunpack.c.l.b16 %v783
      %v1079 = vunpack.c.l.b16 %v784
      %v1080 = vunpack.c.l.b16 %v785
      %v1081 = vunpack.c.l.b16 %v786
      %v1082 = vunpack.c.l.b16 %v787
      %v1083 = vunpack.c.l.b16 %v788
      %v1084 = vunpack.c.l.b16 %v789
      %v1085 = vunpack.c.l.b16 %v790
      %v1086 = vunpack.c.l.b16 %v791
      %v1087 = vunpack.c.l.b16 %v792
      %v1088 = vunpack.c.l.b16 %v793
      %v1089 = vunpack.c.l.b16 %v794
      %v1090 = vunpack.c.l.b16 %v795
      %v1091 = vunpack.c.l.b16 %v796
      %v1092 = vunpack.c.l.b16 %v797
      %v1093 = vunpack.c.l.b16 %v798
      %v1094 = vunpack.c.l.b16 %v799
      %v1095 = vunpack.c.l.b16 %v800
      %v1096 = vunpack.c.l.b16 %v801
      %v1097 = vunpack.c.l.b16 %v802
      %v1098 = vunpack.c.l.b16 %v803
      %v1099 = vunpack.c.l.b16 %v804
      %v1100 = vunpack.c.l.b16 %v805
      %v1101 = vunpack.c.l.b16 %v806
      %v1102 = vunpack.c.l.b16 %v807
      %v1103 = vunpack.c.l.b16 %v808
      %v1104 = vunpack.c.l.b16 %v809
      %v1105 = vunpack.c.l.b16 %v810
      %v1106 = vunpack.c.l.b16 %v811
      %v1107 = vpack.c.b16 %v1076, %v1075
      %v1108 = vpack.c.b16 %v1078, %v1077
      %v1109 = vpack.c.b16 %v1080, %v1079
      %v1110 = vpack.c.b16 %v1082, %v1081
      %v1111 = vpack.c.b16 %v1084, %v1083
      %v1112 = vpack.c.b16 %v1086, %v1085
      %v1113 = vpack.c.b16 %v1088, %v1087
      %v1114 = vpack.c.b16 %v1090, %v1089
      %v1115 = vpack.c.b16 %v1092, %v1091
      %v1116 = vpack.c.b16 %v1094, %v1093
      %v1117 = vpack.c.b16 %v1096, %v1095
      %v1118 = vpack.c.b16 %v1098, %v1097
      %v1119 = vpack.c.b16 %v1100, %v1099
      %v1120 = vpack.c.b16 %v1102, %v1101
      %v1121 = vpack.c.b16 %v1104, %v1103
      %v1122 = vpack.c.b16 %v1106, %v1105
      %1139 = vmatprep.subr.bf16.mxu0 0
      %1140 = vmatpush1.bf16.msra.mxu0 %v1107
      %1141 = vmatprep.subr.bf16.mxu0 0
      %1142 = vmatpush1.bf16.msra.mxu0 %v1108
      %1143 = vmatprep.subr.bf16.mxu0 0
      %1144 = vmatpush1.bf16.msra.mxu0 %v1109
      %1145 = vmatprep.subr.bf16.mxu0 0
      %1146 = vmatpush1.bf16.msra.mxu0 %v1110
      %1147 = vmatprep.subr.bf16.mxu0 0
      %1148 = vmatpush1.bf16.msra.mxu0 %v1111
      %1149 = vmatprep.subr.bf16.mxu0 0
      %1150 = vmatpush1.bf16.msra.mxu0 %v1112
      %1151 = vmatprep.subr.bf16.mxu0 0
      %1152 = vmatpush1.bf16.msra.mxu0 %v1113
      %1153 = vmatprep.subr.bf16.mxu0 0
      %1154 = vmatpush1.bf16.msra.mxu0 %v1114
      %1155 = vmatprep.subr.bf16.mxu0 0
      %1156 = vmatpush1.bf16.msra.mxu0 %v1115
      %1157 = vmatprep.subr.bf16.mxu0 0
      %1158 = vmatpush1.bf16.msra.mxu0 %v1116
      %1159 = vmatprep.subr.bf16.mxu0 0
      %1160 = vmatpush1.bf16.msra.mxu0 %v1117
      %1161 = vmatprep.subr.bf16.mxu0 0
      %1162 = vmatpush1.bf16.msra.mxu0 %v1118
      %1163 = vmatprep.subr.bf16.mxu0 0
      %1164 = vmatpush1.bf16.msra.mxu0 %v1119
      %1165 = vmatprep.subr.bf16.mxu0 0
      %1166 = vmatpush1.bf16.msra.mxu0 %v1120
      %1167 = vmatprep.subr.bf16.mxu0 0
      %1168 = vmatpush1.bf16.msra.mxu0 %v1121
      %1169 = vmatprep.subr.bf16.mxu0 0
      %1170 = vmatpush1.bf16.msra.mxu0 %v1122
      %1171 = vmatprep.mubr.bf16.mxu0 %v777
      %1172 = vmatmul.mubr.bf16.gmra.mrb[0].mxu0 %v776
      %v1173 = vpop.f32.mrb[0].mxu0
      %v1174 = vadd.f32 %v1029, %v1173
      %v1175 = vpop.f32.mrb[0].mxu0
      %v1176 = vpop.f32.mrb[0].mxu0
      %v1177 = vadd.f32 %v1032, %v1176
      %v1178 = vpop.f32.mrb[0].mxu0
      %1179 = vmatprep.mubr.bf16.mxu0 %v779
      %1180 = vmatmul.mubr.bf16.gmra.mrb[0].mxu0 %v778
      %v1181 = vpop.f32.mrb[0].mxu0
      %v1182 = vadd.f32 %v1037, %v1181
      %v1183 = vpop.f32.mrb[0].mxu0
      %v1184 = vpop.f32.mrb[0].mxu0
      %v1185 = vadd.f32 %v1040, %v1184
      %v1186 = vpop.f32.mrb[0].mxu0
      %1187 = vdwg.mxu0
      %v1188 = vld [vmem:[#allocation2] sm:$0xfc]
      %v1189 = vld [vmem:[#allocation2 + $0x8] sm:$0xfc]
      %v1190 = vld [vmem:[#allocation2 + $0x40] sm:$0x3]
      %v1191 = vld [vmem:[#allocation2 + $0x48] sm:$0x3]
      %v1192 = vpack.c.bf16 %v770, %v1188
      %v1193 = vpack.c.bf16 %v771, %v1189
      %v1194 = vpack.c.bf16 %v1190, %v1190
      %v1195 = vpack.c.bf16 %v1191, %v1191
      %s1196 = scalar_lea.vmem %s4, 256
      %v1197 = vld [vmem:[%s1196] sm:$0xf]
      %v1198 = vld [vmem:[%s1196 + $0x4] sm:$0xf]
      %v1199 = vld [vmem:[%s1196 + $0x8] sm:$0xf]
      %v1200 = vld [vmem:[%s1196 + $0xc] sm:$0xf]
      %v1201 = vld [vmem:[%s1196 + $0x10] sm:$0xf]
      %v1202 = vld [vmem:[%s1196 + $0x14] sm:$0xf]
      %v1203 = vld [vmem:[%s1196 + $0x18] sm:$0xf]
      %v1204 = vld [vmem:[%s1196 + $0x1c] sm:$0xf]
      %v1205 = vld [vmem:[%s1196 + $0x20] sm:$0xf]
      %v1206 = vld [vmem:[%s1196 + $0x24] sm:$0xf]
      %v1207 = vld [vmem:[%s1196 + $0x28] sm:$0xf]
      %v1208 = vld [vmem:[%s1196 + $0x2c] sm:$0xf]
      %v1209 = vld [vmem:[%s1196 + $0x30] sm:$0xf]
      %v1210 = vld [vmem:[%s1196 + $0x34] sm:$0xf]
      %v1211 = vld [vmem:[%s1196 + $0x38] sm:$0xf]
      %v1212 = vld [vmem:[%s1196 + $0x3c] sm:$0xf]
      %v1213 = vld [vmem:[%s1196 + $0x40] sm:$0xf]
      %v1214 = vld [vmem:[%s1196 + $0x44] sm:$0xf]
      %v1215 = vld [vmem:[%s1196 + $0x48] sm:$0xf]
      %v1216 = vld [vmem:[%s1196 + $0x4c] sm:$0xf]
      %v1217 = vld [vmem:[%s1196 + $0x50] sm:$0xf]
      %v1218 = vld [vmem:[%s1196 + $0x54] sm:$0xf]
      %v1219 = vld [vmem:[%s1196 + $0x58] sm:$0xf]
      %v1220 = vld [vmem:[%s1196 + $0x5c] sm:$0xf]
      %v1221 = vld [vmem:[%s1196 + $0x60] sm:$0xf]
      %v1222 = vld [vmem:[%s1196 + $0x64] sm:$0xf]
      %v1223 = vld [vmem:[%s1196 + $0x68] sm:$0xf]
      %v1224 = vld [vmem:[%s1196 + $0x6c] sm:$0xf]
      %v1225 = vld [vmem:[%s1196 + $0x70] sm:$0xf]
      %v1226 = vld [vmem:[%s1196 + $0x74] sm:$0xf]
      %v1227 = vld [vmem:[%s1196 + $0x78] sm:$0xf]
      %v1228 = vld [vmem:[%s1196 + $0x7c] sm:$0xf]
      %vm1235 = vcmask 1046528
      %v1236 = vrot.slane %v1192, 1
      %v1237 = vrot.slane %v778, 1
      %v1238 = vsel %vm1235, %v1236, %v1237
      %v1239 = vrot.slane %v1193, 1
      %v1240 = vrot.slane %v779, 1
      %v1241 = vsel %vm1235, %v1239, %v1240
      %v1242 = vrot.slane %v1194, 1
      %v1243 = vsel %vm1235, %v1237, %v1242
      %v1244 = vrot.slane %v1195, 1
      %v1245 = vsel %vm1235, %v1240, %v1244
      %v1282 = vunpack.c.l.b16 %v1197
      %v1283 = vunpack.c.l.b16 %v1198
      %v1284 = vunpack.c.l.b16 %v1199
      %v1285 = vunpack.c.l.b16 %v1200
      %v1286 = vunpack.c.l.b16 %v1201
      %v1287 = vunpack.c.l.b16 %v1202
      %v1288 = vunpack.c.l.b16 %v1203
      %v1289 = vunpack.c.l.b16 %v1204
      %v1290 = vunpack.c.l.b16 %v1205
      %v1291 = vunpack.c.l.b16 %v1206
      %v1292 = vunpack.c.l.b16 %v1207
      %v1293 = vunpack.c.l.b16 %v1208
      %v1294 = vunpack.c.l.b16 %v1209
      %v1295 = vunpack.c.l.b16 %v1210
      %v1296 = vunpack.c.l.b16 %v1211
      %v1297 = vunpack.c.l.b16 %v1212
      %v1298 = vunpack.c.l.b16 %v1213
      %v1299 = vunpack.c.l.b16 %v1214
      %v1300 = vunpack.c.l.b16 %v1215
      %v1301 = vunpack.c.l.b16 %v1216
      %v1302 = vunpack.c.l.b16 %v1217
      %v1303 = vunpack.c.l.b16 %v1218
      %v1304 = vunpack.c.l.b16 %v1219
      %v1305 = vunpack.c.l.b16 %v1220
      %v1306 = vunpack.c.l.b16 %v1221
      %v1307 = vunpack.c.l.b16 %v1222
      %v1308 = vunpack.c.l.b16 %v1223
      %v1309 = vunpack.c.l.b16 %v1224
      %v1310 = vunpack.c.l.b16 %v1225
      %v1311 = vunpack.c.l.b16 %v1226
      %v1312 = vunpack.c.l.b16 %v1227
      %v1313 = vunpack.c.l.b16 %v1228
      %v1314 = vpack.c.b16 %v1283, %v1282
      %v1315 = vpack.c.b16 %v1285, %v1284
      %v1316 = vpack.c.b16 %v1287, %v1286
      %v1317 = vpack.c.b16 %v1289, %v1288
      %v1318 = vpack.c.b16 %v1291, %v1290
      %v1319 = vpack.c.b16 %v1293, %v1292
      %v1320 = vpack.c.b16 %v1295, %v1294
      %v1321 = vpack.c.b16 %v1297, %v1296
      %v1322 = vpack.c.b16 %v1299, %v1298
      %v1323 = vpack.c.b16 %v1301, %v1300
      %v1324 = vpack.c.b16 %v1303, %v1302
      %v1325 = vpack.c.b16 %v1305, %v1304
      %v1326 = vpack.c.b16 %v1307, %v1306
      %v1327 = vpack.c.b16 %v1309, %v1308
      %v1328 = vpack.c.b16 %v1311, %v1310
      %v1329 = vpack.c.b16 %v1313, %v1312
      %1346 = vmatprep.subr.bf16.mxu0 0
      %1347 = vmatpush1.bf16.msra.mxu0 %v1314
      %1348 = vmatprep.subr.bf16.mxu0 0
      %1349 = vmatpush1.bf16.msra.mxu0 %v1315
      %1350 = vmatprep.subr.bf16.mxu0 0
      %1351 = vmatpush1.bf16.msra.mxu0 %v1316
      %1352 = vmatprep.subr.bf16.mxu0 0
      %1353 = vmatpush1.bf16.msra.mxu0 %v1317
      %1354 = vmatprep.subr.bf16.mxu0 0
      %1355 = vmatpush1.bf16.msra.mxu0 %v1318
      %1356 = vmatprep.subr.bf16.mxu0 0
      %1357 = vmatpush1.bf16.msra.mxu0 %v1319
      %1358 = vmatprep.subr.bf16.mxu0 0
      %1359 = vmatpush1.bf16.msra.mxu0 %v1320
      %1360 = vmatprep.subr.bf16.mxu0 0
      %1361 = vmatpush1.bf16.msra.mxu0 %v1321
      %1362 = vmatprep.subr.bf16.mxu0 0
      %1363 = vmatpush1.bf16.msra.mxu0 %v1322
      %1364 = vmatprep.subr.bf16.mxu0 0
      %1365 = vmatpush1.bf16.msra.mxu0 %v1323
      %1366 = vmatprep.subr.bf16.mxu0 0
      %1367 = vmatpush1.bf16.msra.mxu0 %v1324
      %1368 = vmatprep.subr.bf16.mxu0 0
      %1369 = vmatpush1.bf16.msra.mxu0 %v1325
      %1370 = vmatprep.subr.bf16.mxu0 0
      %1371 = vmatpush1.bf16.msra.mxu0 %v1326
      %1372 = vmatprep.subr.bf16.mxu0 0
      %1373 = vmatpush1.bf16.msra.mxu0 %v1327
      %1374 = vmatprep.subr.bf16.mxu0 0
      %1375 = vmatpush1.bf16.msra.mxu0 %v1328
      %1376 = vmatprep.subr.bf16.mxu0 0
      %1377 = vmatpush1.bf16.msra.mxu0 %v1329
      %1378 = vmatprep.mubr.bf16.mxu0 %v1241
      %1379 = vmatmul.mubr.bf16.gmra.mrb[0].mxu0 %v1238
      %v1380 = vpop.f32.mrb[0].mxu0
      %v1381 = vadd.f32 0.0, %v1380
      %v1382 = vpop.f32.mrb[0].mxu0
      %v1383 = vpop.f32.mrb[0].mxu0
      %v1384 = vadd.f32 0.0, %v1383
      %v1385 = vpop.f32.mrb[0].mxu0
      %1386 = vmatprep.mubr.bf16.mxu0 %v1245
      %1387 = vmatmul.mubr.bf16.gmra.mrb[0].mxu0 %v1243
      %v1388 = vpop.f32.mrb[0].mxu0
      %v1389 = vadd.f32 0.0, %v1388
      %v1390 = vpop.f32.mrb[0].mxu0
      %v1391 = vpop.f32.mrb[0].mxu0
      %v1392 = vadd.f32 0.0, %v1391
      %v1393 = vpop.f32.mrb[0].mxu0
      %1394 = vdwg.mxu0
      %v1395 = vadd.f32 %v1174, %v1381
      %v1396 = vadd.f32 %v1177, %v1384
      %v1397 = vadd.f32 %v1182, %v1389
      %v1398 = vadd.f32 %v1185, %v1392
      %v1399 = vld [vmem:[%s5] sm:$0x1]
      %v1401 = vlaneseq
      %v1402 = vshrl.u32 %v1401, 7
      %v1403 = vsub.s32 0, %v1402
      %v1404 = vrot.slane %v1399, %v1403
      %v1406 = vmul.f32 %v1395, %v1404
      %v1407 = vmul.f32 %v1396, %v1404
      %v1408 = vmul.f32 %v1397, %v1404
      %v1409 = vmul.f32 %v1398, %v1404
      %v1410 = vld [vmem:[%s6] sm:$0x1]
      %v1412 = vlaneseq
      %v1413 = vshrl.u32 %v1412, 7
      %v1414 = vsub.s32 0, %v1413
      %v1415 = vrot.slane %v1410, %v1414
      %v1417 = vadd.f32 %v1406, %v1415
      %v1418 = vadd.f32 %v1407, %v1415
      %v1419 = vadd.f32 %v1408, %v1415
      %v1420 = vadd.f32 %v1409, %v1415
      %v1421 = vld [vmem:[%s482] sm:$0xf]
      %v1422 = vld [vmem:[%s482 + $0x4] sm:$0xf]
      %v1423 = vld [vmem:[%s482 + $0x8] sm:$0xf]
      %v1424 = vld [vmem:[%s482 + $0xc] sm:$0xf]
      %v1425 = vunpack.c.l.bf16 %v1421
      %v1426 = vunpack.c.l.bf16 %v1422
      %v1427 = vunpack.c.l.bf16 %v1423
      %v1428 = vunpack.c.l.bf16 %v1424
      %1429 = vst [vmem:[#allocation3] sm:$0x1] 0.0
      %1430 = vst [vmem:[#allocation3 + $0x21] sm:$0x1] 0.0
      %1431 = vst [vmem:[#allocation3 + $0x1] sm:$0xff] %v1425
      %1432 = vst [vmem:[#allocation3 + $0x9] sm:$0xff] %v1426
      %1433 = vst [vmem:[#allocation3 + $0x11] sm:$0xff] %v1427
      %1434 = vst [vmem:[#allocation3 + $0x19] sm:$0xff] %v1428
      %1435 = vst [vmem:[#allocation4] sm:$0x1] 0.0
      %1436 = vst [vmem:[#allocation4 + $0x21] sm:$0x1] 0.0
      %1437 = vst [vmem:[#allocation4 + $0x1] sm:$0xff] %v1417
      %1438 = vst [vmem:[#allocation4 + $0x9] sm:$0xff] %v1418
      %1439 = vst [vmem:[#allocation4 + $0x11] sm:$0xff] %v1419
      %1440 = vst [vmem:[#allocation4 + $0x19] sm:$0xff] %v1420
      %v1441 = vld [vmem:[#allocation3] sm:$0xff]
      %v1442 = vld [vmem:[#allocation3 + $0x8] sm:$0xff]
      %v1443 = vld [vmem:[#allocation3 + $0x10] sm:$0xff]
      %v1444 = vld [vmem:[#allocation3 + $0x18] sm:$0xff]
      %v1445 = vpack.c.bf16 %v1442, %v1441
      %v1446 = vpack.c.bf16 %v1444, %v1443
      %v1447 = vld [vmem:[%s7] sm:$0xff]
      %v1448 = vld [vmem:[%s7 + $0x8] sm:$0xff]
      %v1449 = vld [vmem:[%s7 + $0x10] sm:$0xff]
      %v1450 = vld [vmem:[%s7 + $0x18] sm:$0xff]
      %v1451 = vld [vmem:[%s7 + $0x20] sm:$0xff]
      %v1452 = vld [vmem:[%s7 + $0x28] sm:$0xff]
      %v1453 = vld [vmem:[%s7 + $0x30] sm:$0xff]
      %v1454 = vld [vmem:[%s7 + $0x38] sm:$0xff]
      %v1455 = vld [vmem:[%s7 + $0x40] sm:$0xff]
      %v1456 = vld [vmem:[%s7 + $0x48] sm:$0xff]
      %v1457 = vld [vmem:[%s7 + $0x50] sm:$0xff]
      %v1458 = vld [vmem:[%s7 + $0x58] sm:$0xff]
      %v1459 = vld [vmem:[%s7 + $0x60] sm:$0xff]
      %v1460 = vld [vmem:[%s7 + $0x68] sm:$0xff]
      %v1461 = vld [vmem:[%s7 + $0x70] sm:$0xff]
      %v1462 = vld [vmem:[%s7 + $0x78] sm:$0xff]
      %v1463 = vld [vmem:[#allocation3 + $0x1] sm:$0xff]
      %v1464 = vld [vmem:[#allocation3 + $0x9] sm:$0xff]
      %v1465 = vld [vmem:[#allocation3 + $0x11] sm:$0xff]
      %v1466 = vld [vmem:[#allocation3 + $0x19] sm:$0xff]
      %v1467 = vpack.c.bf16 %v1464, %v1463
      %v1468 = vpack.c.bf16 %v1466, %v1465
      %s1469 = scalar_lea.vmem %s7, 128
      %v1470 = vld [vmem:[%s1469] sm:$0xff]
      %v1471 = vld [vmem:[%s1469 + $0x8] sm:$0xff]
      %v1472 = vld [vmem:[%s1469 + $0x10] sm:$0xff]
      %v1473 = vld [vmem:[%s1469 + $0x18] sm:$0xff]
      %v1474 = vld [vmem:[%s1469 + $0x20] sm:$0xff]
      %v1475 = vld [vmem:[%s1469 + $0x28] sm:$0xff]
      %v1476 = vld [vmem:[%s1469 + $0x30] sm:$0xff]
      %v1477 = vld [vmem:[%s1469 + $0x38] sm:$0xff]
      %v1478 = vld [vmem:[%s1469 + $0x40] sm:$0xff]
      %v1479 = vld [vmem:[%s1469 + $0x48] sm:$0xff]
      %v1480 = vld [vmem:[%s1469 + $0x50] sm:$0xff]
      %v1481 = vld [vmem:[%s1469 + $0x58] sm:$0xff]
      %v1482 = vld [vmem:[%s1469 + $0x60] sm:$0xff]
      %v1483 = vld [vmem:[%s1469 + $0x68] sm:$0xff]
      %v1484 = vld [vmem:[%s1469 + $0x70] sm:$0xff]
      %v1485 = vld [vmem:[%s1469 + $0x78] sm:$0xff]
      %v1502 = vunpack.c.l.b16 %v1470
      %v1503 = vunpack.c.h.b16 %v1470
      %v1504 = vunpack.c.l.b16 %v1471
      %v1505 = vunpack.c.h.b16 %v1471
      %v1506 = vunpack.c.l.b16 %v1472
      %v1507 = vunpack.c.h.b16 %v1472
      %v1508 = vunpack.c.l.b16 %v1473
      %v1509 = vunpack.c.h.b16 %v1473
      %v1510 = vunpack.c.l.b16 %v1474
      %v1511 = vunpack.c.h.b16 %v1474
      %v1512 = vunpack.c.l.b16 %v1475
      %v1513 = vunpack.c.h.b16 %v1475
      %v1514 = vunpack.c.l.b16 %v1476
      %v1515 = vunpack.c.h.b16 %v1476
      %v1516 = vunpack.c.l.b16 %v1477
      %v1517 = vunpack.c.h.b16 %v1477
      %v1518 = vunpack.c.l.b16 %v1478
      %v1519 = vunpack.c.h.b16 %v1478
      %v1520 = vunpack.c.l.b16 %v1479
      %v1521 = vunpack.c.h.b16 %v1479
      %v1522 = vunpack.c.l.b16 %v1480
      %v1523 = vunpack.c.h.b16 %v1480
      %v1524 = vunpack.c.l.b16 %v1481
      %v1525 = vunpack.c.h.b16 %v1481
      %v1526 = vunpack.c.l.b16 %v1482
      %v1527 = vunpack.c.h.b16 %v1482
      %v1528 = vunpack.c.l.b16 %v1483
      %v1529 = vunpack.c.h.b16 %v1483
      %v1530 = vunpack.c.l.b16 %v1484
      %v1531 = vunpack.c.h.b16 %v1484
      %v1532 = vunpack.c.l.b16 %v1485
      %v1533 = vunpack.c.h.b16 %v1485
      %v1534 = vpack.c.b16 %v1504, %v1502
      %v1535 = vpack.c.b16 %v1505, %v1503
      %v1536 = vpack.c.b16 %v1508, %v1506
      %v1537 = vpack.c.b16 %v1509, %v1507
      %v1538 = vpack.c.b16 %v1512, %v1510
      %v1539 = vpack.c.b16 %v1513, %v1511
      %v1540 = vpack.c.b16 %v1516, %v1514
      %v1541 = vpack.c.b16 %v1517, %v1515
      %v1542 = vpack.c.b16 %v1520, %v1518
      %v1543 = vpack.c.b16 %v1521, %v1519
      %v1544 = vpack.c.b16 %v1524, %v1522
      %v1545 = vpack.c.b16 %v1525, %v1523
      %v1546 = vpack.c.b16 %v1528, %v1526
      %v1547 = vpack.c.b16 %v1529, %v1527
      %v1548 = vpack.c.b16 %v1532, %v1530
      %v1549 = vpack.c.b16 %v1533, %v1531
      %1566 = vmatprep.subr.bf16.mxu0 %v1535
      %1567 = vmatpush1.bf16.msra.mxu0 %v1534
      %1568 = vmatprep.subr.bf16.mxu0 %v1537
      %1569 = vmatpush1.bf16.msra.mxu0 %v1536
      %1570 = vmatprep.subr.bf16.mxu0 %v1539
      %1571 = vmatpush1.bf16.msra.mxu0 %v1538
      %1572 = vmatprep.subr.bf16.mxu0 %v1541
      %1573 = vmatpush1.bf16.msra.mxu0 %v1540
      %1574 = vmatprep.subr.bf16.mxu0 %v1543
      %1575 = vmatpush1.bf16.msra.mxu0 %v1542
      %1576 = vmatprep.subr.bf16.mxu0 %v1545
      %1577 = vmatpush1.bf16.msra.mxu0 %v1544
      %1578 = vmatprep.subr.bf16.mxu0 %v1547
      %1579 = vmatpush1.bf16.msra.mxu0 %v1546
      %1580 = vmatprep.subr.bf16.mxu0 %v1549
      %1581 = vmatpush1.bf16.msra.mxu0 %v1548
      %1582 = vmatprep.subr.bf16.mxu0 0
      %1583 = vmatpush1.bf16.msra.mxu0 0
      %1584 = vmatprep.subr.bf16.mxu0 0
      %1585 = vmatpush1.bf16.msra.mxu0 0
      %1586 = vmatprep.subr.bf16.mxu0 0
      %1587 = vmatpush1.bf16.msra.mxu0 0
      %1588 = vmatprep.subr.bf16.mxu0 0
      %1589 = vmatpush1.bf16.msra.mxu0 0
      %1590 = vmatprep.subr.bf16.mxu0 0
      %1591 = vmatpush1.bf16.msra.mxu0 0
      %1592 = vmatprep.subr.bf16.mxu0 0
      %1593 = vmatpush1.bf16.msra.mxu0 0
      %1594 = vmatprep.subr.bf16.mxu0 0
      %1595 = vmatpush1.bf16.msra.mxu0 0
      %1596 = vmatprep.subr.bf16.mxu0 0
      %1597 = vmatpush1.bf16.msra.mxu0 0
      %1598 = vmatprep.mubr.bf16.mxu0 0
      %1599 = vmatmul.mubr.bf16.gmra.mrb[0].mxu0 %v1467
      %v1600 = vpop.f32.mrb[0].mxu0
      %v1601 = vadd.f32 0.0, %v1600
      %v1602 = vpop.f32.mrb[0].mxu0
      %v1603 = vadd.f32 0.0, %v1602
      %v1604 = vpop.f32.mrb[0].mxu0
      %v1605 = vadd.f32 0.0, %v1604
      %v1606 = vpop.f32.mrb[0].mxu0
      %v1607 = vadd.f32 0.0, %v1606
      %1608 = vmatprep.mubr.bf16.mxu0 0
      %1609 = vmatmul.mubr.bf16.gmra.mrb[0].mxu0 %v1468
      %v1610 = vpop.f32.mrb[0].mxu0
      %v1611 = vadd.f32 0.0, %v1610
      %v1612 = vpop.f32.mrb[0].mxu0
      %v1613 = vadd.f32 0.0, %v1612
      %v1614 = vpop.f32.mrb[0].mxu0
      %v1615 = vadd.f32 0.0, %v1614
      %v1616 = vpop.f32.mrb[0].mxu0
      %v1617 = vadd.f32 0.0, %v1616
      %1618 = vdwg.mxu0
      %v1635 = vunpack.c.l.b16 %v1447
      %v1636 = vunpack.c.h.b16 %v1447
      %v1637 = vunpack.c.l.b16 %v1448
      %v1638 = vunpack.c.h.b16 %v1448
      %v1639 = vunpack.c.l.b16 %v1449
      %v1640 = vunpack.c.h.b16 %v1449
      %v1641 = vunpack.c.l.b16 %v1450
      %v1642 = vunpack.c.h.b16 %v1450
      %v1643 = vunpack.c.l.b16 %v1451
      %v1644 = vunpack.c.h.b16 %v1451
      %v1645 = vunpack.c.l.b16 %v1452
      %v1646 = vunpack.c.h.b16 %v1452
      %v1647 = vunpack.c.l.b16 %v1453
      %v1648 = vunpack.c.h.b16 %v1453
      %v1649 = vunpack.c.l.b16 %v1454
      %v1650 = vunpack.c.h.b16 %v1454
      %v1651 = vunpack.c.l.b16 %v1455
      %v1652 = vunpack.c.h.b16 %v1455
      %v1653 = vunpack.c.l.b16 %v1456
      %v1654 = vunpack.c.h.b16 %v1456
      %v1655 = vunpack.c.l.b16 %v1457
      %v1656 = vunpack.c.h.b16 %v1457
      %v1657 = vunpack.c.l.b16 %v1458
      %v1658 = vunpack.c.h.b16 %v1458
      %v1659 = vunpack.c.l.b16 %v1459
      %v1660 = vunpack.c.h.b16 %v1459
      %v1661 = vunpack.c.l.b16 %v1460
      %v1662 = vunpack.c.h.b16 %v1460
      %v1663 = vunpack.c.l.b16 %v1461
      %v1664 = vunpack.c.h.b16 %v1461
      %v1665 = vunpack.c.l.b16 %v1462
      %v1666 = vunpack.c.h.b16 %v1462
      %v1667 = vpack.c.b16 %v1637, %v1635
      %v1668 = vpack.c.b16 %v1638, %v1636
      %v1669 = vpack.c.b16 %v1641, %v1639
      %v1670 = vpack.c.b16 %v1642, %v1640
      %v1671 = vpack.c.b16 %v1645, %v1643
      %v1672 = vpack.c.b16 %v1646, %v1644
      %v1673 = vpack.c.b16 %v1649, %v1647
      %v1674 = vpack.c.b16 %v1650, %v1648
      %v1675 = vpack.c.b16 %v1653, %v1651
      %v1676 = vpack.c.b16 %v1654, %v1652
      %v1677 = vpack.c.b16 %v1657, %v1655
      %v1678 = vpack.c.b16 %v1658, %v1656
      %v1679 = vpack.c.b16 %v1661, %v1659
      %v1680 = vpack.c.b16 %v1662, %v1660
      %v1681 = vpack.c.b16 %v1665, %v1663
      %v1682 = vpack.c.b16 %v1666, %v1664
      %1699 = vmatprep.subr.bf16.mxu0 %v1668
      %1700 = vmatpush1.bf16.msra.mxu0 %v1667
      %1701 = vmatprep.subr.bf16.mxu0 %v1670
      %1702 = vmatpush1.bf16.msra.mxu0 %v1669
      %1703 = vmatprep.subr.bf16.mxu0 %v1672
      %1704 = vmatpush1.bf16.msra.mxu0 %v1671
      %1705 = vmatprep.subr.bf16.mxu0 %v1674
      %1706 = vmatpush1.bf16.msra.mxu0 %v1673
      %1707 = vmatprep.subr.bf16.mxu0 %v1676
      %1708 = vmatpush1.bf16.msra.mxu0 %v1675
      %1709 = vmatprep.subr.bf16.mxu0 %v1678
      %1710 = vmatpush1.bf16.msra.mxu0 %v1677
      %1711 = vmatprep.subr.bf16.mxu0 %v1680
      %1712 = vmatpush1.bf16.msra.mxu0 %v1679
      %1713 = vmatprep.subr.bf16.mxu0 %v1682
      %1714 = vmatpush1.bf16.msra.mxu0 %v1681
      %1715 = vmatprep.subr.bf16.mxu0 0
      %1716 = vmatpush1.bf16.msra.mxu0 0
      %1717 = vmatprep.subr.bf16.mxu0 0
      %1718 = vmatpush1.bf16.msra.mxu0 0
      %1719 = vmatprep.subr.bf16.mxu0 0
      %1720 = vmatpush1.bf16.msra.mxu0 0
      %1721 = vmatprep.subr.bf16.mxu0 0
      %1722 = vmatpush1.bf16.msra.mxu0 0
      %1723 = vmatprep.subr.bf16.mxu0 0
      %1724 = vmatpush1.bf16.msra.mxu0 0
      %1725 = vmatprep.subr.bf16.mxu0 0
      %1726 = vmatpush1.bf16.msra.mxu0 0
      %1727 = vmatprep.subr.bf16.mxu0 0
      %1728 = vmatpush1.bf16.msra.mxu0 0
      %1729 = vmatprep.subr.bf16.mxu0 0
      %1730 = vmatpush1.bf16.msra.mxu0 0
      %1731 = vmatprep.mubr.bf16.mxu0 0
      %1732 = vmatmul.mubr.bf16.gmra.mrb[0].mxu0 %v1445
      %v1733 = vpop.f32.mrb[0].mxu0
      %v1734 = vadd.f32 %v1601, %v1733
      %v1735 = vpop.f32.mrb[0].mxu0
      %v1736 = vadd.f32 %v1603, %v1735
      %v1737 = vpop.f32.mrb[0].mxu0
      %v1738 = vadd.f32 %v1605, %v1737
      %v1739 = vpop.f32.mrb[0].mxu0
      %v1740 = vadd.f32 %v1607, %v1739
      %1741 = vmatprep.mubr.bf16.mxu0 0
      %1742 = vmatmul.mubr.bf16.gmra.mrb[0].mxu0 %v1446
      %v1743 = vpop.f32.mrb[0].mxu0
      %v1744 = vadd.f32 %v1611, %v1743
      %v1745 = vpop.f32.mrb[0].mxu0
      %v1746 = vadd.f32 %v1613, %v1745
      %v1747 = vpop.f32.mrb[0].mxu0
      %v1748 = vadd.f32 %v1615, %v1747
      %v1749 = vpop.f32.mrb[0].mxu0
      %v1750 = vadd.f32 %v1617, %v1749
      %1751 = vdwg.mxu0
      %v1752 = vld [vmem:[#allocation3 + $0x2] sm:$0xff]
      %v1753 = vld [vmem:[#allocation3 + $0xa] sm:$0xff]
      %v1754 = vld [vmem:[#allocation3 + $0x12] sm:$0xff]
      %v1755 = vld [vmem:[#allocation3 + $0x1a] sm:$0xff]
      %v1756 = vpack.c.bf16 %v1753, %v1752
      %v1757 = vpack.c.bf16 %v1755, %v1754
      %s1758 = scalar_lea.vmem %s7, 256
      %v1759 = vld [vmem:[%s1758] sm:$0xff]
      %v1760 = vld [vmem:[%s1758 + $0x8] sm:$0xff]
      %v1761 = vld [vmem:[%s1758 + $0x10] sm:$0xff]
      %v1762 = vld [vmem:[%s1758 + $0x18] sm:$0xff]
      %v1763 = vld [vmem:[%s1758 + $0x20] sm:$0xff]
      %v1764 = vld [vmem:[%s1758 + $0x28] sm:$0xff]
      %v1765 = vld [vmem:[%s1758 + $0x30] sm:$0xff]
      %v1766 = vld [vmem:[%s1758 + $0x38] sm:$0xff]
      %v1767 = vld [vmem:[%s1758 + $0x40] sm:$0xff]
      %v1768 = vld [vmem:[%s1758 + $0x48] sm:$0xff]
      %v1769 = vld [vmem:[%s1758 + $0x50] sm:$0xff]
      %v1770 = vld [vmem:[%s1758 + $0x58] sm:$0xff]
      %v1771 = vld [vmem:[%s1758 + $0x60] sm:$0xff]
      %v1772 = vld [vmem:[%s1758 + $0x68] sm:$0xff]
      %v1773 = vld [vmem:[%s1758 + $0x70] sm:$0xff]
      %v1774 = vld [vmem:[%s1758 + $0x78] sm:$0xff]
      %v1791 = vunpack.c.l.b16 %v1759
      %v1792 = vunpack.c.h.b16 %v1759
      %v1793 = vunpack.c.l.b16 %v1760
      %v1794 = vunpack.c.h.b16 %v1760
      %v1795 = vunpack.c.l.b16 %v1761
      %v1796 = vunpack.c.h.b16 %v1761
      %v1797 = vunpack.c.l.b16 %v1762
      %v1798 = vunpack.c.h.b16 %v1762
      %v1799 = vunpack.c.l.b16 %v1763
      %v1800 = vunpack.c.h.b16 %v1763
      %v1801 = vunpack.c.l.b16 %v1764
      %v1802 = vunpack.c.h.b16 %v1764
      %v1803 = vunpack.c.l.b16 %v1765
      %v1804 = vunpack.c.h.b16 %v1765
      %v1805 = vunpack.c.l.b16 %v1766
      %v1806 = vunpack.c.h.b16 %v1766
      %v1807 = vunpack.c.l.b16 %v1767
      %v1808 = vunpack.c.h.b16 %v1767
      %v1809 = vunpack.c.l.b16 %v1768
      %v1810 = vunpack.c.h.b16 %v1768
      %v1811 = vunpack.c.l.b16 %v1769
      %v1812 = vunpack.c.h.b16 %v1769
      %v1813 = vunpack.c.l.b16 %v1770
      %v1814 = vunpack.c.h.b16 %v1770
      %v1815 = vunpack.c.l.b16 %v1771
      %v1816 = vunpack.c.h.b16 %v1771
      %v1817 = vunpack.c.l.b16 %v1772
      %v1818 = vunpack.c.h.b16 %v1772
      %v1819 = vunpack.c.l.b16 %v1773
      %v1820 = vunpack.c.h.b16 %v1773
      %v1821 = vunpack.c.l.b16 %v1774
      %v1822 = vunpack.c.h.b16 %v1774
      %v1823 = vpack.c.b16 %v1793, %v1791
      %v1824 = vpack.c.b16 %v1794, %v1792
      %v1825 = vpack.c.b16 %v1797, %v1795
      %v1826 = vpack.c.b16 %v1798, %v1796
      %v1827 = vpack.c.b16 %v1801, %v1799
      %v1828 = vpack.c.b16 %v1802, %v1800
      %v1829 = vpack.c.b16 %v1805, %v1803
      %v1830 = vpack.c.b16 %v1806, %v1804
      %v1831 = vpack.c.b16 %v1809, %v1807
      %v1832 = vpack.c.b16 %v1810, %v1808
      %v1833 = vpack.c.b16 %v1813, %v1811
      %v1834 = vpack.c.b16 %v1814, %v1812
      %v1835 = vpack.c.b16 %v1817, %v1815
      %v1836 = vpack.c.b16 %v1818, %v1816
      %v1837 = vpack.c.b16 %v1821, %v1819
      %v1838 = vpack.c.b16 %v1822, %v1820
      %1855 = vmatprep.subr.bf16.mxu0 %v1824
      %1856 = vmatpush1.bf16.msra.mxu0 %v1823
      %1857 = vmatprep.subr.bf16.mxu0 %v1826
      %1858 = vmatpush1.bf16.msra.mxu0 %v1825
      %1859 = vmatprep.subr.bf16.mxu0 %v1828
      %1860 = vmatpush1.bf16.msra.mxu0 %v1827
      %1861 = vmatprep.subr.bf16.mxu0 %v1830
      %1862 = vmatpush1.bf16.msra.mxu0 %v1829
      %1863 = vmatprep.subr.bf16.mxu0 %v1832
      %1864 = vmatpush1.bf16.msra.mxu0 %v1831
      %1865 = vmatprep.subr.bf16.mxu0 %v1834
      %1866 = vmatpush1.bf16.msra.mxu0 %v1833
      %1867 = vmatprep.subr.bf16.mxu0 %v1836
      %1868 = vmatpush1.bf16.msra.mxu0 %v1835
      %1869 = vmatprep.subr.bf16.mxu0 %v1838
      %1870 = vmatpush1.bf16.msra.mxu0 %v1837
      %1871 = vmatprep.subr.bf16.mxu0 0
      %1872 = vmatpush1.bf16.msra.mxu0 0
      %1873 = vmatprep.subr.bf16.mxu0 0
      %1874 = vmatpush1.bf16.msra.mxu0 0
      %1875 = vmatprep.subr.bf16.mxu0 0
      %1876 = vmatpush1.bf16.msra.mxu0 0
      %1877 = vmatprep.subr.bf16.mxu0 0
      %1878 = vmatpush1.bf16.msra.mxu0 0
      %1879 = vmatprep.subr.bf16.mxu0 0
      %1880 = vmatpush1.bf16.msra.mxu0 0
      %1881 = vmatprep.subr.bf16.mxu0 0
      %1882 = vmatpush1.bf16.msra.mxu0 0
      %1883 = vmatprep.subr.bf16.mxu0 0
      %1884 = vmatpush1.bf16.msra.mxu0 0
      %1885 = vmatprep.subr.bf16.mxu0 0
      %1886 = vmatpush1.bf16.msra.mxu0 0
      %1887 = vmatprep.mubr.bf16.mxu0 0
      %1888 = vmatmul.mubr.bf16.gmra.mrb[0].mxu0 %v1756
      %v1889 = vpop.f32.mrb[0].mxu0
      %v1890 = vadd.f32 0.0, %v1889
      %v1891 = vpop.f32.mrb[0].mxu0
      %v1892 = vadd.f32 0.0, %v1891
      %v1893 = vpop.f32.mrb[0].mxu0
      %v1894 = vadd.f32 0.0, %v1893
      %v1895 = vpop.f32.mrb[0].mxu0
      %v1896 = vadd.f32 0.0, %v1895
      %1897 = vmatprep.mubr.bf16.mxu0 0
      %1898 = vmatmul.mubr.bf16.gmra.mrb[0].mxu0 %v1757
      %v1899 = vpop.f32.mrb[0].mxu0
      %v1900 = vadd.f32 0.0, %v1899
      %v1901 = vpop.f32.mrb[0].mxu0
      %v1902 = vadd.f32 0.0, %v1901
      %v1903 = vpop.f32.mrb[0].mxu0
      %v1904 = vadd.f32 0.0, %v1903
      %v1905 = vpop.f32.mrb[0].mxu0
      %v1906 = vadd.f32 0.0, %v1905
      %1907 = vdwg.mxu0
      %v1908 = vadd.f32 %v1734, %v1890
      %v1909 = vadd.f32 %v1736, %v1892
      %v1910 = vadd.f32 %v1738, %v1894
      %v1911 = vadd.f32 %v1740, %v1896
      %v1912 = vadd.f32 %v1744, %v1900
      %v1913 = vadd.f32 %v1746, %v1902
      %v1914 = vadd.f32 %v1748, %v1904
      %v1915 = vadd.f32 %v1750, %v1906
      %v1916 = vld [vmem:[#allocation4] sm:$0xff]
      %v1917 = vld [vmem:[#allocation4 + $0x8] sm:$0xff]
      %v1918 = vld [vmem:[#allocation4 + $0x10] sm:$0xff]
      %v1919 = vld [vmem:[#allocation4 + $0x18] sm:$0xff]
      %v1920 = vpack.c.bf16 %v1917, %v1916
      %v1921 = vpack.c.bf16 %v1919, %v1918
      %v1922 = vld [vmem:[%s8] sm:$0xff]
      %v1923 = vld [vmem:[%s8 + $0x8] sm:$0xff]
      %v1924 = vld [vmem:[%s8 + $0x10] sm:$0xff]
      %v1925 = vld [vmem:[%s8 + $0x18] sm:$0xff]
      %v1926 = vld [vmem:[%s8 + $0x20] sm:$0xff]
      %v1927 = vld [vmem:[%s8 + $0x28] sm:$0xff]
      %v1928 = vld [vmem:[%s8 + $0x30] sm:$0xff]
      %v1929 = vld [vmem:[%s8 + $0x38] sm:$0xff]
      %v1930 = vld [vmem:[%s8 + $0x40] sm:$0xff]
      %v1931 = vld [vmem:[%s8 + $0x48] sm:$0xff]
      %v1932 = vld [vmem:[%s8 + $0x50] sm:$0xff]
      %v1933 = vld [vmem:[%s8 + $0x58] sm:$0xff]
      %v1934 = vld [vmem:[%s8 + $0x60] sm:$0xff]
      %v1935 = vld [vmem:[%s8 + $0x68] sm:$0xff]
      %v1936 = vld [vmem:[%s8 + $0x70] sm:$0xff]
      %v1937 = vld [vmem:[%s8 + $0x78] sm:$0xff]
      %v1938 = vld [vmem:[#allocation4 + $0x1] sm:$0xff]
      %v1939 = vld [vmem:[#allocation4 + $0x9] sm:$0xff]
      %v1940 = vld [vmem:[#allocation4 + $0x11] sm:$0xff]
      %v1941 = vld [vmem:[#allocation4 + $0x19] sm:$0xff]
      %v1942 = vpack.c.bf16 %v1939, %v1938
      %v1943 = vpack.c.bf16 %v1941, %v1940
      %s1944 = scalar_lea.vmem %s8, 128
      %v1945 = vld [vmem:[%s1944] sm:$0xff]
      %v1946 = vld [vmem:[%s1944 + $0x8] sm:$0xff]
      %v1947 = vld [vmem:[%s1944 + $0x10] sm:$0xff]
      %v1948 = vld [vmem:[%s1944 + $0x18] sm:$0xff]
      %v1949 = vld [vmem:[%s1944 + $0x20] sm:$0xff]
      %v1950 = vld [vmem:[%s1944 + $0x28] sm:$0xff]
      %v1951 = vld [vmem:[%s1944 + $0x30] sm:$0xff]
      %v1952 = vld [vmem:[%s1944 + $0x38] sm:$0xff]
      %v1953 = vld [vmem:[%s1944 + $0x40] sm:$0xff]
      %v1954 = vld [vmem:[%s1944 + $0x48] sm:$0xff]
      %v1955 = vld [vmem:[%s1944 + $0x50] sm:$0xff]
      %v1956 = vld [vmem:[%s1944 + $0x58] sm:$0xff]
      %v1957 = vld [vmem:[%s1944 + $0x60] sm:$0xff]
      %v1958 = vld [vmem:[%s1944 + $0x68] sm:$0xff]
      %v1959 = vld [vmem:[%s1944 + $0x70] sm:$0xff]
      %v1960 = vld [vmem:[%s1944 + $0x78] sm:$0xff]
      %v1977 = vunpack.c.l.b16 %v1945
      %v1978 = vunpack.c.h.b16 %v1945
      %v1979 = vunpack.c.l.b16 %v1946
      %v1980 = vunpack.c.h.b16 %v1946
      %v1981 = vunpack.c.l.b16 %v1947
      %v1982 = vunpack.c.h.b16 %v1947
      %v1983 = vunpack.c.l.b16 %v1948
      %v1984 = vunpack.c.h.b16 %v1948
      %v1985 = vunpack.c.l.b16 %v1949
      %v1986 = vunpack.c.h.b16 %v1949
      %v1987 = vunpack.c.l.b16 %v1950
      %v1988 = vunpack.c.h.b16 %v1950
      %v1989 = vunpack.c.l.b16 %v1951
      %v1990 = vunpack.c.h.b16 %v1951
      %v1991 = vunpack.c.l.b16 %v1952
      %v1992 = vunpack.c.h.b16 %v1952
      %v1993 = vunpack.c.l.b16 %v1953
      %v1994 = vunpack.c.h.b16 %v1953
      %v1995 = vunpack.c.l.b16 %v1954
      %v1996 = vunpack.c.h.b16 %v1954
      %v1997 = vunpack.c.l.b16 %v1955
      %v1998 = vunpack.c.h.b16 %v1955
      %v1999 = vunpack.c.l.b16 %v1956
      %v2000 = vunpack.c.h.b16 %v1956
      %v2001 = vunpack.c.l.b16 %v1957
      %v2002 = vunpack.c.h.b16 %v1957
      %v2003 = vunpack.c.l.b16 %v1958
      %v2004 = vunpack.c.h.b16 %v1958
      %v2005 = vunpack.c.l.b16 %v1959
      %v2006 = vunpack.c.h.b16 %v1959
      %v2007 = vunpack.c.l.b16 %v1960
      %v2008 = vunpack.c.h.b16 %v1960
      %v2009 = vpack.c.b16 %v1979, %v1977
      %v2010 = vpack.c.b16 %v1980, %v1978
      %v2011 = vpack.c.b16 %v1983, %v1981
      %v2012 = vpack.c.b16 %v1984, %v1982
      %v2013 = vpack.c.b16 %v1987, %v1985
      %v2014 = vpack.c.b16 %v1988, %v1986
      %v2015 = vpack.c.b16 %v1991, %v1989
      %v2016 = vpack.c.b16 %v1992, %v1990
      %v2017 = vpack.c.b16 %v1995, %v1993
      %v2018 = vpack.c.b16 %v1996, %v1994
      %v2019 = vpack.c.b16 %v1999, %v1997
      %v2020 = vpack.c.b16 %v2000, %v1998
      %v2021 = vpack.c.b16 %v2003, %v2001
      %v2022 = vpack.c.b16 %v2004, %v2002
      %v2023 = vpack.c.b16 %v2007, %v2005
      %v2024 = vpack.c.b16 %v2008, %v2006
      %2041 = vmatprep.subr.bf16.mxu0 %v2010
      %2042 = vmatpush1.bf16.msra.mxu0 %v2009
      %2043 = vmatprep.subr.bf16.mxu0 %v2012
      %2044 = vmatpush1.bf16.msra.mxu0 %v2011
      %2045 = vmatprep.subr.bf16.mxu0 %v2014
      %2046 = vmatpush1.bf16.msra.mxu0 %v2013
      %2047 = vmatprep.subr.bf16.mxu0 %v2016
      %2048 = vmatpush1.bf16.msra.mxu0 %v2015
      %2049 = vmatprep.subr.bf16.mxu0 %v2018
      %2050 = vmatpush1.bf16.msra.mxu0 %v2017
      %2051 = vmatprep.subr.bf16.mxu0 %v2020
      %2052 = vmatpush1.bf16.msra.mxu0 %v2019
      %2053 = vmatprep.subr.bf16.mxu0 %v2022
      %2054 = vmatpush1.bf16.msra.mxu0 %v2021
      %2055 = vmatprep.subr.bf16.mxu0 %v2024
      %2056 = vmatpush1.bf16.msra.mxu0 %v2023
      %2057 = vmatprep.subr.bf16.mxu0 0
      %2058 = vmatpush1.bf16.msra.mxu0 0
      %2059 = vmatprep.subr.bf16.mxu0 0
      %2060 = vmatpush1.bf16.msra.mxu0 0
      %2061 = vmatprep.subr.bf16.mxu0 0
      %2062 = vmatpush1.bf16.msra.mxu0 0
      %2063 = vmatprep.subr.bf16.mxu0 0
      %2064 = vmatpush1.bf16.msra.mxu0 0
      %2065 = vmatprep.subr.bf16.mxu0 0
      %2066 = vmatpush1.bf16.msra.mxu0 0
      %2067 = vmatprep.subr.bf16.mxu0 0
      %2068 = vmatpush1.bf16.msra.mxu0 0
      %2069 = vmatprep.subr.bf16.mxu0 0
      %2070 = vmatpush1.bf16.msra.mxu0 0
      %2071 = vmatprep.subr.bf16.mxu0 0
      %2072 = vmatpush1.bf16.msra.mxu0 0
      %2073 = vmatprep.mubr.bf16.mxu0 0
      %2074 = vmatmul.mubr.bf16.gmra.mrb[0].mxu0 %v1942
      %v2075 = vpop.f32.mrb[0].mxu0
      %v2076 = vadd.f32 0.0, %v2075
      %v2077 = vpop.f32.mrb[0].mxu0
      %v2078 = vadd.f32 0.0, %v2077
      %v2079 = vpop.f32.mrb[0].mxu0
      %v2080 = vadd.f32 0.0, %v2079
      %v2081 = vpop.f32.mrb[0].mxu0
      %v2082 = vadd.f32 0.0, %v2081
      %2083 = vmatprep.mubr.bf16.mxu0 0
      %2084 = vmatmul.mubr.bf16.gmra.mrb[0].mxu0 %v1943
      %v2085 = vpop.f32.mrb[0].mxu0
      %v2086 = vadd.f32 0.0, %v2085
      %v2087 = vpop.f32.mrb[0].mxu0
      %v2088 = vadd.f32 0.0, %v2087
      %v2089 = vpop.f32.mrb[0].mxu0
      %v2090 = vadd.f32 0.0, %v2089
      %v2091 = vpop.f32.mrb[0].mxu0
      %v2092 = vadd.f32 0.0, %v2091
      %2093 = vdwg.mxu0
      %v2110 = vunpack.c.l.b16 %v1922
      %v2111 = vunpack.c.h.b16 %v1922
      %v2112 = vunpack.c.l.b16 %v1923
      %v2113 = vunpack.c.h.b16 %v1923
      %v2114 = vunpack.c.l.b16 %v1924
      %v2115 = vunpack.c.h.b16 %v1924
      %v2116 = vunpack.c.l.b16 %v1925
      %v2117 = vunpack.c.h.b16 %v1925
      %v2118 = vunpack.c.l.b16 %v1926
      %v2119 = vunpack.c.h.b16 %v1926
      %v2120 = vunpack.c.l.b16 %v1927
      %v2121 = vunpack.c.h.b16 %v1927
      %v2122 = vunpack.c.l.b16 %v1928
      %v2123 = vunpack.c.h.b16 %v1928
      %v2124 = vunpack.c.l.b16 %v1929
      %v2125 = vunpack.c.h.b16 %v1929
      %v2126 = vunpack.c.l.b16 %v1930
      %v2127 = vunpack.c.h.b16 %v1930
      %v2128 = vunpack.c.l.b16 %v1931
      %v2129 = vunpack.c.h.b16 %v1931
      %v2130 = vunpack.c.l.b16 %v1932
      %v2131 = vunpack.c.h.b16 %v1932
      %v2132 = vunpack.c.l.b16 %v1933
      %v2133 = vunpack.c.h.b16 %v1933
      %v2134 = vunpack.c.l.b16 %v1934
      %v2135 = vunpack.c.h.b16 %v1934
      %v2136 = vunpack.c.l.b16 %v1935
      %v2137 = vunpack.c.h.b16 %v1935
      %v2138 = vunpack.c.l.b16 %v1936
      %v2139 = vunpack.c.h.b16 %v1936
      %v2140 = vunpack.c.l.b16 %v1937
      %v2141 = vunpack.c.h.b16 %v1937
      %v2142 = vpack.c.b16 %v2112, %v2110
      %v2143 = vpack.c.b16 %v2113, %v2111
      %v2144 = vpack.c.b16 %v2116, %v2114
      %v2145 = vpack.c.b16 %v2117, %v2115
      %v2146 = vpack.c.b16 %v2120, %v2118
      %v2147 = vpack.c.b16 %v2121, %v2119
      %v2148 = vpack.c.b16 %v2124, %v2122
      %v2149 = vpack.c.b16 %v2125, %v2123
      %v2150 = vpack.c.b16 %v2128, %v2126
      %v2151 = vpack.c.b16 %v2129, %v2127
      %v2152 = vpack.c.b16 %v2132, %v2130
      %v2153 = vpack.c.b16 %v2133, %v2131
      %v2154 = vpack.c.b16 %v2136, %v2134
      %v2155 = vpack.c.b16 %v2137, %v2135
      %v2156 = vpack.c.b16 %v2140, %v2138
      %v2157 = vpack.c.b16 %v2141, %v2139
      %2174 = vmatprep.subr.bf16.mxu0 %v2143
      %2175 = vmatpush1.bf16.msra.mxu0 %v2142
      %2176 = vmatprep.subr.bf16.mxu0 %v2145
      %2177 = vmatpush1.bf16.msra.mxu0 %v2144
      %2178 = vmatprep.subr.bf16.mxu0 %v2147
      %2179 = vmatpush1.bf16.msra.mxu0 %v2146
      %2180 = vmatprep.subr.bf16.mxu0 %v2149
      %2181 = vmatpush1.bf16.msra.mxu0 %v2148
      %2182 = vmatprep.subr.bf16.mxu0 %v2151
      %2183 = vmatpush1.bf16.msra.mxu0 %v2150
      %2184 = vmatprep.subr.bf16.mxu0 %v2153
      %2185 = vmatpush1.bf16.msra.mxu0 %v2152
      %2186 = vmatprep.subr.bf16.mxu0 %v2155
      %2187 = vmatpush1.bf16.msra.mxu0 %v2154
      %2188 = vmatprep.subr.bf16.mxu0 %v2157
      %2189 = vmatpush1.bf16.msra.mxu0 %v2156
      %2190 = vmatprep.subr.bf16.mxu0 0
      %2191 = vmatpush1.bf16.msra.mxu0 0
      %2192 = vmatprep.subr.bf16.mxu0 0
      %2193 = vmatpush1.bf16.msra.mxu0 0
      %2194 = vmatprep.subr.bf16.mxu0 0
      %2195 = vmatpush1.bf16.msra.mxu0 0
      %2196 = vmatprep.subr.bf16.mxu0 0
      %2197 = vmatpush1.bf16.msra.mxu0 0
      %2198 = vmatprep.subr.bf16.mxu0 0
      %2199 = vmatpush1.bf16.msra.mxu0 0
      %2200 = vmatprep.subr.bf16.mxu0 0
      %2201 = vmatpush1.bf16.msra.mxu0 0
      %2202 = vmatprep.subr.bf16.mxu0 0
      %2203 = vmatpush1.bf16.msra.mxu0 0
      %2204 = vmatprep.subr.bf16.mxu0 0
      %2205 = vmatpush1.bf16.msra.mxu0 0
      %2206 = vmatprep.mubr.bf16.mxu0 0
      %2207 = vmatmul.mubr.bf16.gmra.mrb[0].mxu0 %v1920
      %v2208 = vpop.f32.mrb[0].mxu0
      %v2209 = vadd.f32 %v2076, %v2208
      %v2210 = vpop.f32.mrb[0].mxu0
      %v2211 = vadd.f32 %v2078, %v2210
      %v2212 = vpop.f32.mrb[0].mxu0
      %v2213 = vadd.f32 %v2080, %v2212
      %v2214 = vpop.f32.mrb[0].mxu0
      %v2215 = vadd.f32 %v2082, %v2214
      %2216 = vmatprep.mubr.bf16.mxu0 0
      %2217 = vmatmul.mubr.bf16.gmra.mrb[0].mxu0 %v1921
      %v2218 = vpop.f32.mrb[0].mxu0
      %v2219 = vadd.f32 %v2086, %v2218
      %v2220 = vpop.f32.mrb[0].mxu0
      %v2221 = vadd.f32 %v2088, %v2220
      %v2222 = vpop.f32.mrb[0].mxu0
      %v2223 = vadd.f32 %v2090, %v2222
      %v2224 = vpop.f32.mrb[0].mxu0
      %v2225 = vadd.f32 %v2092, %v2224
      %2226 = vdwg.mxu0
      %v2227 = vld [vmem:[#allocation4 + $0x2] sm:$0xff]
      %v2228 = vld [vmem:[#allocation4 + $0xa] sm:$0xff]
      %v2229 = vld [vmem:[#allocation4 + $0x12] sm:$0xff]
      %v2230 = vld [vmem:[#allocation4 + $0x1a] sm:$0xff]
      %v2231 = vpack.c.bf16 %v2228, %v2227
      %v2232 = vpack.c.bf16 %v2230, %v2229
      %s2233 = scalar_lea.vmem %s8, 256
      %v2234 = vld [vmem:[%s2233] sm:$0xff]
      %v2235 = vld [vmem:[%s2233 + $0x8] sm:$0xff]
      %v2236 = vld [vmem:[%s2233 + $0x10] sm:$0xff]
      %v2237 = vld [vmem:[%s2233 + $0x18] sm:$0xff]
      %v2238 = vld [vmem:[%s2233 + $0x20] sm:$0xff]
      %v2239 = vld [vmem:[%s2233 + $0x28] sm:$0xff]
      %v2240 = vld [vmem:[%s2233 + $0x30] sm:$0xff]
      %v2241 = vld [vmem:[%s2233 + $0x38] sm:$0xff]
      %v2242 = vld [vmem:[%s2233 + $0x40] sm:$0xff]
      %v2243 = vld [vmem:[%s2233 + $0x48] sm:$0xff]
      %v2244 = vld [vmem:[%s2233 + $0x50] sm:$0xff]
      %v2245 = vld [vmem:[%s2233 + $0x58] sm:$0xff]
      %v2246 = vld [vmem:[%s2233 + $0x60] sm:$0xff]
      %v2247 = vld [vmem:[%s2233 + $0x68] sm:$0xff]
      %v2248 = vld [vmem:[%s2233 + $0x70] sm:$0xff]
      %v2249 = vld [vmem:[%s2233 + $0x78] sm:$0xff]
      %v2266 = vunpack.c.l.b16 %v2234
      %v2267 = vunpack.c.h.b16 %v2234
      %v2268 = vunpack.c.l.b16 %v2235
      %v2269 = vunpack.c.h.b16 %v2235
      %v2270 = vunpack.c.l.b16 %v2236
      %v2271 = vunpack.c.h.b16 %v2236
      %v2272 = vunpack.c.l.b16 %v2237
      %v2273 = vunpack.c.h.b16 %v2237
      %v2274 = vunpack.c.l.b16 %v2238
      %v2275 = vunpack.c.h.b16 %v2238
      %v2276 = vunpack.c.l.b16 %v2239
      %v2277 = vunpack.c.h.b16 %v2239
      %v2278 = vunpack.c.l.b16 %v2240
      %v2279 = vunpack.c.h.b16 %v2240
      %v2280 = vunpack.c.l.b16 %v2241
      %v2281 = vunpack.c.h.b16 %v2241
      %v2282 = vunpack.c.l.b16 %v2242
      %v2283 = vunpack.c.h.b16 %v2242
      %v2284 = vunpack.c.l.b16 %v2243
      %v2285 = vunpack.c.h.b16 %v2243
      %v2286 = vunpack.c.l.b16 %v2244
      %v2287 = vunpack.c.h.b16 %v2244
      %v2288 = vunpack.c.l.b16 %v2245
      %v2289 = vunpack.c.h.b16 %v2245
      %v2290 = vunpack.c.l.b16 %v2246
      %v2291 = vunpack.c.h.b16 %v2246
      %v2292 = vunpack.c.l.b16 %v2247
      %v2293 = vunpack.c.h.b16 %v2247
      %v2294 = vunpack.c.l.b16 %v2248
      %v2295 = vunpack.c.h.b16 %v2248
      %v2296 = vunpack.c.l.b16 %v2249
      %v2297 = vunpack.c.h.b16 %v2249
      %v2298 = vpack.c.b16 %v2268, %v2266
      %v2299 = vpack.c.b16 %v2269, %v2267
      %v2300 = vpack.c.b16 %v2272, %v2270
      %v2301 = vpack.c.b16 %v2273, %v2271
      %v2302 = vpack.c.b16 %v2276, %v2274
      %v2303 = vpack.c.b16 %v2277, %v2275
      %v2304 = vpack.c.b16 %v2280, %v2278
      %v2305 = vpack.c.b16 %v2281, %v2279
      %v2306 = vpack.c.b16 %v2284, %v2282
      %v2307 = vpack.c.b16 %v2285, %v2283
      %v2308 = vpack.c.b16 %v2288, %v2286
      %v2309 = vpack.c.b16 %v2289, %v2287
      %v2310 = vpack.c.b16 %v2292, %v2290
      %v2311 = vpack.c.b16 %v2293, %v2291
      %v2312 = vpack.c.b16 %v2296, %v2294
      %v2313 = vpack.c.b16 %v2297, %v2295
      %2330 = vmatprep.subr.bf16.mxu0 %v2299
      %2331 = vmatpush1.bf16.msra.mxu0 %v2298
      %2332 = vmatprep.subr.bf16.mxu0 %v2301
      %2333 = vmatpush1.bf16.msra.mxu0 %v2300
      %2334 = vmatprep.subr.bf16.mxu0 %v2303
      %2335 = vmatpush1.bf16.msra.mxu0 %v2302
      %2336 = vmatprep.subr.bf16.mxu0 %v2305
      %2337 = vmatpush1.bf16.msra.mxu0 %v2304
      %2338 = vmatprep.subr.bf16.mxu0 %v2307
      %2339 = vmatpush1.bf16.msra.mxu0 %v2306
      %2340 = vmatprep.subr.bf16.mxu0 %v2309
      %2341 = vmatpush1.bf16.msra.mxu0 %v2308
      %2342 = vmatprep.subr.bf16.mxu0 %v2311
      %2343 = vmatpush1.bf16.msra.mxu0 %v2310
      %2344 = vmatprep.subr.bf16.mxu0 %v2313
      %2345 = vmatpush1.bf16.msra.mxu0 %v2312
      %2346 = vmatprep.subr.bf16.mxu0 0
      %2347 = vmatpush1.bf16.msra.mxu0 0
      %2348 = vmatprep.subr.bf16.mxu0 0
      %2349 = vmatpush1.bf16.msra.mxu0 0
      %2350 = vmatprep.subr.bf16.mxu0 0
      %2351 = vmatpush1.bf16.msra.mxu0 0
      %2352 = vmatprep.subr.bf16.mxu0 0
      %2353 = vmatpush1.bf16.msra.mxu0 0
      %2354 = vmatprep.subr.bf16.mxu0 0
      %2355 = vmatpush1.bf16.msra.mxu0 0
      %2356 = vmatprep.subr.bf16.mxu0 0
      %2357 = vmatpush1.bf16.msra.mxu0 0
      %2358 = vmatprep.subr.bf16.mxu0 0
      %2359 = vmatpush1.bf16.msra.mxu0 0
      %2360 = vmatprep.subr.bf16.mxu0 0
      %2361 = vmatpush1.bf16.msra.mxu0 0
      %2362 = vmatprep.mubr.bf16.mxu0 0
      %2363 = vmatmul.mubr.bf16.gmra.mrb[0].mxu0 %v2231
      %v2364 = vpop.f32.mrb[0].mxu0
      %v2365 = vadd.f32 0.0, %v2364
      %v2366 = vpop.f32.mrb[0].mxu0
      %v2367 = vadd.f32 0.0, %v2366
      %v2368 = vpop.f32.mrb[0].mxu0
      %v2369 = vadd.f32 0.0, %v2368
      %v2370 = vpop.f32.mrb[0].mxu0
      %v2371 = vadd.f32 0.0, %v2370
      %2372 = vmatprep.mubr.bf16.mxu0 0
      %2373 = vmatmul.mubr.bf16.gmra.mrb[0].mxu0 %v2232
      %v2374 = vpop.f32.mrb[0].mxu0
      %v2375 = vadd.f32 0.0, %v2374
      %v2376 = vpop.f32.mrb[0].mxu0
      %v2377 = vadd.f32 0.0, %v2376
      %v2378 = vpop.f32.mrb[0].mxu0
      %v2379 = vadd.f32 0.0, %v2378
      %v2380 = vpop.f32.mrb[0].mxu0
      %v2381 = vadd.f32 0.0, %v2380
      %2382 = vdwg.mxu0
      %v2383 = vadd.f32 %v2209, %v2365
      %v2384 = vadd.f32 %v2211, %v2367
      %v2385 = vadd.f32 %v2213, %v2369
      %v2386 = vadd.f32 %v2215, %v2371
      %v2387 = vadd.f32 %v2219, %v2375
      %v2388 = vadd.f32 %v2221, %v2377
      %v2389 = vadd.f32 %v2223, %v2379
      %v2390 = vadd.f32 %v2225, %v2381
      %v2391 = vadd.f32 %v1908, %v2383
      %v2392 = vadd.f32 %v1909, %v2384
      %v2393 = vadd.f32 %v1910, %v2385
      %v2394 = vadd.f32 %v1911, %v2386
      %v2395 = vadd.f32 %v1912, %v2387
      %v2396 = vadd.f32 %v1913, %v2388
      %v2397 = vadd.f32 %v1914, %v2389
      %v2398 = vadd.f32 %v1915, %v2390
      %v2399 = vld [vmem:[%s9] sm:$0x3]
      %v2401 = vlaneseq
      %v2402 = vshrl.u32 %v2401, 7
      %v2403 = vsub.s32 0, %v2402
      %v2404 = vrot.slane %v2399, %v2403
      %v2405 = vlaneseq
      %v2406 = vshrl.u32 %v2405, 7
      %v2407 = vsub.s32 1, %v2406
      %v2408 = vrot.slane %v2399, %v2407
      %v2411 = vmul.f32 %v2391, %v2404
      %v2412 = vmul.f32 %v2392, %v2408
      %v2413 = vmul.f32 %v2393, %v2404
      %v2414 = vmul.f32 %v2394, %v2408
      %v2415 = vmul.f32 %v2395, %v2404
      %v2416 = vmul.f32 %v2396, %v2408
      %v2417 = vmul.f32 %v2397, %v2404
      %v2418 = vmul.f32 %v2398, %v2408
      %v2419 = vld [vmem:[%s10] sm:$0x3]
      %v2421 = vlaneseq
      %v2422 = vshrl.u32 %v2421, 7
      %v2423 = vsub.s32 0, %v2422
      %v2424 = vrot.slane %v2419, %v2423
      %v2425 = vlaneseq
      %v2426 = vshrl.u32 %v2425, 7
      %v2427 = vsub.s32 1, %v2426
      %v2428 = vrot.slane %v2419, %v2427
      %v2431 = vadd.f32 %v2411, %v2424
      %v2432 = vadd.f32 %v2412, %v2428
      %v2433 = vadd.f32 %v2413, %v2424
      %v2434 = vadd.f32 %v2414, %v2428
      %v2435 = vadd.f32 %v2415, %v2424
      %v2436 = vadd.f32 %v2416, %v2428
      %v2437 = vadd.f32 %v2417, %v2424
      %v2438 = vadd.f32 %v2418, %v2428
      %v2439 = vmax.f32 %v2431, 0.0
      %v2440 = vmax.f32 %v2432, 0.0
      %v2441 = vmax.f32 %v2433, 0.0
      %v2442 = vmax.f32 %v2434, 0.0
      %v2443 = vmax.f32 %v2435, 0.0
      %v2444 = vmax.f32 %v2436, 0.0
      %v2445 = vmax.f32 %v2437, 0.0
      %v2446 = vmax.f32 %v2438, 0.0
      %2447 = vst.msk [vmem:[#allocation5] ss:$8 sm:$0x3] %vm719, 0.0
      %2448 = vst.msk [vmem:[#allocation5] ss:$8 sm:$0x0] %vm719, 0.0
      %s2449 = scalar_lea.vmem [#allocation5], 65
      %2450 = vst.msk [vmem:[%s2449] ss:$8 sm:$0x3] %vm719, 0.0
      %2451 = vst.msk [vmem:[%s2449] ss:$8 sm:$0x0] %vm719, 0.0
      %v2460 = vrot.slane %v2439, 7
      %v2461 = vrot.slane %v2440, 7
      %v2462 = vrot.slane %v2441, 7
      %v2463 = vsel %vm733, %v2460, %v2462
      %v2464 = vrot.slane %v2442, 7
      %v2465 = vsel %vm733, %v2461, %v2464
      %v2466 = vrot.slane %v2443, 7
      %v2467 = vsel %vm733, %v2462, %v2466
      %v2468 = vrot.slane %v2444, 7
      %v2469 = vsel %vm733, %v2464, %v2468
      %v2470 = vrot.slane %v2445, 7
      %v2471 = vsel %vm733, %v2466, %v2470
      %v2472 = vrot.slane %v2446, 7
      %v2473 = vsel %vm733, %v2468, %v2472
      %2484 = vst [vmem:[#allocation5] sm:$0xfe] %v2460
      %2485 = vst [vmem:[#allocation5 + $0x8] sm:$0xfe] %v2461
      %2486 = vst [vmem:[#allocation5 + $0x10] sm:$0xff] %v2463
      %2487 = vst [vmem:[#allocation5 + $0x18] sm:$0xff] %v2465
      %2488 = vst [vmem:[#allocation5 + $0x20] sm:$0xff] %v2467
      %2489 = vst [vmem:[#allocation5 + $0x28] sm:$0xff] %v2469
      %2490 = vst [vmem:[#allocation5 + $0x30] sm:$0xff] %v2471
      %2491 = vst [vmem:[#allocation5 + $0x38] sm:$0xff] %v2473
      %2492 = vst [vmem:[#allocation5 + $0x40] sm:$0x1] %v2470
      %2493 = vst [vmem:[#allocation5 + $0x48] sm:$0x1] %v2472
      %v2494 = vld [vmem:[#allocation5] sm:$0xff]
      %v2495 = vld [vmem:[#allocation5 + $0x8] sm:$0xff]
      %v2496 = vld [vmem:[#allocation5 + $0x10] sm:$0xff]
      %v2497 = vld [vmem:[#allocation5 + $0x18] sm:$0xff]
      %v2498 = vld [vmem:[#allocation5 + $0x20] sm:$0xff]
      %v2499 = vld [vmem:[#allocation5 + $0x28] sm:$0xff]
      %v2500 = vld [vmem:[#allocation5 + $0x30] sm:$0xff]
      %v2501 = vld [vmem:[#allocation5 + $0x38] sm:$0xff]
      %v2502 = vpack.c.bf16 %v2496, %v2494
      %v2503 = vpack.c.bf16 %v2497, %v2495
      %v2504 = vpack.c.bf16 %v2500, %v2498
      %v2505 = vpack.c.bf16 %v2501, %v2499
      %v2506 = vld [vmem:[%s11] sm:$0xff]
      %v2507 = vld [vmem:[%s11 + $0x8] sm:$0xff]
      %v2508 = vld [vmem:[%s11 + $0x10] sm:$0xff]
      %v2509 = vld [vmem:[%s11 + $0x18] sm:$0xff]
      %v2510 = vld [vmem:[%s11 + $0x20] sm:$0xff]
      %v2511 = vld [vmem:[%s11 + $0x28] sm:$0xff]
      %v2512 = vld [vmem:[%s11 + $0x30] sm:$0xff]
      %v2513 = vld [vmem:[%s11 + $0x38] sm:$0xff]
      %v2514 = vld [vmem:[%s11 + $0x40] sm:$0xff]
      %v2515 = vld [vmem:[%s11 + $0x48] sm:$0xff]
      %v2516 = vld [vmem:[%s11 + $0x50] sm:$0xff]
      %v2517 = vld [vmem:[%s11 + $0x58] sm:$0xff]
      %v2518 = vld [vmem:[%s11 + $0x60] sm:$0xff]
      %v2519 = vld [vmem:[%s11 + $0x68] sm:$0xff]
      %v2520 = vld [vmem:[%s11 + $0x70] sm:$0xff]
      %v2521 = vld [vmem:[%s11 + $0x78] sm:$0xff]
      %v2522 = vld [vmem:[%s11 + $0x80] sm:$0xff]
      %v2523 = vld [vmem:[%s11 + $0x88] sm:$0xff]
      %v2524 = vld [vmem:[%s11 + $0x90] sm:$0xff]
      %v2525 = vld [vmem:[%s11 + $0x98] sm:$0xff]
      %v2526 = vld [vmem:[%s11 + $0xa0] sm:$0xff]
      %v2527 = vld [vmem:[%s11 + $0xa8] sm:$0xff]
      %v2528 = vld [vmem:[%s11 + $0xb0] sm:$0xff]
      %v2529 = vld [vmem:[%s11 + $0xb8] sm:$0xff]
      %v2530 = vld [vmem:[%s11 + $0xc0] sm:$0xff]
      %v2531 = vld [vmem:[%s11 + $0xc8] sm:$0xff]
      %v2532 = vld [vmem:[%s11 + $0xd0] sm:$0xff]
      %v2533 = vld [vmem:[%s11 + $0xd8] sm:$0xff]
      %v2534 = vld [vmem:[%s11 + $0xe0] sm:$0xff]
      %v2535 = vld [vmem:[%s11 + $0xe8] sm:$0xff]
      %v2536 = vld [vmem:[%s11 + $0xf0] sm:$0xff]
      %v2537 = vld [vmem:[%s11 + $0xf8] sm:$0xff]
      %v2538 = vld [vmem:[#allocation5] sm:$0xfe]
      %v2539 = vld [vmem:[#allocation5 + $0x8] sm:$0xfe]
      %v2540 = vld [vmem:[#allocation5 + $0x40] sm:$0x1]
      %v2541 = vld [vmem:[#allocation5 + $0x48] sm:$0x1]
      %v2542 = vpack.c.bf16 %v2496, %v2538
      %v2543 = vpack.c.bf16 %v2497, %v2539
      %v2544 = vpack.c.bf16 %v2540, %v2540
      %v2545 = vpack.c.bf16 %v2541, %v2541
      %s2546 = scalar_lea.vmem %s11, 256
      %v2547 = vld [vmem:[%s2546] sm:$0xff]
      %v2548 = vld [vmem:[%s2546 + $0x8] sm:$0xff]
      %v2549 = vld [vmem:[%s2546 + $0x10] sm:$0xff]
      %v2550 = vld [vmem:[%s2546 + $0x18] sm:$0xff]
      %v2551 = vld [vmem:[%s2546 + $0x20] sm:$0xff]
      %v2552 = vld [vmem:[%s2546 + $0x28] sm:$0xff]
      %v2553 = vld [vmem:[%s2546 + $0x30] sm:$0xff]
      %v2554 = vld [vmem:[%s2546 + $0x38] sm:$0xff]
      %v2555 = vld [vmem:[%s2546 + $0x40] sm:$0xff]
      %v2556 = vld [vmem:[%s2546 + $0x48] sm:$0xff]
      %v2557 = vld [vmem:[%s2546 + $0x50] sm:$0xff]
      %v2558 = vld [vmem:[%s2546 + $0x58] sm:$0xff]
      %v2559 = vld [vmem:[%s2546 + $0x60] sm:$0xff]
      %v2560 = vld [vmem:[%s2546 + $0x68] sm:$0xff]
      %v2561 = vld [vmem:[%s2546 + $0x70] sm:$0xff]
      %v2562 = vld [vmem:[%s2546 + $0x78] sm:$0xff]
      %v2563 = vld [vmem:[%s2546 + $0x80] sm:$0xff]
      %v2564 = vld [vmem:[%s2546 + $0x88] sm:$0xff]
      %v2565 = vld [vmem:[%s2546 + $0x90] sm:$0xff]
      %v2566 = vld [vmem:[%s2546 + $0x98] sm:$0xff]
      %v2567 = vld [vmem:[%s2546 + $0xa0] sm:$0xff]
      %v2568 = vld [vmem:[%s2546 + $0xa8] sm:$0xff]
      %v2569 = vld [vmem:[%s2546 + $0xb0] sm:$0xff]
      %v2570 = vld [vmem:[%s2546 + $0xb8] sm:$0xff]
      %v2571 = vld [vmem:[%s2546 + $0xc0] sm:$0xff]
      %v2572 = vld [vmem:[%s2546 + $0xc8] sm:$0xff]
      %v2573 = vld [vmem:[%s2546 + $0xd0] sm:$0xff]
      %v2574 = vld [vmem:[%s2546 + $0xd8] sm:$0xff]
      %v2575 = vld [vmem:[%s2546 + $0xe0] sm:$0xff]
      %v2576 = vld [vmem:[%s2546 + $0xe8] sm:$0xff]
      %v2577 = vld [vmem:[%s2546 + $0xf0] sm:$0xff]
      %v2578 = vld [vmem:[%s2546 + $0xf8] sm:$0xff]
      %v2580 = vshrl.u32 %v2542, 16
      %v2582 = vshll.u32 %v2542, 16
      %v2584 = vrot.slane %v2582, 1
      %v2585 = vor.u32 %v2580, %v2584
      %v2587 = vshll.u32 %v2504, 16
      %v2589 = vrot.slane %v2587, 1
      %v2590 = vsel %vm853, %v2585, %v2589
      %v2592 = vshrl.u32 %v2543, 16
      %v2594 = vshll.u32 %v2543, 16
      %v2596 = vrot.slane %v2594, 1
      %v2597 = vor.u32 %v2592, %v2596
      %v2599 = vshll.u32 %v2505, 16
      %v2601 = vrot.slane %v2599, 1
      %v2602 = vsel %vm853, %v2597, %v2601
      %v2603 = vshrl.u32 %v2504, 16
      %v2605 = vor.u32 %v2603, %v2589
      %v2607 = vshll.u32 %v2544, 16
      %v2609 = vrot.slane %v2607, 1
      %v2610 = vsel %vm853, %v2605, %v2609
      %v2611 = vshrl.u32 %v2505, 16
      %v2613 = vor.u32 %v2611, %v2601
      %v2615 = vshll.u32 %v2545, 16
      %v2617 = vrot.slane %v2615, 1
      %v2618 = vsel %vm853, %v2613, %v2617
      %v2655 = vunpack.c.l.b16 %v2547
      %v2656 = vunpack.c.h.b16 %v2547
      %v2657 = vunpack.c.l.b16 %v2548
      %v2658 = vunpack.c.h.b16 %v2548
      %v2659 = vunpack.c.l.b16 %v2549
      %v2660 = vunpack.c.h.b16 %v2549
      %v2661 = vunpack.c.l.b16 %v2550
      %v2662 = vunpack.c.h.b16 %v2550
      %v2663 = vunpack.c.l.b16 %v2551
      %v2664 = vunpack.c.h.b16 %v2551
      %v2665 = vunpack.c.l.b16 %v2552
      %v2666 = vunpack.c.h.b16 %v2552
      %v2667 = vunpack.c.l.b16 %v2553
      %v2668 = vunpack.c.h.b16 %v2553
      %v2669 = vunpack.c.l.b16 %v2554
      %v2670 = vunpack.c.h.b16 %v2554
      %v2671 = vunpack.c.l.b16 %v2555
      %v2672 = vunpack.c.h.b16 %v2555
      %v2673 = vunpack.c.l.b16 %v2556
      %v2674 = vunpack.c.h.b16 %v2556
      %v2675 = vunpack.c.l.b16 %v2557
      %v2676 = vunpack.c.h.b16 %v2557
      %v2677 = vunpack.c.l.b16 %v2558
      %v2678 = vunpack.c.h.b16 %v2558
      %v2679 = vunpack.c.l.b16 %v2559
      %v2680 = vunpack.c.h.b16 %v2559
      %v2681 = vunpack.c.l.b16 %v2560
      %v2682 = vunpack.c.h.b16 %v2560
      %v2683 = vunpack.c.l.b16 %v2561
      %v2684 = vunpack.c.h.b16 %v2561
      %v2685 = vunpack.c.l.b16 %v2562
      %v2686 = vunpack.c.h.b16 %v2562
      %v2687 = vunpack.c.l.b16 %v2563
      %v2688 = vunpack.c.h.b16 %v2563
      %v2689 = vunpack.c.l.b16 %v2564
      %v2690 = vunpack.c.h.b16 %v2564
      %v2691 = vunpack.c.l.b16 %v2565
      %v2692 = vunpack.c.h.b16 %v2565
      %v2693 = vunpack.c.l.b16 %v2566
      %v2694 = vunpack.c.h.b16 %v2566
      %v2695 = vunpack.c.l.b16 %v2567
      %v2696 = vunpack.c.h.b16 %v2567
      %v2697 = vunpack.c.l.b16 %v2568
      %v2698 = vunpack.c.h.b16 %v2568
      %v2699 = vunpack.c.l.b16 %v2569
      %v2700 = vunpack.c.h.b16 %v2569
      %v2701 = vunpack.c.l.b16 %v2570
      %v2702 = vunpack.c.h.b16 %v2570
      %v2703 = vunpack.c.l.b16 %v2571
      %v2704 = vunpack.c.h.b16 %v2571
      %v2705 = vunpack.c.l.b16 %v2572
      %v2706 = vunpack.c.h.b16 %v2572
      %v2707 = vunpack.c.l.b16 %v2573
      %v2708 = vunpack.c.h.b16 %v2573
      %v2709 = vunpack.c.l.b16 %v2574
      %v2710 = vunpack.c.h.b16 %v2574
      %v2711 = vunpack.c.l.b16 %v2575
      %v2712 = vunpack.c.h.b16 %v2575
      %v2713 = vunpack.c.l.b16 %v2576
      %v2714 = vunpack.c.h.b16 %v2576
      %v2715 = vunpack.c.l.b16 %v2577
      %v2716 = vunpack.c.h.b16 %v2577
      %v2717 = vunpack.c.l.b16 %v2578
      %v2718 = vunpack.c.h.b16 %v2578
      %v2719 = vpack.c.b16 %v2657, %v2655
      %v2720 = vpack.c.b16 %v2658, %v2656
      %v2721 = vpack.c.b16 %v2661, %v2659
      %v2722 = vpack.c.b16 %v2662, %v2660
      %v2723 = vpack.c.b16 %v2665, %v2663
      %v2724 = vpack.c.b16 %v2666, %v2664
      %v2725 = vpack.c.b16 %v2669, %v2667
      %v2726 = vpack.c.b16 %v2670, %v2668
      %v2727 = vpack.c.b16 %v2673, %v2671
      %v2728 = vpack.c.b16 %v2674, %v2672
      %v2729 = vpack.c.b16 %v2677, %v2675
      %v2730 = vpack.c.b16 %v2678, %v2676
      %v2731 = vpack.c.b16 %v2681, %v2679
      %v2732 = vpack.c.b16 %v2682, %v2680
      %v2733 = vpack.c.b16 %v2685, %v2683
      %v2734 = vpack.c.b16 %v2686, %v2684
      %v2735 = vpack.c.b16 %v2689, %v2687
      %v2736 = vpack.c.b16 %v2690, %v2688
      %v2737 = vpack.c.b16 %v2693, %v2691
      %v2738 = vpack.c.b16 %v2694, %v2692
      %v2739 = vpack.c.b16 %v2697, %v2695
      %v2740 = vpack.c.b16 %v2698, %v2696
      %v2741 = vpack.c.b16 %v2701, %v2699
      %v2742 = vpack.c.b16 %v2702, %v2700
      %v2743 = vpack.c.b16 %v2705, %v2703
      %v2744 = vpack.c.b16 %v2706, %v2704
      %v2745 = vpack.c.b16 %v2709, %v2707
      %v2746 = vpack.c.b16 %v2710, %v2708
      %v2747 = vpack.c.b16 %v2713, %v2711
      %v2748 = vpack.c.b16 %v2714, %v2712
      %v2749 = vpack.c.b16 %v2717, %v2715
      %v2750 = vpack.c.b16 %v2718, %v2716
      %2783 = vmatprep.subr.bf16.mxu0 %v2720
      %2784 = vmatpush1.bf16.msra.mxu0 %v2719
      %2785 = vmatprep.subr.bf16.mxu0 %v2722
      %2786 = vmatpush1.bf16.msra.mxu0 %v2721
      %2787 = vmatprep.subr.bf16.mxu0 %v2724
      %2788 = vmatpush1.bf16.msra.mxu0 %v2723
      %2789 = vmatprep.subr.bf16.mxu0 %v2726
      %2790 = vmatpush1.bf16.msra.mxu0 %v2725
      %2791 = vmatprep.subr.bf16.mxu0 %v2728
      %2792 = vmatpush1.bf16.msra.mxu0 %v2727
      %2793 = vmatprep.subr.bf16.mxu0 %v2730
      %2794 = vmatpush1.bf16.msra.mxu0 %v2729
      %2795 = vmatprep.subr.bf16.mxu0 %v2732
      %2796 = vmatpush1.bf16.msra.mxu0 %v2731
      %2797 = vmatprep.subr.bf16.mxu0 %v2734
      %2798 = vmatpush1.bf16.msra.mxu0 %v2733
      %2799 = vmatprep.subr.bf16.mxu0 %v2736
      %2800 = vmatpush1.bf16.msra.mxu0 %v2735
      %2801 = vmatprep.subr.bf16.mxu0 %v2738
      %2802 = vmatpush1.bf16.msra.mxu0 %v2737
      %2803 = vmatprep.subr.bf16.mxu0 %v2740
      %2804 = vmatpush1.bf16.msra.mxu0 %v2739
      %2805 = vmatprep.subr.bf16.mxu0 %v2742
      %2806 = vmatpush1.bf16.msra.mxu0 %v2741
      %2807 = vmatprep.subr.bf16.mxu0 %v2744
      %2808 = vmatpush1.bf16.msra.mxu0 %v2743
      %2809 = vmatprep.subr.bf16.mxu0 %v2746
      %2810 = vmatpush1.bf16.msra.mxu0 %v2745
      %2811 = vmatprep.subr.bf16.mxu0 %v2748
      %2812 = vmatpush1.bf16.msra.mxu0 %v2747
      %2813 = vmatprep.subr.bf16.mxu0 %v2750
      %2814 = vmatpush1.bf16.msra.mxu0 %v2749
      %2815 = vmatprep.mubr.bf16.mxu0 %v2602
      %2816 = vmatmul.mubr.bf16.gmra.mrb[0].mxu0 %v2590
      %v2817 = vpop.f32.mrb[0].mxu0
      %v2818 = vadd.f32 0.0, %v2817
      %v2819 = vpop.f32.mrb[0].mxu0
      %v2820 = vadd.f32 0.0, %v2819
      %v2821 = vpop.f32.mrb[0].mxu0
      %v2822 = vadd.f32 0.0, %v2821
      %v2823 = vpop.f32.mrb[0].mxu0
      %v2824 = vadd.f32 0.0, %v2823
      %2825 = vmatprep.mubr.bf16.mxu0 %v2618
      %2826 = vmatmul.mubr.bf16.gmra.mrb[0].mxu0 %v2610
      %v2827 = vpop.f32.mrb[0].mxu0
      %v2828 = vadd.f32 0.0, %v2827
      %v2829 = vpop.f32.mrb[0].mxu0
      %v2830 = vadd.f32 0.0, %v2829
      %v2831 = vpop.f32.mrb[0].mxu0
      %v2832 = vadd.f32 0.0, %v2831
      %v2833 = vpop.f32.mrb[0].mxu0
      %v2834 = vadd.f32 0.0, %v2833
      %2835 = vdwg.mxu0
      %v2868 = vunpack.c.l.b16 %v2506
      %v2869 = vunpack.c.h.b16 %v2506
      %v2870 = vunpack.c.l.b16 %v2507
      %v2871 = vunpack.c.h.b16 %v2507
      %v2872 = vunpack.c.l.b16 %v2508
      %v2873 = vunpack.c.h.b16 %v2508
      %v2874 = vunpack.c.l.b16 %v2509
      %v2875 = vunpack.c.h.b16 %v2509
      %v2876 = vunpack.c.l.b16 %v2510
      %v2877 = vunpack.c.h.b16 %v2510
      %v2878 = vunpack.c.l.b16 %v2511
      %v2879 = vunpack.c.h.b16 %v2511
      %v2880 = vunpack.c.l.b16 %v2512
      %v2881 = vunpack.c.h.b16 %v2512
      %v2882 = vunpack.c.l.b16 %v2513
      %v2883 = vunpack.c.h.b16 %v2513
      %v2884 = vunpack.c.l.b16 %v2514
      %v2885 = vunpack.c.h.b16 %v2514
      %v2886 = vunpack.c.l.b16 %v2515
      %v2887 = vunpack.c.h.b16 %v2515
      %v2888 = vunpack.c.l.b16 %v2516
      %v2889 = vunpack.c.h.b16 %v2516
      %v2890 = vunpack.c.l.b16 %v2517
      %v2891 = vunpack.c.h.b16 %v2517
      %v2892 = vunpack.c.l.b16 %v2518
      %v2893 = vunpack.c.h.b16 %v2518
      %v2894 = vunpack.c.l.b16 %v2519
      %v2895 = vunpack.c.h.b16 %v2519
      %v2896 = vunpack.c.l.b16 %v2520
      %v2897 = vunpack.c.h.b16 %v2520
      %v2898 = vunpack.c.l.b16 %v2521
      %v2899 = vunpack.c.h.b16 %v2521
      %v2900 = vunpack.c.l.b16 %v2522
      %v2901 = vunpack.c.h.b16 %v2522
      %v2902 = vunpack.c.l.b16 %v2523
      %v2903 = vunpack.c.h.b16 %v2523
      %v2904 = vunpack.c.l.b16 %v2524
      %v2905 = vunpack.c.h.b16 %v2524
      %v2906 = vunpack.c.l.b16 %v2525
      %v2907 = vunpack.c.h.b16 %v2525
      %v2908 = vunpack.c.l.b16 %v2526
      %v2909 = vunpack.c.h.b16 %v2526
      %v2910 = vunpack.c.l.b16 %v2527
      %v2911 = vunpack.c.h.b16 %v2527
      %v2912 = vunpack.c.l.b16 %v2528
      %v2913 = vunpack.c.h.b16 %v2528
      %v2914 = vunpack.c.l.b16 %v2529
      %v2915 = vunpack.c.h.b16 %v2529
      %v2916 = vunpack.c.l.b16 %v2530
      %v2917 = vunpack.c.h.b16 %v2530
      %v2918 = vunpack.c.l.b16 %v2531
      %v2919 = vunpack.c.h.b16 %v2531
      %v2920 = vunpack.c.l.b16 %v2532
      %v2921 = vunpack.c.h.b16 %v2532
      %v2922 = vunpack.c.l.b16 %v2533
      %v2923 = vunpack.c.h.b16 %v2533
      %v2924 = vunpack.c.l.b16 %v2534
      %v2925 = vunpack.c.h.b16 %v2534
      %v2926 = vunpack.c.l.b16 %v2535
      %v2927 = vunpack.c.h.b16 %v2535
      %v2928 = vunpack.c.l.b16 %v2536
      %v2929 = vunpack.c.h.b16 %v2536
      %v2930 = vunpack.c.l.b16 %v2537
      %v2931 = vunpack.c.h.b16 %v2537
      %v2932 = vpack.c.b16 %v2870, %v2868
      %v2933 = vpack.c.b16 %v2871, %v2869
      %v2934 = vpack.c.b16 %v2874, %v2872
      %v2935 = vpack.c.b16 %v2875, %v2873
      %v2936 = vpack.c.b16 %v2878, %v2876
      %v2937 = vpack.c.b16 %v2879, %v2877
      %v2938 = vpack.c.b16 %v2882, %v2880
      %v2939 = vpack.c.b16 %v2883, %v2881
      %v2940 = vpack.c.b16 %v2886, %v2884
      %v2941 = vpack.c.b16 %v2887, %v2885
      %v2942 = vpack.c.b16 %v2890, %v2888
      %v2943 = vpack.c.b16 %v2891, %v2889
      %v2944 = vpack.c.b16 %v2894, %v2892
      %v2945 = vpack.c.b16 %v2895, %v2893
      %v2946 = vpack.c.b16 %v2898, %v2896
      %v2947 = vpack.c.b16 %v2899, %v2897
      %v2948 = vpack.c.b16 %v2902, %v2900
      %v2949 = vpack.c.b16 %v2903, %v2901
      %v2950 = vpack.c.b16 %v2906, %v2904
      %v2951 = vpack.c.b16 %v2907, %v2905
      %v2952 = vpack.c.b16 %v2910, %v2908
      %v2953 = vpack.c.b16 %v2911, %v2909
      %v2954 = vpack.c.b16 %v2914, %v2912
      %v2955 = vpack.c.b16 %v2915, %v2913
      %v2956 = vpack.c.b16 %v2918, %v2916
      %v2957 = vpack.c.b16 %v2919, %v2917
      %v2958 = vpack.c.b16 %v2922, %v2920
      %v2959 = vpack.c.b16 %v2923, %v2921
      %v2960 = vpack.c.b16 %v2926, %v2924
      %v2961 = vpack.c.b16 %v2927, %v2925
      %v2962 = vpack.c.b16 %v2930, %v2928
      %v2963 = vpack.c.b16 %v2931, %v2929
      %2996 = vmatprep.subr.bf16.mxu0 %v2933
      %2997 = vmatpush1.bf16.msra.mxu0 %v2932
      %2998 = vmatprep.subr.bf16.mxu0 %v2935
      %2999 = vmatpush1.bf16.msra.mxu0 %v2934
      %3000 = vmatprep.subr.bf16.mxu0 %v2937
      %3001 = vmatpush1.bf16.msra.mxu0 %v2936
      %3002 = vmatprep.subr.bf16.mxu0 %v2939
      %3003 = vmatpush1.bf16.msra.mxu0 %v2938
      %3004 = vmatprep.subr.bf16.mxu0 %v2941
      %3005 = vmatpush1.bf16.msra.mxu0 %v2940
      %3006 = vmatprep.subr.bf16.mxu0 %v2943
      %3007 = vmatpush1.bf16.msra.mxu0 %v2942
      %3008 = vmatprep.subr.bf16.mxu0 %v2945
      %3009 = vmatpush1.bf16.msra.mxu0 %v2944
      %3010 = vmatprep.subr.bf16.mxu0 %v2947
      %3011 = vmatpush1.bf16.msra.mxu0 %v2946
      %3012 = vmatprep.subr.bf16.mxu0 %v2949
      %3013 = vmatpush1.bf16.msra.mxu0 %v2948
      %3014 = vmatprep.subr.bf16.mxu0 %v2951
      %3015 = vmatpush1.bf16.msra.mxu0 %v2950
      %3016 = vmatprep.subr.bf16.mxu0 %v2953
      %3017 = vmatpush1.bf16.msra.mxu0 %v2952
      %3018 = vmatprep.subr.bf16.mxu0 %v2955
      %3019 = vmatpush1.bf16.msra.mxu0 %v2954
      %3020 = vmatprep.subr.bf16.mxu0 %v2957
      %3021 = vmatpush1.bf16.msra.mxu0 %v2956
      %3022 = vmatprep.subr.bf16.mxu0 %v2959
      %3023 = vmatpush1.bf16.msra.mxu0 %v2958
      %3024 = vmatprep.subr.bf16.mxu0 %v2961
      %3025 = vmatpush1.bf16.msra.mxu0 %v2960
      %3026 = vmatprep.subr.bf16.mxu0 %v2963
      %3027 = vmatpush1.bf16.msra.mxu0 %v2962
      %3028 = vmatprep.mubr.bf16.mxu0 %v2503
      %3029 = vmatmul.mubr.bf16.gmra.mrb[0].mxu0 %v2502
      %v3030 = vpop.f32.mrb[0].mxu0
      %v3031 = vadd.f32 %v2818, %v3030
      %v3032 = vpop.f32.mrb[0].mxu0
      %v3033 = vadd.f32 %v2820, %v3032
      %v3034 = vpop.f32.mrb[0].mxu0
      %v3035 = vadd.f32 %v2822, %v3034
      %v3036 = vpop.f32.mrb[0].mxu0
      %v3037 = vadd.f32 %v2824, %v3036
      %3038 = vmatprep.mubr.bf16.mxu0 %v2505
      %3039 = vmatmul.mubr.bf16.gmra.mrb[0].mxu0 %v2504
      %v3040 = vpop.f32.mrb[0].mxu0
      %v3041 = vadd.f32 %v2828, %v3040
      %v3042 = vpop.f32.mrb[0].mxu0
      %v3043 = vadd.f32 %v2830, %v3042
      %v3044 = vpop.f32.mrb[0].mxu0
      %v3045 = vadd.f32 %v2832, %v3044
      %v3046 = vpop.f32.mrb[0].mxu0
      %v3047 = vadd.f32 %v2834, %v3046
      %3048 = vdwg.mxu0
      %v3049 = vld [vmem:[#allocation5] sm:$0xfc]
      %v3050 = vld [vmem:[#allocation5 + $0x8] sm:$0xfc]
      %v3051 = vld [vmem:[#allocation5 + $0x40] sm:$0x3]
      %v3052 = vld [vmem:[#allocation5 + $0x48] sm:$0x3]
      %v3053 = vpack.c.bf16 %v2496, %v3049
      %v3054 = vpack.c.bf16 %v2497, %v3050
      %v3055 = vpack.c.bf16 %v3051, %v3051
      %v3056 = vpack.c.bf16 %v3052, %v3052
      %s3057 = scalar_lea.vmem %s11, 512
      %v3058 = vld [vmem:[%s3057] sm:$0xff]
      %v3059 = vld [vmem:[%s3057 + $0x8] sm:$0xff]
      %v3060 = vld [vmem:[%s3057 + $0x10] sm:$0xff]
      %v3061 = vld [vmem:[%s3057 + $0x18] sm:$0xff]
      %v3062 = vld [vmem:[%s3057 + $0x20] sm:$0xff]
      %v3063 = vld [vmem:[%s3057 + $0x28] sm:$0xff]
      %v3064 = vld [vmem:[%s3057 + $0x30] sm:$0xff]
      %v3065 = vld [vmem:[%s3057 + $0x38] sm:$0xff]
      %v3066 = vld [vmem:[%s3057 + $0x40] sm:$0xff]
      %v3067 = vld [vmem:[%s3057 + $0x48] sm:$0xff]
      %v3068 = vld [vmem:[%s3057 + $0x50] sm:$0xff]
      %v3069 = vld [vmem:[%s3057 + $0x58] sm:$0xff]
      %v3070 = vld [vmem:[%s3057 + $0x60] sm:$0xff]
      %v3071 = vld [vmem:[%s3057 + $0x68] sm:$0xff]
      %v3072 = vld [vmem:[%s3057 + $0x70] sm:$0xff]
      %v3073 = vld [vmem:[%s3057 + $0x78] sm:$0xff]
      %v3074 = vld [vmem:[%s3057 + $0x80] sm:$0xff]
      %v3075 = vld [vmem:[%s3057 + $0x88] sm:$0xff]
      %v3076 = vld [vmem:[%s3057 + $0x90] sm:$0xff]
      %v3077 = vld [vmem:[%s3057 + $0x98] sm:$0xff]
      %v3078 = vld [vmem:[%s3057 + $0xa0] sm:$0xff]
      %v3079 = vld [vmem:[%s3057 + $0xa8] sm:$0xff]
      %v3080 = vld [vmem:[%s3057 + $0xb0] sm:$0xff]
      %v3081 = vld [vmem:[%s3057 + $0xb8] sm:$0xff]
      %v3082 = vld [vmem:[%s3057 + $0xc0] sm:$0xff]
      %v3083 = vld [vmem:[%s3057 + $0xc8] sm:$0xff]
      %v3084 = vld [vmem:[%s3057 + $0xd0] sm:$0xff]
      %v3085 = vld [vmem:[%s3057 + $0xd8] sm:$0xff]
      %v3086 = vld [vmem:[%s3057 + $0xe0] sm:$0xff]
      %v3087 = vld [vmem:[%s3057 + $0xe8] sm:$0xff]
      %v3088 = vld [vmem:[%s3057 + $0xf0] sm:$0xff]
      %v3089 = vld [vmem:[%s3057 + $0xf8] sm:$0xff]
      %v3096 = vrot.slane %v3053, 1
      %v3097 = vrot.slane %v2504, 1
      %v3098 = vsel %vm1235, %v3096, %v3097
      %v3099 = vrot.slane %v3054, 1
      %v3100 = vrot.slane %v2505, 1
      %v3101 = vsel %vm1235, %v3099, %v3100
      %v3102 = vrot.slane %v3055, 1
      %v3103 = vsel %vm1235, %v3097, %v3102
      %v3104 = vrot.slane %v3056, 1
      %v3105 = vsel %vm1235, %v3100, %v3104
      %v3142 = vunpack.c.l.b16 %v3058
      %v3143 = vunpack.c.h.b16 %v3058
      %v3144 = vunpack.c.l.b16 %v3059
      %v3145 = vunpack.c.h.b16 %v3059
      %v3146 = vunpack.c.l.b16 %v3060
      %v3147 = vunpack.c.h.b16 %v3060
      %v3148 = vunpack.c.l.b16 %v3061
      %v3149 = vunpack.c.h.b16 %v3061
      %v3150 = vunpack.c.l.b16 %v3062
      %v3151 = vunpack.c.h.b16 %v3062
      %v3152 = vunpack.c.l.b16 %v3063
      %v3153 = vunpack.c.h.b16 %v3063
      %v3154 = vunpack.c.l.b16 %v3064
      %v3155 = vunpack.c.h.b16 %v3064
      %v3156 = vunpack.c.l.b16 %v3065
      %v3157 = vunpack.c.h.b16 %v3065
      %v3158 = vunpack.c.l.b16 %v3066
      %v3159 = vunpack.c.h.b16 %v3066
      %v3160 = vunpack.c.l.b16 %v3067
      %v3161 = vunpack.c.h.b16 %v3067
      %v3162 = vunpack.c.l.b16 %v3068
      %v3163 = vunpack.c.h.b16 %v3068
      %v3164 = vunpack.c.l.b16 %v3069
      %v3165 = vunpack.c.h.b16 %v3069
      %v3166 = vunpack.c.l.b16 %v3070
      %v3167 = vunpack.c.h.b16 %v3070
      %v3168 = vunpack.c.l.b16 %v3071
      %v3169 = vunpack.c.h.b16 %v3071
      %v3170 = vunpack.c.l.b16 %v3072
      %v3171 = vunpack.c.h.b16 %v3072
      %v3172 = vunpack.c.l.b16 %v3073
      %v3173 = vunpack.c.h.b16 %v3073
      %v3174 = vunpack.c.l.b16 %v3074
      %v3175 = vunpack.c.h.b16 %v3074
      %v3176 = vunpack.c.l.b16 %v3075
      %v3177 = vunpack.c.h.b16 %v3075
      %v3178 = vunpack.c.l.b16 %v3076
      %v3179 = vunpack.c.h.b16 %v3076
      %v3180 = vunpack.c.l.b16 %v3077
      %v3181 = vunpack.c.h.b16 %v3077
      %v3182 = vunpack.c.l.b16 %v3078
      %v3183 = vunpack.c.h.b16 %v3078
      %v3184 = vunpack.c.l.b16 %v3079
      %v3185 = vunpack.c.h.b16 %v3079
      %v3186 = vunpack.c.l.b16 %v3080
      %v3187 = vunpack.c.h.b16 %v3080
      %v3188 = vunpack.c.l.b16 %v3081
      %v3189 = vunpack.c.h.b16 %v3081
      %v3190 = vunpack.c.l.b16 %v3082
      %v3191 = vunpack.c.h.b16 %v3082
      %v3192 = vunpack.c.l.b16 %v3083
      %v3193 = vunpack.c.h.b16 %v3083
      %v3194 = vunpack.c.l.b16 %v3084
      %v3195 = vunpack.c.h.b16 %v3084
      %v3196 = vunpack.c.l.b16 %v3085
      %v3197 = vunpack.c.h.b16 %v3085
      %v3198 = vunpack.c.l.b16 %v3086
      %v3199 = vunpack.c.h.b16 %v3086
      %v3200 = vunpack.c.l.b16 %v3087
      %v3201 = vunpack.c.h.b16 %v3087
      %v3202 = vunpack.c.l.b16 %v3088
      %v3203 = vunpack.c.h.b16 %v3088
      %v3204 = vunpack.c.l.b16 %v3089
      %v3205 = vunpack.c.h.b16 %v3089
      %v3206 = vpack.c.b16 %v3144, %v3142
      %v3207 = vpack.c.b16 %v3145, %v3143
      %v3208 = vpack.c.b16 %v3148, %v3146
      %v3209 = vpack.c.b16 %v3149, %v3147
      %v3210 = vpack.c.b16 %v3152, %v3150
      %v3211 = vpack.c.b16 %v3153, %v3151
      %v3212 = vpack.c.b16 %v3156, %v3154
      %v3213 = vpack.c.b16 %v3157, %v3155
      %v3214 = vpack.c.b16 %v3160, %v3158
      %v3215 = vpack.c.b16 %v3161, %v3159
      %v3216 = vpack.c.b16 %v3164, %v3162
      %v3217 = vpack.c.b16 %v3165, %v3163
      %v3218 = vpack.c.b16 %v3168, %v3166
      %v3219 = vpack.c.b16 %v3169, %v3167
      %v3220 = vpack.c.b16 %v3172, %v3170
      %v3221 = vpack.c.b16 %v3173, %v3171
      %v3222 = vpack.c.b16 %v3176, %v3174
      %v3223 = vpack.c.b16 %v3177, %v3175
      %v3224 = vpack.c.b16 %v3180, %v3178
      %v3225 = vpack.c.b16 %v3181, %v3179
      %v3226 = vpack.c.b16 %v3184, %v3182
      %v3227 = vpack.c.b16 %v3185, %v3183
      %v3228 = vpack.c.b16 %v3188, %v3186
      %v3229 = vpack.c.b16 %v3189, %v3187
      %v3230 = vpack.c.b16 %v3192, %v3190
      %v3231 = vpack.c.b16 %v3193, %v3191
      %v3232 = vpack.c.b16 %v3196, %v3194
      %v3233 = vpack.c.b16 %v3197, %v3195
      %v3234 = vpack.c.b16 %v3200, %v3198
      %v3235 = vpack.c.b16 %v3201, %v3199
      %v3236 = vpack.c.b16 %v3204, %v3202
      %v3237 = vpack.c.b16 %v3205, %v3203
      %3270 = vmatprep.subr.bf16.mxu0 %v3207
      %3271 = vmatpush1.bf16.msra.mxu0 %v3206
      %3272 = vmatprep.subr.bf16.mxu0 %v3209
      %3273 = vmatpush1.bf16.msra.mxu0 %v3208
      %3274 = vmatprep.subr.bf16.mxu0 %v3211
      %3275 = vmatpush1.bf16.msra.mxu0 %v3210
      %3276 = vmatprep.subr.bf16.mxu0 %v3213
      %3277 = vmatpush1.bf16.msra.mxu0 %v3212
      %3278 = vmatprep.subr.bf16.mxu0 %v3215
      %3279 = vmatpush1.bf16.msra.mxu0 %v3214
      %3280 = vmatprep.subr.bf16.mxu0 %v3217
      %3281 = vmatpush1.bf16.msra.mxu0 %v3216
      %3282 = vmatprep.subr.bf16.mxu0 %v3219
      %3283 = vmatpush1.bf16.msra.mxu0 %v3218
      %3284 = vmatprep.subr.bf16.mxu0 %v3221
      %3285 = vmatpush1.bf16.msra.mxu0 %v3220
      %3286 = vmatprep.subr.bf16.mxu0 %v3223
      %3287 = vmatpush1.bf16.msra.mxu0 %v3222
      %3288 = vmatprep.subr.bf16.mxu0 %v3225
      %3289 = vmatpush1.bf16.msra.mxu0 %v3224
      %3290 = vmatprep.subr.bf16.mxu0 %v3227
      %3291 = vmatpush1.bf16.msra.mxu0 %v3226
      %3292 = vmatprep.subr.bf16.mxu0 %v3229
      %3293 = vmatpush1.bf16.msra.mxu0 %v3228
      %3294 = vmatprep.subr.bf16.mxu0 %v3231
      %3295 = vmatpush1.bf16.msra.mxu0 %v3230
      %3296 = vmatprep.subr.bf16.mxu0 %v3233
      %3297 = vmatpush1.bf16.msra.mxu0 %v3232
      %3298 = vmatprep.subr.bf16.mxu0 %v3235
      %3299 = vmatpush1.bf16.msra.mxu0 %v3234
      %3300 = vmatprep.subr.bf16.mxu0 %v3237
      %3301 = vmatpush1.bf16.msra.mxu0 %v3236
      %3302 = vmatprep.mubr.bf16.mxu0 %v3101
      %3303 = vmatmul.mubr.bf16.gmra.mrb[0].mxu0 %v3098
      %v3304 = vpop.f32.mrb[0].mxu0
      %v3305 = vadd.f32 0.0, %v3304
      %v3306 = vpop.f32.mrb[0].mxu0
      %v3307 = vadd.f32 0.0, %v3306
      %v3308 = vpop.f32.mrb[0].mxu0
      %v3309 = vadd.f32 0.0, %v3308
      %v3310 = vpop.f32.mrb[0].mxu0
      %v3311 = vadd.f32 0.0, %v3310
      %3312 = vmatprep.mubr.bf16.mxu0 %v3105
      %3313 = vmatmul.mubr.bf16.gmra.mrb[0].mxu0 %v3103
      %v3314 = vpop.f32.mrb[0].mxu0
      %v3315 = vadd.f32 0.0, %v3314
      %v3316 = vpop.f32.mrb[0].mxu0
      %v3317 = vadd.f32 0.0, %v3316
      %v3318 = vpop.f32.mrb[0].mxu0
      %v3319 = vadd.f32 0.0, %v3318
      %v3320 = vpop.f32.mrb[0].mxu0
      %v3321 = vadd.f32 0.0, %v3320
      %3322 = vdwg.mxu0
      %v3323 = vadd.f32 %v3031, %v3305
      %v3324 = vadd.f32 %v3033, %v3307
      %v3325 = vadd.f32 %v3035, %v3309
      %v3326 = vadd.f32 %v3037, %v3311
      %v3327 = vadd.f32 %v3041, %v3315
      %v3328 = vadd.f32 %v3043, %v3317
      %v3329 = vadd.f32 %v3045, %v3319
      %v3330 = vadd.f32 %v3047, %v3321
      %v3331 = vld [vmem:[%s12] sm:$0x3]
      %v3333 = vlaneseq
      %v3334 = vshrl.u32 %v3333, 7
      %v3335 = vsub.s32 0, %v3334
      %v3336 = vrot.slane %v3331, %v3335
      %v3337 = vlaneseq
      %v3338 = vshrl.u32 %v3337, 7
      %v3339 = vsub.s32 1, %v3338
      %v3340 = vrot.slane %v3331, %v3339
      %v3343 = vmul.f32 %v3323, %v3336
      %v3344 = vmul.f32 %v3324, %v3340
      %v3345 = vmul.f32 %v3325, %v3336
      %v3346 = vmul.f32 %v3326, %v3340
      %v3347 = vmul.f32 %v3327, %v3336
      %v3348 = vmul.f32 %v3328, %v3340
      %v3349 = vmul.f32 %v3329, %v3336
      %v3350 = vmul.f32 %v3330, %v3340
      %v3351 = vld [vmem:[%s13] sm:$0x3]
      %v3353 = vlaneseq
      %v3354 = vshrl.u32 %v3353, 7
      %v3355 = vsub.s32 0, %v3354
      %v3356 = vrot.slane %v3351, %v3355
      %v3357 = vlaneseq
      %v3358 = vshrl.u32 %v3357, 7
      %v3359 = vsub.s32 1, %v3358
      %v3360 = vrot.slane %v3351, %v3359
      %v3363 = vadd.f32 %v3343, %v3356
      %v3364 = vadd.f32 %v3344, %v3360
      %v3365 = vadd.f32 %v3345, %v3356
      %v3366 = vadd.f32 %v3346, %v3360
      %v3367 = vadd.f32 %v3347, %v3356
      %v3368 = vadd.f32 %v3348, %v3360
      %v3369 = vadd.f32 %v3349, %v3356
      %v3370 = vadd.f32 %v3350, %v3360
      %v3371 = vmax.f32 %v3363, 0.0
      %v3372 = vmax.f32 %v3364, 0.0
      %v3373 = vmax.f32 %v3365, 0.0
      %v3374 = vmax.f32 %v3366, 0.0
      %v3375 = vmax.f32 %v3367, 0.0
      %v3376 = vmax.f32 %v3368, 0.0
      %v3377 = vmax.f32 %v3369, 0.0
      %v3378 = vmax.f32 %v3370, 0.0
      %3379 = vst [vmem:[%s487] sm:$0xff] %v3371
      %3380 = vst [vmem:[%s487 + $0x8] sm:$0xff] %v3372
      %3381 = vst [vmem:[%s487 + $0x10] sm:$0xff] %v3373
      %3382 = vst [vmem:[%s487 + $0x18] sm:$0xff] %v3374
      %3383 = vst [vmem:[%s487 + $0x20] sm:$0xff] %v3375
      %3384 = vst [vmem:[%s487 + $0x28] sm:$0xff] %v3376
      %3385 = vst [vmem:[%s487 + $0x30] sm:$0xff] %v3377
      %3386 = vst [vmem:[%s487 + $0x38] sm:$0xff] %v3378
      %p3387 = scmp.lt.s32.totalorder %s25, 1
      %s3388 = scalar_select %p3387, %s25, 1
      %s3389 = smul.addr %s3388, 8
      %s3390 = smul.addr %s3389, 8
      %s3391 = scalar_lea.vmem %s14, %s3390
      // Predicated region
      $region77: #{up_forward.1} parent=75 // pred_check
        %p3392 = pneg %p347
      $region78: #{up_forward.1} parent=75 // pred_check_branch
        %3394 = sbr.rel (%p3392) target = $region80
      $region79: #{up_forward.1} parent=75 // pred_region
        _
      $region80: #{up_forward.1} parent=75 // pred_fallthru
        _
    $region76: #{up_forward.1} parent=5 // pred_fallthru
      _
    %p3395 = scmp.le.s32.totalorder 2, %s20
    // Predicated region
    $region81: #{up_forward.1} parent=5 // pred_check
      %p3396 = pneg %p3395
    $region82: #{up_forward.1} parent=5 // pred_check_branch
      %3398 = sbr.rel (%p3396) target = $region84
    $region83: #{up_forward.1} parent=5 // pred_region
      %s3399 = ssub.s32 %s20, 2
      // Predicated region
      $region85: #{up_forward.1} parent=83 // pred_check
        %p3400 = pneg %p353
      $region86: #{up_forward.1} parent=83 // pred_check_branch
        %3402 = sbr.rel (%p3400) target = $region88
      $region87: #{up_forward.1} parent=83 // pred_region
        %p3403 = scmp.lt.s32.totalorder %s26, 1
        %s3404 = scalar_select %p3403, %s26, 1
        %s3405 = smul.addr %s3404, 8
        %s3406 = smul.addr %s3405, 8
        %s3407 = scalar_lea.vmem %s14, %s3406
      $region88: #{up_forward.1} parent=83 // pred_fallthru
        _
    $region84: #{up_forward.1} parent=5 // pred_fallthru
      _
  $region6: #{up_forward.1} parent=0 // loop_footer
    %s24 = sadd.s32 1, %s20
  $region7: #{up_forward.1} parent=0 // loop_footer_branch
    %19 = sbr.rel target = $region3
  $region8: #{up_forward.1} parent=0 // loop_exit
    _

</llo_original>
